<compile_context>
chip_gen: v7x
topology: tpu7x:2x2x1
jax: 0.10.0
libtpu: 0.0.40
codegen_flags: <defaults>
</compile_context>

<pallas_src>
import jax
import jax.numpy as jnp
from jax.experimental import pallas as pl

# ----------------------------- model config -----------------------------
INPUT_SIZE = 20
OUTPUT_SIZE = 24
HIDDEN_DIM = 32
NUM_HEADS = 2
HEAD_DIM = HIDDEN_DIM // NUM_HEADS
DIM_FF = 64
NUM_LAYERS_ENC = 2
NUM_LAYERS_DEC = 2
MAX_LENGTH = 43
PAD_IDX = 1
START_TOKEN = 2
LN_EPS = 1e-5
NEG_INF = -1e9           # large-negative additive mask (no NaN on fully-masked rows)
OUT_PAD = 128            # lane-pad the final projection -> lane-dense output store

# ----------------------------- packed parameter layout -----------------------------
# Weight slots: one bf16 tensor of shape (NUM_W_SLOTS, 64, 128); each slot holds one
# matmul weight in its top-left corner (rows x cols), zero-padded.
ENC_W_STRIDE = 4    # [qkv, wo, w1, w2]
DEC_W_STRIDE = 6    # [sa_qkv, sa_wo, ca_qkv, ca_wo, w1, w2]
ENC_V_STRIDE = 8    # [b_qkv, bo, ln1_g, ln1_b, b1, b2, ln2_g, ln2_b]
DEC_V_STRIDE = 12   # [b_qkv_sa, bo_sa, ln1_g, ln1_b, b_qkv_ca, bo_ca, ln2_g, ln2_b, b1, b2, ln3_g, ln3_b]


def enc_w_slot(l):
    return l * ENC_W_STRIDE


def dec_w_slot(l):
    return NUM_LAYERS_ENC * ENC_W_STRIDE + l * DEC_W_STRIDE


FIN_W_SLOT = NUM_LAYERS_ENC * ENC_W_STRIDE + NUM_LAYERS_DEC * DEC_W_STRIDE
NUM_W_SLOTS = FIN_W_SLOT + 1                      # 21


def enc_v_row(l):
    return l * ENC_V_STRIDE


ENC_NORM_ROW = NUM_LAYERS_ENC * ENC_V_STRIDE


def dec_v_row(l):
    return ENC_NORM_ROW + 2 + l * DEC_V_STRIDE


DEC_NORM_ROW = ENC_NORM_ROW + 2 + NUM_LAYERS_DEC * DEC_V_STRIDE
FIN_B_ROW = DEC_NORM_ROW + 2
NUM_V_ROWS = FIN_B_ROW + 1                        # 45


# ----------------------------- fused Pallas kernel -----------------------------
def _fused_transformer_kernel(src_ref, tgt_ref, mask_enc_ref, mask_dec_ref,
                              w_ref, vec_ref, out_ref):
    D, F, H, Dh = HIDDEN_DIM, DIM_FF, NUM_HEADS, HEAD_DIM
    HD = H * Dh                       # 32
    NT = src_ref.shape[0]             # N*T (batch folded into rows)

    # ---- helpers ----
    def matmul(a, b):                 # MXU operands in bf16, f32 accumulate
        return jnp.dot(a.astype(jnp.bfloat16), b.astype(jnp.bfloat16),
                       preferred_element_type=jnp.float32)

    def matmul_nt(a, b):              # a @ b.T without explicit transpose
        return jax.lax.dot_general(
            a.astype(jnp.bfloat16), b.astype(jnp.bfloat16),
            (((1,), (1,)), ((), ())), preferred_element_type=jnp.float32)

    def wmat(slot, r, c):             # (r, c) bf16 weight from the packed slot
        return w_ref[slot, :r, :c]

    def vrow(row, c=D):               # (1, c) f32 bias / LN param row
        return vec_ref[row:row + 1, :c]

    def layernorm(x, grow):           # one-pass mean / variance
        g, b = vrow(grow), vrow(grow + 1)
        inv_d = 1.0 / x.shape[-1]
        mu = jnp.sum(x, axis=-1, keepdims=True) * inv_d
        ms = jnp.sum(x * x, axis=-1, keepdims=True) * inv_d
        var = ms - mu * mu
        return (x - mu) * jax.lax.rsqrt(var + LN_EPS) * g + b

    def fold_heads(a):                # (NT, H*Dh) -> (H*NT, Dh)
        return jnp.concatenate([a[:, h * Dh:(h + 1) * Dh] for h in range(H)], axis=0)

    def unfold_heads(a):              # (H*NT, Dh) -> (NT, H*Dh)
        return jnp.concatenate([a[h * NT:(h + 1) * NT, :] for h in range(H)], axis=1)

    def mha(q_in, kv_in, w_slot, v_row, mask, self_attn):
        # Fused QKV projection; 1/sqrt(Dh) is already folded into Wq/bq.
        w_qkv = wmat(w_slot, D, 3 * HD)            # (32, 96) bf16
        b_qkv = vrow(v_row, 3 * HD)                # (1, 96)  f32
        if self_attn:
            qkv = matmul(q_in, w_qkv) + b_qkv      # ONE projection matmul
            q_all, k_all, v_all = qkv[:, :HD], qkv[:, HD:2 * HD], qkv[:, 2 * HD:]
        else:
            q_all = matmul(q_in, w_qkv[:, :HD]) + b_qkv[:, :HD]
            kv = matmul(kv_in, w_qkv[:, HD:]) + b_qkv[:, HD:]
            k_all, v_all = kv[:, :HD], kv[:, HD:]
        # Heads folded into rows -> ONE score matmul / softmax / PV matmul.
        q_f, k_f, v_f = fold_heads(q_all), fold_heads(k_all), fold_heads(v_all)
        s = matmul_nt(q_f, k_f) + mask             # (H*NT, H*NT) f32
        m = jnp.max(s, axis=-1, keepdims=True)
        p = jnp.exp(s - m)
        inv = pl.reciprocal(jnp.sum(p, axis=-1, keepdims=True), approx=True)
        o = unfold_heads(matmul(p * inv, v_f))     # (NT, H*Dh)
        # Fused per-head output projections: one stacked (H*Dh, D) matmul.
        return matmul(o, wmat(w_slot + 1, HD, D)) + vrow(v_row + 1, D)

    def ffn(x, w_slot, v_row):
        h = jnp.maximum(matmul(x, wmat(w_slot, D, F)) + vrow(v_row, F), 0.0)  # ReLU
        return matmul(h, wmat(w_slot + 1, F, D)) + vrow(v_row + 1, D)

    mask_enc = mask_enc_ref[...]      # head + batch block-diagonal
    mask_dec = mask_dec_ref[...]      # + causal + tgt key padding

    # ---------------- encoder stack + final encoder LayerNorm ----------------
    mem = src_ref[...]
    for l in range(NUM_LAYERS_ENC):
        ws, vs = enc_w_slot(l), enc_v_row(l)
        a = mha(mem, mem, ws, vs, mask_enc, True)
        h1 = layernorm(mem + a, vs + 2)
        f = ffn(h1, ws + 2, vs + 4)
        mem = layernorm(h1 + f, vs + 6)
    mem = layernorm(mem, ENC_NORM_ROW)

    # ---------------- decoder stack + final decoder LayerNorm ----------------
    x = tgt_ref[...]
    for l in range(NUM_LAYERS_DEC):
        ws, vs = dec_w_slot(l), dec_v_row(l)
        a = mha(x, x, ws, vs, mask_dec, True)
        h1 = layernorm(x + a, vs + 2)
        c = mha(h1, mem, ws + 2, vs + 4, mask_enc, False)
        h2 = layernorm(h1 + c, vs + 6)
        f = ffn(h2, ws + 4, vs + 8)
        x = layernorm(h2 + f, vs + 10)
    x = layernorm(x, DEC_NORM_ROW)

    # ---------------- final (lane-padded) vocabulary projection ----------------
    out_ref[...] = matmul(x, wmat(FIN_W_SLOT, D, OUT_PAD)) + vrow(FIN_B_ROW, OUT_PAD)


# ----------------------------- model glue -----------------------------
def add_start_token(tgt, start_token=START_TOKEN):
    # Matches add_start_token(): if the whole batch already starts with two consecutive
    # <sos> tokens return it unchanged, otherwise shift right and insert <sos>.
    has_two = jnp.all(tgt[:, :2] == start_token)
    shifted = jnp.concatenate(
        [jnp.full((tgt.shape[0], 1), start_token, tgt.dtype), tgt[:, :-1]], axis=1)
    return jnp.where(has_two, tgt, shifted)


def forward(params, src, tgt):
    N, T = src.shape
    D, H = HIDDEN_DIM, NUM_HEADS
    NT = N * T
    tgt = add_start_token(tgt)

    pos = jnp.arange(T)
    src_e = (params["src_emb"][src] + params["src_pos_emb"][pos][None]).astype(
        jnp.float32).reshape(NT, D)
    tgt_e = (params["tgt_emb"][tgt] + params["tgt_pos_emb"][pos][None]).astype(
        jnp.float32).reshape(NT, D)

    # Additive masks over the (NT, NT) batch-folded score matrix ...
    row = jnp.arange(NT)
    same_batch = (row[:, None] // T) == (row[None, :] // T)
    base_enc = jnp.where(same_batch, 0.0, NEG_INF).astype(jnp.float32)
    t_pos = row % T
    causal_ok = t_pos[None, :] <= t_pos[:, None]
    key_ok = (tgt.reshape(-1) != PAD_IDX)[None, :]            # tgt_key_padding_mask
    base_dec = jnp.where(same_batch & causal_ok & key_ok, 0.0, NEG_INF).astype(jnp.float32)

    # ... expanded head-block-diagonally to (H*NT, H*NT) so heads fold into rows too.
    def head_fold(m):
        big = jnp.full((H * NT, H * NT), NEG_INF, jnp.float32)
        for h in range(H):
            big = big.at[h * NT:(h + 1) * NT, h * NT:(h + 1) * NT].set(m)
        return big

    mask_enc = head_fold(base_enc)
    mask_dec = head_fold(base_dec)

    # Single gridless invocation: 6 inputs, everything resident in VMEM.
    out_pad = pl.pallas_call(
        _fused_transformer_kernel,
        out_shape=jax.ShapeDtypeStruct((NT, OUT_PAD), jnp.float32),
    )(src_e, tgt_e, mask_enc, mask_dec, params["w_pack"], params["v_pack"])

    return out_pad[:, :OUTPUT_SIZE].reshape(N, T, OUTPUT_SIZE)


# ----------------------------- parameter init (packed) -----------------------------
def init_params(key):
    D, F, H, Dh = HIDDEN_DIM, DIM_FF, NUM_HEADS, HEAD_DIM
    HD = H * Dh
    scale = 1.0 / (Dh ** 0.5)
    keys = iter(jax.random.split(key, 128))

    def nrm(shape, s=0.02):
        return s * jax.random.normal(next(keys), shape, jnp.float32)

    w_pack = jnp.zeros((NUM_W_SLOTS, 64, 128), jnp.float32)
    v_pack = jnp.zeros((NUM_V_ROWS, 128), jnp.float32)

    def put_w(wp, slot, mat):
        r, c = mat.shape
        return wp.at[slot, :r, :c].set(mat)

    def put_v(vp, r, vec):
        return vp.at[r, :vec.shape[0]].set(vec)

    def qkv_weight():
        # columns: [q_h0..q_h{H-1} | k_h0..k_h{H-1} | v_h0..v_h{H-1}];
        # 1/sqrt(Dh) folded into the Q block (init-time weight folding).
        w = nrm((D, 3 * HD)).at[:, :HD].multiply(scale)
        b = jnp.zeros((3 * HD,), jnp.float32).at[:HD].multiply(scale)
        return w, b

    ones_d = jnp.ones((D,), jnp.float32)
    zeros_d = jnp.zeros((D,), jnp.float32)
    zeros_f = jnp.zeros((F,), jnp.float32)

    for l in range(NUM_LAYERS_ENC):
        ws, vs = enc_w_slot(l), enc_v_row(l)
        wq, bq = qkv_weight()
        w_pack = put_w(w_pack, ws + 0, wq)
        w_pack = put_w(w_pack, ws + 1, nrm((HD, D)))     # stacked Wo
        w_pack = put_w(w_pack, ws + 2, nrm((D, F)))      # W1
        w_pack = put_w(w_pack, ws + 3, nrm((F, D)))      # W2
        for r, v in enumerate([bq, zeros_d, ones_d, zeros_d, zeros_f, zeros_d,
                               ones_d, zeros_d]):
            v_pack = put_v(v_pack, vs + r, v)
    v_pack = put_v(v_pack, ENC_NORM_ROW + 0, ones_d)
    v_pack = put_v(v_pack, ENC_NORM_ROW + 1, zeros_d)

    for l in range(NUM_LAYERS_DEC):
        ws, vs = dec_w_slot(l), dec_v_row(l)
        wsa, bsa = qkv_weight()
        wca, bca = qkv_weight()
        w_pack = put_w(w_pack, ws + 0, wsa)
        w_pack = put_w(w_pack, ws + 1, nrm((HD, D)))
        w_pack = put_w(w_pack, ws + 2, wca)
        w_pack = put_w(w_pack, ws + 3, nrm((HD, D)))
        w_pack = put_w(w_pack, ws + 4, nrm((D, F)))
        w_pack = put_w(w_pack, ws + 5, nrm((F, D)))
        for r, v in enumerate([bsa, zeros_d, ones_d, zeros_d, bca, zeros_d,
                               ones_d, zeros_d, zeros_f, zeros_d, ones_d, zeros_d]):
            v_pack = put_v(v_pack, vs + r, v)
    v_pack = put_v(v_pack, DEC_NORM_ROW + 0, ones_d)
    v_pack = put_v(v_pack, DEC_NORM_ROW + 1, zeros_d)

    # final projection (stored in a 128-lane slot -> lane-dense output store)
    w_pack = put_w(w_pack, FIN_W_SLOT, nrm((D, OUTPUT_SIZE)))
    v_pack = put_v(v_pack, FIN_B_ROW, jnp.zeros((OUTPUT_SIZE,), jnp.float32))

    return {
        "src_emb": nrm((INPUT_SIZE, D), 1.0),
        "tgt_emb": nrm((OUTPUT_SIZE, D), 1.0),
        "src_pos_emb": nrm((MAX_LENGTH, D), 1.0),
        "tgt_pos_emb": nrm((MAX_LENGTH, D), 1.0),
        "w_pack": w_pack.astype(jnp.bfloat16),   # MXU operands stored in bf16
        "v_pack": v_pack,                        # biases / LN params stay f32
    }


# ----------------------------- main -----------------------------
if __name__ == "__main__":
    key = jax.random.PRNGKey(0)
    kp, ks, kt = jax.random.split(key, 3)

    params = init_params(kp)

    N, T = 2, 8
    src = jax.random.randint(ks, (N, T), 0, INPUT_SIZE, dtype=jnp.int32)
    tgt = jax.random.randint(kt, (N, T), 0, OUTPUT_SIZE, dtype=jnp.int32)

    fwd = jax.jit(forward)
    out = jax.block_until_ready(fwd(params, src, tgt))

    assert out.shape == (N, T, OUTPUT_SIZE), out.shape
    assert bool(jnp.all(jnp.isfinite(out)))
    print("KERNEL_OK")
</pallas_src>

<mosaic_0001>
module attributes {stable_mosaic.version = 11 : i64} {
  func.func @_fused_transformer_kernel(%arg0: memref<16x32xf32, #tpu.memory_space<vmem>>, %arg1: memref<16x32xf32, #tpu.memory_space<vmem>>, %arg2: memref<32x32xf32, #tpu.memory_space<vmem>>, %arg3: memref<32x32xf32, #tpu.memory_space<vmem>>, %arg4: memref<21x64x128xbf16, #tpu.memory_space<vmem>>, %arg5: memref<45x128xf32, #tpu.memory_space<vmem>>, %arg6: memref<16x128xf32, #tpu.memory_space<vmem>>) attributes {dimension_semantics = [], scalar_prefetch = 0 : i64, scratch_operands = 0 : i64, tpu.core_type = #tpu.core_type<tc>} {
    %c0 = arith.constant 0 : index
    %c0_0 = arith.constant 0 : index
    %0 = vector.load %arg2[%c0, %c0_0] : memref<32x32xf32, #tpu.memory_space<vmem>>, vector<32x32xf32>
    %c0_1 = arith.constant 0 : index
    %c0_2 = arith.constant 0 : index
    %1 = vector.load %arg3[%c0_1, %c0_2] : memref<32x32xf32, #tpu.memory_space<vmem>>, vector<32x32xf32>
    %c0_3 = arith.constant 0 : index
    %c0_4 = arith.constant 0 : index
    %2 = vector.load %arg0[%c0_3, %c0_4] : memref<16x32xf32, #tpu.memory_space<vmem>>, vector<16x32xf32>
    %c0_5 = arith.constant 0 : index
    %c0_6 = arith.constant 0 : index
    %c0_7 = arith.constant 0 : index
    %3 = vector.load %arg4[%c0_5, %c0_6, %c0_7] : memref<21x64x128xbf16, #tpu.memory_space<vmem>>, vector<1x32x96xbf16>
    %4 = vector.shape_cast %3 : vector<1x32x96xbf16> to vector<32x96xbf16>
    %c0_8 = arith.constant 0 : index
    %c0_9 = arith.constant 0 : index
    %5 = vector.load %arg5[%c0_8, %c0_9] : memref<45x128xf32, #tpu.memory_space<vmem>>, vector<1x96xf32>
    %6 = arith.truncf %2 : vector<16x32xf32> to vector<16x32xbf16>
    %cst = arith.constant dense<0.000000e+00> : vector<16x96xf32>
    %7 = tpu.matmul %6, %4, %cst {dimension_numbers = #tpu.dot_dimension_numbers<[1], [0], [0], [1], [0, 0, 1, 1], [], []>} : vector<16x32xbf16>, vector<32x96xbf16>, vector<16x96xf32> -> vector<16x96xf32>
    %8 = vector.broadcast %5 : vector<1x96xf32> to vector<16x96xf32>
    %9 = arith.addf %7, %8 : vector<16x96xf32>
    %10 = vector.extract_strided_slice %9 {offsets = [0, 0], sizes = [16, 32], strides = [1, 1]} : vector<16x96xf32> to vector<16x32xf32>
    %11 = vector.extract_strided_slice %9 {offsets = [0, 32], sizes = [16, 32], strides = [1, 1]} : vector<16x96xf32> to vector<16x32xf32>
    %12 = vector.extract_strided_slice %9 {offsets = [0, 64], sizes = [16, 32], strides = [1, 1]} : vector<16x96xf32> to vector<16x32xf32>
    %13 = vector.extract_strided_slice %10 {offsets = [0, 0], sizes = [16, 16], strides = [1, 1]} : vector<16x32xf32> to vector<16x16xf32>
    %14 = vector.extract_strided_slice %10 {offsets = [0, 16], sizes = [16, 16], strides = [1, 1]} : vector<16x32xf32> to vector<16x16xf32>
    %15 = tpu.concatenate %13, %14 in 0 : vector<16x16xf32>, vector<16x16xf32> -> vector<32x16xf32>
    %16 = vector.extract_strided_slice %11 {offsets = [0, 0], sizes = [16, 16], strides = [1, 1]} : vector<16x32xf32> to vector<16x16xf32>
    %17 = vector.extract_strided_slice %11 {offsets = [0, 16], sizes = [16, 16], strides = [1, 1]} : vector<16x32xf32> to vector<16x16xf32>
    %18 = tpu.concatenate %16, %17 in 0 : vector<16x16xf32>, vector<16x16xf32> -> vector<32x16xf32>
    %19 = vector.extract_strided_slice %12 {offsets = [0, 0], sizes = [16, 16], strides = [1, 1]} : vector<16x32xf32> to vector<16x16xf32>
    %20 = vector.extract_strided_slice %12 {offsets = [0, 16], sizes = [16, 16], strides = [1, 1]} : vector<16x32xf32> to vector<16x16xf32>
    %21 = tpu.concatenate %19, %20 in 0 : vector<16x16xf32>, vector<16x16xf32> -> vector<32x16xf32>
    %22 = arith.truncf %15 : vector<32x16xf32> to vector<32x16xbf16>
    %23 = arith.truncf %18 : vector<32x16xf32> to vector<32x16xbf16>
    %cst_10 = arith.constant dense<0.000000e+00> : vector<32x32xf32>
    %24 = tpu.matmul %22, %23, %cst_10 {dimension_numbers = #tpu.dot_dimension_numbers<[1], [1], [0], [0], [0, 0, 1, 0], [], []>} : vector<32x16xbf16>, vector<32x16xbf16>, vector<32x32xf32> -> vector<32x32xf32>
    %25 = arith.addf %24, %0 : vector<32x32xf32>
    %cst_11 = arith.constant dense<0xFF800000> : vector<32xf32>
    %26 = vector.multi_reduction <maximumf>, %25, %cst_11 [1] : vector<32x32xf32> to vector<32xf32>
    %27 = vector.shape_cast %26 : vector<32xf32> to vector<32x1xf32>
    %28 = vector.broadcast %27 : vector<32x1xf32> to vector<32x32xf32>
    %29 = arith.subf %25, %28 : vector<32x32xf32>
    %30 = math.exp %29 : vector<32x32xf32>
    %cst_12 = arith.constant dense<0.000000e+00> : vector<32xf32>
    %31 = vector.multi_reduction <add>, %30, %cst_12 [1] : vector<32x32xf32> to vector<32xf32>
    %32 = vector.shape_cast %31 : vector<32xf32> to vector<32x1xf32>
    %33 = tpu.reciprocal %32 {approx = true} : vector<32x1xf32> -> vector<32x1xf32>
    %34 = vector.broadcast %33 : vector<32x1xf32> to vector<32x32xf32>
    %35 = arith.mulf %30, %34 : vector<32x32xf32>
    %36 = arith.truncf %35 : vector<32x32xf32> to vector<32x32xbf16>
    %37 = arith.truncf %21 : vector<32x16xf32> to vector<32x16xbf16>
    %cst_13 = arith.constant dense<0.000000e+00> : vector<32x16xf32>
    %38 = tpu.matmul %36, %37, %cst_13 {dimension_numbers = #tpu.dot_dimension_numbers<[1], [0], [0], [1], [0, 0, 1, 1], [], []>} : vector<32x32xbf16>, vector<32x16xbf16>, vector<32x16xf32> -> vector<32x16xf32>
    %39 = vector.extract_strided_slice %38 {offsets = [0, 0], sizes = [16, 16], strides = [1, 1]} : vector<32x16xf32> to vector<16x16xf32>
    %40 = vector.extract_strided_slice %38 {offsets = [16, 0], sizes = [16, 16], strides = [1, 1]} : vector<32x16xf32> to vector<16x16xf32>
    %41 = tpu.concatenate %39, %40 in 1 : vector<16x16xf32>, vector<16x16xf32> -> vector<16x32xf32>
    %c1 = arith.constant 1 : index
    %c0_14 = arith.constant 0 : index
    %c0_15 = arith.constant 0 : index
    %42 = vector.load %arg4[%c1, %c0_14, %c0_15] : memref<21x64x128xbf16, #tpu.memory_space<vmem>>, vector<1x32x32xbf16>
    %43 = vector.shape_cast %42 : vector<1x32x32xbf16> to vector<32x32xbf16>
    %44 = arith.truncf %41 : vector<16x32xf32> to vector<16x32xbf16>
    %cst_16 = arith.constant dense<0.000000e+00> : vector<16x32xf32>
    %45 = tpu.matmul %44, %43, %cst_16 {dimension_numbers = #tpu.dot_dimension_numbers<[1], [0], [0], [1], [0, 0, 1, 1], [], []>} : vector<16x32xbf16>, vector<32x32xbf16>, vector<16x32xf32> -> vector<16x32xf32>
    %c1_17 = arith.constant 1 : index
    %c0_18 = arith.constant 0 : index
    %46 = vector.load %arg5[%c1_17, %c0_18] : memref<45x128xf32, #tpu.memory_space<vmem>>, vector<1x32xf32>
    %47 = vector.broadcast %46 : vector<1x32xf32> to vector<16x32xf32>
    %48 = arith.addf %45, %47 : vector<16x32xf32>
    %49 = arith.addf %2, %48 : vector<16x32xf32>
    %c2 = arith.constant 2 : index
    %c0_19 = arith.constant 0 : index
    %50 = vector.load %arg5[%c2, %c0_19] : memref<45x128xf32, #tpu.memory_space<vmem>>, vector<1x32xf32>
    %c3 = arith.constant 3 : index
    %c0_20 = arith.constant 0 : index
    %51 = vector.load %arg5[%c3, %c0_20] : memref<45x128xf32, #tpu.memory_space<vmem>>, vector<1x32xf32>
    %cst_21 = arith.constant dense<0.000000e+00> : vector<16xf32>
    %52 = vector.multi_reduction <add>, %49, %cst_21 [1] : vector<16x32xf32> to vector<16xf32>
    %53 = vector.shape_cast %52 : vector<16xf32> to vector<16x1xf32>
    %cst_22 = arith.constant 3.125000e-02 : f32
    %54 = vector.broadcast %cst_22 : f32 to vector<16x1xf32>
    %55 = arith.mulf %53, %54 : vector<16x1xf32>
    %56 = arith.mulf %49, %49 : vector<16x32xf32>
    %cst_23 = arith.constant dense<0.000000e+00> : vector<16xf32>
    %57 = vector.multi_reduction <add>, %56, %cst_23 [1] : vector<16x32xf32> to vector<16xf32>
    %58 = vector.shape_cast %57 : vector<16xf32> to vector<16x1xf32>
    %cst_24 = arith.constant 3.125000e-02 : f32
    %59 = vector.broadcast %cst_24 : f32 to vector<16x1xf32>
    %60 = arith.mulf %58, %59 : vector<16x1xf32>
    %61 = arith.mulf %55, %55 : vector<16x1xf32>
    %62 = arith.subf %60, %61 : vector<16x1xf32>
    %63 = vector.broadcast %55 : vector<16x1xf32> to vector<16x32xf32>
    %64 = arith.subf %49, %63 : vector<16x32xf32>
    %cst_25 = arith.constant 9.99999974E-6 : f32
    %65 = vector.broadcast %cst_25 : f32 to vector<16x1xf32>
    %66 = arith.addf %62, %65 : vector<16x1xf32>
    %67 = math.rsqrt %66 : vector<16x1xf32>
    %68 = vector.broadcast %67 : vector<16x1xf32> to vector<16x32xf32>
    %69 = arith.mulf %64, %68 : vector<16x32xf32>
    %70 = vector.broadcast %50 : vector<1x32xf32> to vector<16x32xf32>
    %71 = arith.mulf %69, %70 : vector<16x32xf32>
    %72 = vector.broadcast %51 : vector<1x32xf32> to vector<16x32xf32>
    %73 = arith.addf %71, %72 : vector<16x32xf32>
    %c2_26 = arith.constant 2 : index
    %c0_27 = arith.constant 0 : index
    %c0_28 = arith.constant 0 : index
    %74 = vector.load %arg4[%c2_26, %c0_27, %c0_28] : memref<21x64x128xbf16, #tpu.memory_space<vmem>>, vector<1x32x64xbf16>
    %75 = vector.shape_cast %74 : vector<1x32x64xbf16> to vector<32x64xbf16>
    %76 = arith.truncf %73 : vector<16x32xf32> to vector<16x32xbf16>
    %cst_29 = arith.constant dense<0.000000e+00> : vector<16x64xf32>
    %77 = tpu.matmul %76, %75, %cst_29 {dimension_numbers = #tpu.dot_dimension_numbers<[1], [0], [0], [1], [0, 0, 1, 1], [], []>} : vector<16x32xbf16>, vector<32x64xbf16>, vector<16x64xf32> -> vector<16x64xf32>
    %c4 = arith.constant 4 : index
    %c0_30 = arith.constant 0 : index
    %78 = vector.load %arg5[%c4, %c0_30] : memref<45x128xf32, #tpu.memory_space<vmem>>, vector<1x64xf32>
    %79 = vector.broadcast %78 : vector<1x64xf32> to vector<16x64xf32>
    %80 = arith.addf %77, %79 : vector<16x64xf32>
    %cst_31 = arith.constant 0.000000e+00 : f32
    %81 = vector.broadcast %cst_31 : f32 to vector<16x64xf32>
    %82 = arith.maximumf %80, %81 : vector<16x64xf32>
    %c3_32 = arith.constant 3 : index
    %c0_33 = arith.constant 0 : index
    %c0_34 = arith.constant 0 : index
    %83 = vector.load %arg4[%c3_32, %c0_33, %c0_34] : memref<21x64x128xbf16, #tpu.memory_space<vmem>>, vector<1x64x32xbf16>
    %84 = vector.shape_cast %83 : vector<1x64x32xbf16> to vector<64x32xbf16>
    %85 = arith.truncf %82 : vector<16x64xf32> to vector<16x64xbf16>
    %cst_35 = arith.constant dense<0.000000e+00> : vector<16x32xf32>
    %86 = tpu.matmul %85, %84, %cst_35 {dimension_numbers = #tpu.dot_dimension_numbers<[1], [0], [0], [1], [0, 0, 1, 1], [], []>} : vector<16x64xbf16>, vector<64x32xbf16>, vector<16x32xf32> -> vector<16x32xf32>
    %c5 = arith.constant 5 : index
    %c0_36 = arith.constant 0 : index
    %87 = vector.load %arg5[%c5, %c0_36] : memref<45x128xf32, #tpu.memory_space<vmem>>, vector<1x32xf32>
    %88 = vector.broadcast %87 : vector<1x32xf32> to vector<16x32xf32>
    %89 = arith.addf %86, %88 : vector<16x32xf32>
    %90 = arith.addf %73, %89 : vector<16x32xf32>
    %c6 = arith.constant 6 : index
    %c0_37 = arith.constant 0 : index
    %91 = vector.load %arg5[%c6, %c0_37] : memref<45x128xf32, #tpu.memory_space<vmem>>, vector<1x32xf32>
    %c7 = arith.constant 7 : index
    %c0_38 = arith.constant 0 : index
    %92 = vector.load %arg5[%c7, %c0_38] : memref<45x128xf32, #tpu.memory_space<vmem>>, vector<1x32xf32>
    %cst_39 = arith.constant dense<0.000000e+00> : vector<16xf32>
    %93 = vector.multi_reduction <add>, %90, %cst_39 [1] : vector<16x32xf32> to vector<16xf32>
    %94 = vector.shape_cast %93 : vector<16xf32> to vector<16x1xf32>
    %cst_40 = arith.constant 3.125000e-02 : f32
    %95 = vector.broadcast %cst_40 : f32 to vector<16x1xf32>
    %96 = arith.mulf %94, %95 : vector<16x1xf32>
    %97 = arith.mulf %90, %90 : vector<16x32xf32>
    %cst_41 = arith.constant dense<0.000000e+00> : vector<16xf32>
    %98 = vector.multi_reduction <add>, %97, %cst_41 [1] : vector<16x32xf32> to vector<16xf32>
    %99 = vector.shape_cast %98 : vector<16xf32> to vector<16x1xf32>
    %cst_42 = arith.constant 3.125000e-02 : f32
    %100 = vector.broadcast %cst_42 : f32 to vector<16x1xf32>
    %101 = arith.mulf %99, %100 : vector<16x1xf32>
    %102 = arith.mulf %96, %96 : vector<16x1xf32>
    %103 = arith.subf %101, %102 : vector<16x1xf32>
    %104 = vector.broadcast %96 : vector<16x1xf32> to vector<16x32xf32>
    %105 = arith.subf %90, %104 : vector<16x32xf32>
    %cst_43 = arith.constant 9.99999974E-6 : f32
    %106 = vector.broadcast %cst_43 : f32 to vector<16x1xf32>
    %107 = arith.addf %103, %106 : vector<16x1xf32>
    %108 = math.rsqrt %107 : vector<16x1xf32>
    %109 = vector.broadcast %108 : vector<16x1xf32> to vector<16x32xf32>
    %110 = arith.mulf %105, %109 : vector<16x32xf32>
    %111 = vector.broadcast %91 : vector<1x32xf32> to vector<16x32xf32>
    %112 = arith.mulf %110, %111 : vector<16x32xf32>
    %113 = vector.broadcast %92 : vector<1x32xf32> to vector<16x32xf32>
    %114 = arith.addf %112, %113 : vector<16x32xf32>
    %c4_44 = arith.constant 4 : index
    %c0_45 = arith.constant 0 : index
    %c0_46 = arith.constant 0 : index
    %115 = vector.load %arg4[%c4_44, %c0_45, %c0_46] : memref<21x64x128xbf16, #tpu.memory_space<vmem>>, vector<1x32x96xbf16>
    %116 = vector.shape_cast %115 : vector<1x32x96xbf16> to vector<32x96xbf16>
    %c8 = arith.constant 8 : index
    %c0_47 = arith.constant 0 : index
    %117 = vector.load %arg5[%c8, %c0_47] : memref<45x128xf32, #tpu.memory_space<vmem>>, vector<1x96xf32>
    %118 = arith.truncf %114 : vector<16x32xf32> to vector<16x32xbf16>
    %cst_48 = arith.constant dense<0.000000e+00> : vector<16x96xf32>
    %119 = tpu.matmul %118, %116, %cst_48 {dimension_numbers = #tpu.dot_dimension_numbers<[1], [0], [0], [1], [0, 0, 1, 1], [], []>} : vector<16x32xbf16>, vector<32x96xbf16>, vector<16x96xf32> -> vector<16x96xf32>
    %120 = vector.broadcast %117 : vector<1x96xf32> to vector<16x96xf32>
    %121 = arith.addf %119, %120 : vector<16x96xf32>
    %122 = vector.extract_strided_slice %121 {offsets = [0, 0], sizes = [16, 32], strides = [1, 1]} : vector<16x96xf32> to vector<16x32xf32>
    %123 = vector.extract_strided_slice %121 {offsets = [0, 32], sizes = [16, 32], strides = [1, 1]} : vector<16x96xf32> to vector<16x32xf32>
    %124 = vector.extract_strided_slice %121 {offsets = [0, 64], sizes = [16, 32], strides = [1, 1]} : vector<16x96xf32> to vector<16x32xf32>
    %125 = vector.extract_strided_slice %122 {offsets = [0, 0], sizes = [16, 16], strides = [1, 1]} : vector<16x32xf32> to vector<16x16xf32>
    %126 = vector.extract_strided_slice %122 {offsets = [0, 16], sizes = [16, 16], strides = [1, 1]} : vector<16x32xf32> to vector<16x16xf32>
    %127 = tpu.concatenate %125, %126 in 0 : vector<16x16xf32>, vector<16x16xf32> -> vector<32x16xf32>
    %128 = vector.extract_strided_slice %123 {offsets = [0, 0], sizes = [16, 16], strides = [1, 1]} : vector<16x32xf32> to vector<16x16xf32>
    %129 = vector.extract_strided_slice %123 {offsets = [0, 16], sizes = [16, 16], strides = [1, 1]} : vector<16x32xf32> to vector<16x16xf32>
    %130 = tpu.concatenate %128, %129 in 0 : vector<16x16xf32>, vector<16x16xf32> -> vector<32x16xf32>
    %131 = vector.extract_strided_slice %124 {offsets = [0, 0], sizes = [16, 16], strides = [1, 1]} : vector<16x32xf32> to vector<16x16xf32>
    %132 = vector.extract_strided_slice %124 {offsets = [0, 16], sizes = [16, 16], strides = [1, 1]} : vector<16x32xf32> to vector<16x16xf32>
    %133 = tpu.concatenate %131, %132 in 0 : vector<16x16xf32>, vector<16x16xf32> -> vector<32x16xf32>
    %134 = arith.truncf %127 : vector<32x16xf32> to vector<32x16xbf16>
    %135 = arith.truncf %130 : vector<32x16xf32> to vector<32x16xbf16>
    %cst_49 = arith.constant dense<0.000000e+00> : vector<32x32xf32>
    %136 = tpu.matmul %134, %135, %cst_49 {dimension_numbers = #tpu.dot_dimension_numbers<[1], [1], [0], [0], [0, 0, 1, 0], [], []>} : vector<32x16xbf16>, vector<32x16xbf16>, vector<32x32xf32> -> vector<32x32xf32>
    %137 = arith.addf %136, %0 : vector<32x32xf32>
    %cst_50 = arith.constant dense<0xFF800000> : vector<32xf32>
    %138 = vector.multi_reduction <maximumf>, %137, %cst_50 [1] : vector<32x32xf32> to vector<32xf32>
    %139 = vector.shape_cast %138 : vector<32xf32> to vector<32x1xf32>
    %140 = vector.broadcast %139 : vector<32x1xf32> to vector<32x32xf32>
    %141 = arith.subf %137, %140 : vector<32x32xf32>
    %142 = math.exp %141 : vector<32x32xf32>
    %cst_51 = arith.constant dense<0.000000e+00> : vector<32xf32>
    %143 = vector.multi_reduction <add>, %142, %cst_51 [1] : vector<32x32xf32> to vector<32xf32>
    %144 = vector.shape_cast %143 : vector<32xf32> to vector<32x1xf32>
    %145 = tpu.reciprocal %144 {approx = true} : vector<32x1xf32> -> vector<32x1xf32>
    %146 = vector.broadcast %145 : vector<32x1xf32> to vector<32x32xf32>
    %147 = arith.mulf %142, %146 : vector<32x32xf32>
    %148 = arith.truncf %147 : vector<32x32xf32> to vector<32x32xbf16>
    %149 = arith.truncf %133 : vector<32x16xf32> to vector<32x16xbf16>
    %cst_52 = arith.constant dense<0.000000e+00> : vector<32x16xf32>
    %150 = tpu.matmul %148, %149, %cst_52 {dimension_numbers = #tpu.dot_dimension_numbers<[1], [0], [0], [1], [0, 0, 1, 1], [], []>} : vector<32x32xbf16>, vector<32x16xbf16>, vector<32x16xf32> -> vector<32x16xf32>
    %151 = vector.extract_strided_slice %150 {offsets = [0, 0], sizes = [16, 16], strides = [1, 1]} : vector<32x16xf32> to vector<16x16xf32>
    %152 = vector.extract_strided_slice %150 {offsets = [16, 0], sizes = [16, 16], strides = [1, 1]} : vector<32x16xf32> to vector<16x16xf32>
    %153 = tpu.concatenate %151, %152 in 1 : vector<16x16xf32>, vector<16x16xf32> -> vector<16x32xf32>
    %c5_53 = arith.constant 5 : index
    %c0_54 = arith.constant 0 : index
    %c0_55 = arith.constant 0 : index
    %154 = vector.load %arg4[%c5_53, %c0_54, %c0_55] : memref<21x64x128xbf16, #tpu.memory_space<vmem>>, vector<1x32x32xbf16>
    %155 = vector.shape_cast %154 : vector<1x32x32xbf16> to vector<32x32xbf16>
    %156 = arith.truncf %153 : vector<16x32xf32> to vector<16x32xbf16>
    %cst_56 = arith.constant dense<0.000000e+00> : vector<16x32xf32>
    %157 = tpu.matmul %156, %155, %cst_56 {dimension_numbers = #tpu.dot_dimension_numbers<[1], [0], [0], [1], [0, 0, 1, 1], [], []>} : vector<16x32xbf16>, vector<32x32xbf16>, vector<16x32xf32> -> vector<16x32xf32>
    %c9 = arith.constant 9 : index
    %c0_57 = arith.constant 0 : index
    %158 = vector.load %arg5[%c9, %c0_57] : memref<45x128xf32, #tpu.memory_space<vmem>>, vector<1x32xf32>
    %159 = vector.broadcast %158 : vector<1x32xf32> to vector<16x32xf32>
    %160 = arith.addf %157, %159 : vector<16x32xf32>
    %161 = arith.addf %114, %160 : vector<16x32xf32>
    %c10 = arith.constant 10 : index
    %c0_58 = arith.constant 0 : index
    %162 = vector.load %arg5[%c10, %c0_58] : memref<45x128xf32, #tpu.memory_space<vmem>>, vector<1x32xf32>
    %c11 = arith.constant 11 : index
    %c0_59 = arith.constant 0 : index
    %163 = vector.load %arg5[%c11, %c0_59] : memref<45x128xf32, #tpu.memory_space<vmem>>, vector<1x32xf32>
    %cst_60 = arith.constant dense<0.000000e+00> : vector<16xf32>
    %164 = vector.multi_reduction <add>, %161, %cst_60 [1] : vector<16x32xf32> to vector<16xf32>
    %165 = vector.shape_cast %164 : vector<16xf32> to vector<16x1xf32>
    %cst_61 = arith.constant 3.125000e-02 : f32
    %166 = vector.broadcast %cst_61 : f32 to vector<16x1xf32>
    %167 = arith.mulf %165, %166 : vector<16x1xf32>
    %168 = arith.mulf %161, %161 : vector<16x32xf32>
    %cst_62 = arith.constant dense<0.000000e+00> : vector<16xf32>
    %169 = vector.multi_reduction <add>, %168, %cst_62 [1] : vector<16x32xf32> to vector<16xf32>
    %170 = vector.shape_cast %169 : vector<16xf32> to vector<16x1xf32>
    %cst_63 = arith.constant 3.125000e-02 : f32
    %171 = vector.broadcast %cst_63 : f32 to vector<16x1xf32>
    %172 = arith.mulf %170, %171 : vector<16x1xf32>
    %173 = arith.mulf %167, %167 : vector<16x1xf32>
    %174 = arith.subf %172, %173 : vector<16x1xf32>
    %175 = vector.broadcast %167 : vector<16x1xf32> to vector<16x32xf32>
    %176 = arith.subf %161, %175 : vector<16x32xf32>
    %cst_64 = arith.constant 9.99999974E-6 : f32
    %177 = vector.broadcast %cst_64 : f32 to vector<16x1xf32>
    %178 = arith.addf %174, %177 : vector<16x1xf32>
    %179 = math.rsqrt %178 : vector<16x1xf32>
    %180 = vector.broadcast %179 : vector<16x1xf32> to vector<16x32xf32>
    %181 = arith.mulf %176, %180 : vector<16x32xf32>
    %182 = vector.broadcast %162 : vector<1x32xf32> to vector<16x32xf32>
    %183 = arith.mulf %181, %182 : vector<16x32xf32>
    %184 = vector.broadcast %163 : vector<1x32xf32> to vector<16x32xf32>
    %185 = arith.addf %183, %184 : vector<16x32xf32>
    %c6_65 = arith.constant 6 : index
    %c0_66 = arith.constant 0 : index
    %c0_67 = arith.constant 0 : index
    %186 = vector.load %arg4[%c6_65, %c0_66, %c0_67] : memref<21x64x128xbf16, #tpu.memory_space<vmem>>, vector<1x32x64xbf16>
    %187 = vector.shape_cast %186 : vector<1x32x64xbf16> to vector<32x64xbf16>
    %188 = arith.truncf %185 : vector<16x32xf32> to vector<16x32xbf16>
    %cst_68 = arith.constant dense<0.000000e+00> : vector<16x64xf32>
    %189 = tpu.matmul %188, %187, %cst_68 {dimension_numbers = #tpu.dot_dimension_numbers<[1], [0], [0], [1], [0, 0, 1, 1], [], []>} : vector<16x32xbf16>, vector<32x64xbf16>, vector<16x64xf32> -> vector<16x64xf32>
    %c12 = arith.constant 12 : index
    %c0_69 = arith.constant 0 : index
    %190 = vector.load %arg5[%c12, %c0_69] : memref<45x128xf32, #tpu.memory_space<vmem>>, vector<1x64xf32>
    %191 = vector.broadcast %190 : vector<1x64xf32> to vector<16x64xf32>
    %192 = arith.addf %189, %191 : vector<16x64xf32>
    %cst_70 = arith.constant 0.000000e+00 : f32
    %193 = vector.broadcast %cst_70 : f32 to vector<16x64xf32>
    %194 = arith.maximumf %192, %193 : vector<16x64xf32>
    %c7_71 = arith.constant 7 : index
    %c0_72 = arith.constant 0 : index
    %c0_73 = arith.constant 0 : index
    %195 = vector.load %arg4[%c7_71, %c0_72, %c0_73] : memref<21x64x128xbf16, #tpu.memory_space<vmem>>, vector<1x64x32xbf16>
    %196 = vector.shape_cast %195 : vector<1x64x32xbf16> to vector<64x32xbf16>
    %197 = arith.truncf %194 : vector<16x64xf32> to vector<16x64xbf16>
    %cst_74 = arith.constant dense<0.000000e+00> : vector<16x32xf32>
    %198 = tpu.matmul %197, %196, %cst_74 {dimension_numbers = #tpu.dot_dimension_numbers<[1], [0], [0], [1], [0, 0, 1, 1], [], []>} : vector<16x64xbf16>, vector<64x32xbf16>, vector<16x32xf32> -> vector<16x32xf32>
    %c13 = arith.constant 13 : index
    %c0_75 = arith.constant 0 : index
    %199 = vector.load %arg5[%c13, %c0_75] : memref<45x128xf32, #tpu.memory_space<vmem>>, vector<1x32xf32>
    %200 = vector.broadcast %199 : vector<1x32xf32> to vector<16x32xf32>
    %201 = arith.addf %198, %200 : vector<16x32xf32>
    %202 = arith.addf %185, %201 : vector<16x32xf32>
    %c14 = arith.constant 14 : index
    %c0_76 = arith.constant 0 : index
    %203 = vector.load %arg5[%c14, %c0_76] : memref<45x128xf32, #tpu.memory_space<vmem>>, vector<1x32xf32>
    %c15 = arith.constant 15 : index
    %c0_77 = arith.constant 0 : index
    %204 = vector.load %arg5[%c15, %c0_77] : memref<45x128xf32, #tpu.memory_space<vmem>>, vector<1x32xf32>
    %cst_78 = arith.constant dense<0.000000e+00> : vector<16xf32>
    %205 = vector.multi_reduction <add>, %202, %cst_78 [1] : vector<16x32xf32> to vector<16xf32>
    %206 = vector.shape_cast %205 : vector<16xf32> to vector<16x1xf32>
    %cst_79 = arith.constant 3.125000e-02 : f32
    %207 = vector.broadcast %cst_79 : f32 to vector<16x1xf32>
    %208 = arith.mulf %206, %207 : vector<16x1xf32>
    %209 = arith.mulf %202, %202 : vector<16x32xf32>
    %cst_80 = arith.constant dense<0.000000e+00> : vector<16xf32>
    %210 = vector.multi_reduction <add>, %209, %cst_80 [1] : vector<16x32xf32> to vector<16xf32>
    %211 = vector.shape_cast %210 : vector<16xf32> to vector<16x1xf32>
    %cst_81 = arith.constant 3.125000e-02 : f32
    %212 = vector.broadcast %cst_81 : f32 to vector<16x1xf32>
    %213 = arith.mulf %211, %212 : vector<16x1xf32>
    %214 = arith.mulf %208, %208 : vector<16x1xf32>
    %215 = arith.subf %213, %214 : vector<16x1xf32>
    %216 = vector.broadcast %208 : vector<16x1xf32> to vector<16x32xf32>
    %217 = arith.subf %202, %216 : vector<16x32xf32>
    %cst_82 = arith.constant 9.99999974E-6 : f32
    %218 = vector.broadcast %cst_82 : f32 to vector<16x1xf32>
    %219 = arith.addf %215, %218 : vector<16x1xf32>
    %220 = math.rsqrt %219 : vector<16x1xf32>
    %221 = vector.broadcast %220 : vector<16x1xf32> to vector<16x32xf32>
    %222 = arith.mulf %217, %221 : vector<16x32xf32>
    %223 = vector.broadcast %203 : vector<1x32xf32> to vector<16x32xf32>
    %224 = arith.mulf %222, %223 : vector<16x32xf32>
    %225 = vector.broadcast %204 : vector<1x32xf32> to vector<16x32xf32>
    %226 = arith.addf %224, %225 : vector<16x32xf32>
    %c16 = arith.constant 16 : index
    %c0_83 = arith.constant 0 : index
    %227 = vector.load %arg5[%c16, %c0_83] : memref<45x128xf32, #tpu.memory_space<vmem>>, vector<1x32xf32>
    %c17 = arith.constant 17 : index
    %c0_84 = arith.constant 0 : index
    %228 = vector.load %arg5[%c17, %c0_84] : memref<45x128xf32, #tpu.memory_space<vmem>>, vector<1x32xf32>
    %cst_85 = arith.constant dense<0.000000e+00> : vector<16xf32>
    %229 = vector.multi_reduction <add>, %226, %cst_85 [1] : vector<16x32xf32> to vector<16xf32>
    %230 = vector.shape_cast %229 : vector<16xf32> to vector<16x1xf32>
    %cst_86 = arith.constant 3.125000e-02 : f32
    %231 = vector.broadcast %cst_86 : f32 to vector<16x1xf32>
    %232 = arith.mulf %230, %231 : vector<16x1xf32>
    %233 = arith.mulf %226, %226 : vector<16x32xf32>
    %cst_87 = arith.constant dense<0.000000e+00> : vector<16xf32>
    %234 = vector.multi_reduction <add>, %233, %cst_87 [1] : vector<16x32xf32> to vector<16xf32>
    %235 = vector.shape_cast %234 : vector<16xf32> to vector<16x1xf32>
    %cst_88 = arith.constant 3.125000e-02 : f32
    %236 = vector.broadcast %cst_88 : f32 to vector<16x1xf32>
    %237 = arith.mulf %235, %236 : vector<16x1xf32>
    %238 = arith.mulf %232, %232 : vector<16x1xf32>
    %239 = arith.subf %237, %238 : vector<16x1xf32>
    %240 = vector.broadcast %232 : vector<16x1xf32> to vector<16x32xf32>
    %241 = arith.subf %226, %240 : vector<16x32xf32>
    %cst_89 = arith.constant 9.99999974E-6 : f32
    %242 = vector.broadcast %cst_89 : f32 to vector<16x1xf32>
    %243 = arith.addf %239, %242 : vector<16x1xf32>
    %244 = math.rsqrt %243 : vector<16x1xf32>
    %245 = vector.broadcast %244 : vector<16x1xf32> to vector<16x32xf32>
    %246 = arith.mulf %241, %245 : vector<16x32xf32>
    %247 = vector.broadcast %227 : vector<1x32xf32> to vector<16x32xf32>
    %248 = arith.mulf %246, %247 : vector<16x32xf32>
    %249 = vector.broadcast %228 : vector<1x32xf32> to vector<16x32xf32>
    %250 = arith.addf %248, %249 : vector<16x32xf32>
    %c0_90 = arith.constant 0 : index
    %c0_91 = arith.constant 0 : index
    %251 = vector.load %arg1[%c0_90, %c0_91] : memref<16x32xf32, #tpu.memory_space<vmem>>, vector<16x32xf32>
    %c8_92 = arith.constant 8 : index
    %c0_93 = arith.constant 0 : index
    %c0_94 = arith.constant 0 : index
    %252 = vector.load %arg4[%c8_92, %c0_93, %c0_94] : memref<21x64x128xbf16, #tpu.memory_space<vmem>>, vector<1x32x96xbf16>
    %253 = vector.shape_cast %252 : vector<1x32x96xbf16> to vector<32x96xbf16>
    %c18 = arith.constant 18 : index
    %c0_95 = arith.constant 0 : index
    %254 = vector.load %arg5[%c18, %c0_95] : memref<45x128xf32, #tpu.memory_space<vmem>>, vector<1x96xf32>
    %255 = arith.truncf %251 : vector<16x32xf32> to vector<16x32xbf16>
    %cst_96 = arith.constant dense<0.000000e+00> : vector<16x96xf32>
    %256 = tpu.matmul %255, %253, %cst_96 {dimension_numbers = #tpu.dot_dimension_numbers<[1], [0], [0], [1], [0, 0, 1, 1], [], []>} : vector<16x32xbf16>, vector<32x96xbf16>, vector<16x96xf32> -> vector<16x96xf32>
    %257 = vector.broadcast %254 : vector<1x96xf32> to vector<16x96xf32>
    %258 = arith.addf %256, %257 : vector<16x96xf32>
    %259 = vector.extract_strided_slice %258 {offsets = [0, 0], sizes = [16, 32], strides = [1, 1]} : vector<16x96xf32> to vector<16x32xf32>
    %260 = vector.extract_strided_slice %258 {offsets = [0, 32], sizes = [16, 32], strides = [1, 1]} : vector<16x96xf32> to vector<16x32xf32>
    %261 = vector.extract_strided_slice %258 {offsets = [0, 64], sizes = [16, 32], strides = [1, 1]} : vector<16x96xf32> to vector<16x32xf32>
    %262 = vector.extract_strided_slice %259 {offsets = [0, 0], sizes = [16, 16], strides = [1, 1]} : vector<16x32xf32> to vector<16x16xf32>
    %263 = vector.extract_strided_slice %259 {offsets = [0, 16], sizes = [16, 16], strides = [1, 1]} : vector<16x32xf32> to vector<16x16xf32>
    %264 = tpu.concatenate %262, %263 in 0 : vector<16x16xf32>, vector<16x16xf32> -> vector<32x16xf32>
    %265 = vector.extract_strided_slice %260 {offsets = [0, 0], sizes = [16, 16], strides = [1, 1]} : vector<16x32xf32> to vector<16x16xf32>
    %266 = vector.extract_strided_slice %260 {offsets = [0, 16], sizes = [16, 16], strides = [1, 1]} : vector<16x32xf32> to vector<16x16xf32>
    %267 = tpu.concatenate %265, %266 in 0 : vector<16x16xf32>, vector<16x16xf32> -> vector<32x16xf32>
    %268 = vector.extract_strided_slice %261 {offsets = [0, 0], sizes = [16, 16], strides = [1, 1]} : vector<16x32xf32> to vector<16x16xf32>
    %269 = vector.extract_strided_slice %261 {offsets = [0, 16], sizes = [16, 16], strides = [1, 1]} : vector<16x32xf32> to vector<16x16xf32>
    %270 = tpu.concatenate %268, %269 in 0 : vector<16x16xf32>, vector<16x16xf32> -> vector<32x16xf32>
    %271 = arith.truncf %264 : vector<32x16xf32> to vector<32x16xbf16>
    %272 = arith.truncf %267 : vector<32x16xf32> to vector<32x16xbf16>
    %cst_97 = arith.constant dense<0.000000e+00> : vector<32x32xf32>
    %273 = tpu.matmul %271, %272, %cst_97 {dimension_numbers = #tpu.dot_dimension_numbers<[1], [1], [0], [0], [0, 0, 1, 0], [], []>} : vector<32x16xbf16>, vector<32x16xbf16>, vector<32x32xf32> -> vector<32x32xf32>
    %274 = arith.addf %273, %1 : vector<32x32xf32>
    %cst_98 = arith.constant dense<0xFF800000> : vector<32xf32>
    %275 = vector.multi_reduction <maximumf>, %274, %cst_98 [1] : vector<32x32xf32> to vector<32xf32>
    %276 = vector.shape_cast %275 : vector<32xf32> to vector<32x1xf32>
    %277 = vector.broadcast %276 : vector<32x1xf32> to vector<32x32xf32>
    %278 = arith.subf %274, %277 : vector<32x32xf32>
    %279 = math.exp %278 : vector<32x32xf32>
    %cst_99 = arith.constant dense<0.000000e+00> : vector<32xf32>
    %280 = vector.multi_reduction <add>, %279, %cst_99 [1] : vector<32x32xf32> to vector<32xf32>
    %281 = vector.shape_cast %280 : vector<32xf32> to vector<32x1xf32>
    %282 = tpu.reciprocal %281 {approx = true} : vector<32x1xf32> -> vector<32x1xf32>
    %283 = vector.broadcast %282 : vector<32x1xf32> to vector<32x32xf32>
    %284 = arith.mulf %279, %283 : vector<32x32xf32>
    %285 = arith.truncf %284 : vector<32x32xf32> to vector<32x32xbf16>
    %286 = arith.truncf %270 : vector<32x16xf32> to vector<32x16xbf16>
    %cst_100 = arith.constant dense<0.000000e+00> : vector<32x16xf32>
    %287 = tpu.matmul %285, %286, %cst_100 {dimension_numbers = #tpu.dot_dimension_numbers<[1], [0], [0], [1], [0, 0, 1, 1], [], []>} : vector<32x32xbf16>, vector<32x16xbf16>, vector<32x16xf32> -> vector<32x16xf32>
    %288 = vector.extract_strided_slice %287 {offsets = [0, 0], sizes = [16, 16], strides = [1, 1]} : vector<32x16xf32> to vector<16x16xf32>
    %289 = vector.extract_strided_slice %287 {offsets = [16, 0], sizes = [16, 16], strides = [1, 1]} : vector<32x16xf32> to vector<16x16xf32>
    %290 = tpu.concatenate %288, %289 in 1 : vector<16x16xf32>, vector<16x16xf32> -> vector<16x32xf32>
    %c9_101 = arith.constant 9 : index
    %c0_102 = arith.constant 0 : index
    %c0_103 = arith.constant 0 : index
    %291 = vector.load %arg4[%c9_101, %c0_102, %c0_103] : memref<21x64x128xbf16, #tpu.memory_space<vmem>>, vector<1x32x32xbf16>
    %292 = vector.shape_cast %291 : vector<1x32x32xbf16> to vector<32x32xbf16>
    %293 = arith.truncf %290 : vector<16x32xf32> to vector<16x32xbf16>
    %cst_104 = arith.constant dense<0.000000e+00> : vector<16x32xf32>
    %294 = tpu.matmul %293, %292, %cst_104 {dimension_numbers = #tpu.dot_dimension_numbers<[1], [0], [0], [1], [0, 0, 1, 1], [], []>} : vector<16x32xbf16>, vector<32x32xbf16>, vector<16x32xf32> -> vector<16x32xf32>
    %c19 = arith.constant 19 : index
    %c0_105 = arith.constant 0 : index
    %295 = vector.load %arg5[%c19, %c0_105] : memref<45x128xf32, #tpu.memory_space<vmem>>, vector<1x32xf32>
    %296 = vector.broadcast %295 : vector<1x32xf32> to vector<16x32xf32>
    %297 = arith.addf %294, %296 : vector<16x32xf32>
    %298 = arith.addf %251, %297 : vector<16x32xf32>
    %c20 = arith.constant 20 : index
    %c0_106 = arith.constant 0 : index
    %299 = vector.load %arg5[%c20, %c0_106] : memref<45x128xf32, #tpu.memory_space<vmem>>, vector<1x32xf32>
    %c21 = arith.constant 21 : index
    %c0_107 = arith.constant 0 : index
    %300 = vector.load %arg5[%c21, %c0_107] : memref<45x128xf32, #tpu.memory_space<vmem>>, vector<1x32xf32>
    %cst_108 = arith.constant dense<0.000000e+00> : vector<16xf32>
    %301 = vector.multi_reduction <add>, %298, %cst_108 [1] : vector<16x32xf32> to vector<16xf32>
    %302 = vector.shape_cast %301 : vector<16xf32> to vector<16x1xf32>
    %cst_109 = arith.constant 3.125000e-02 : f32
    %303 = vector.broadcast %cst_109 : f32 to vector<16x1xf32>
    %304 = arith.mulf %302, %303 : vector<16x1xf32>
    %305 = arith.mulf %298, %298 : vector<16x32xf32>
    %cst_110 = arith.constant dense<0.000000e+00> : vector<16xf32>
    %306 = vector.multi_reduction <add>, %305, %cst_110 [1] : vector<16x32xf32> to vector<16xf32>
    %307 = vector.shape_cast %306 : vector<16xf32> to vector<16x1xf32>
    %cst_111 = arith.constant 3.125000e-02 : f32
    %308 = vector.broadcast %cst_111 : f32 to vector<16x1xf32>
    %309 = arith.mulf %307, %308 : vector<16x1xf32>
    %310 = arith.mulf %304, %304 : vector<16x1xf32>
    %311 = arith.subf %309, %310 : vector<16x1xf32>
    %312 = vector.broadcast %304 : vector<16x1xf32> to vector<16x32xf32>
    %313 = arith.subf %298, %312 : vector<16x32xf32>
    %cst_112 = arith.constant 9.99999974E-6 : f32
    %314 = vector.broadcast %cst_112 : f32 to vector<16x1xf32>
    %315 = arith.addf %311, %314 : vector<16x1xf32>
    %316 = math.rsqrt %315 : vector<16x1xf32>
    %317 = vector.broadcast %316 : vector<16x1xf32> to vector<16x32xf32>
    %318 = arith.mulf %313, %317 : vector<16x32xf32>
    %319 = vector.broadcast %299 : vector<1x32xf32> to vector<16x32xf32>
    %320 = arith.mulf %318, %319 : vector<16x32xf32>
    %321 = vector.broadcast %300 : vector<1x32xf32> to vector<16x32xf32>
    %322 = arith.addf %320, %321 : vector<16x32xf32>
    %c10_113 = arith.constant 10 : index
    %c0_114 = arith.constant 0 : index
    %c0_115 = arith.constant 0 : index
    %323 = vector.load %arg4[%c10_113, %c0_114, %c0_115] : memref<21x64x128xbf16, #tpu.memory_space<vmem>>, vector<1x32x96xbf16>
    %324 = vector.shape_cast %323 : vector<1x32x96xbf16> to vector<32x96xbf16>
    %c22 = arith.constant 22 : index
    %c0_116 = arith.constant 0 : index
    %325 = vector.load %arg5[%c22, %c0_116] : memref<45x128xf32, #tpu.memory_space<vmem>>, vector<1x96xf32>
    %326 = vector.extract_strided_slice %324 {offsets = [0, 0], sizes = [32, 32], strides = [1, 1]} : vector<32x96xbf16> to vector<32x32xbf16>
    %327 = arith.truncf %322 : vector<16x32xf32> to vector<16x32xbf16>
    %cst_117 = arith.constant dense<0.000000e+00> : vector<16x32xf32>
    %328 = tpu.matmul %327, %326, %cst_117 {dimension_numbers = #tpu.dot_dimension_numbers<[1], [0], [0], [1], [0, 0, 1, 1], [], []>} : vector<16x32xbf16>, vector<32x32xbf16>, vector<16x32xf32> -> vector<16x32xf32>
    %329 = vector.extract_strided_slice %325 {offsets = [0, 0], sizes = [1, 32], strides = [1, 1]} : vector<1x96xf32> to vector<1x32xf32>
    %330 = vector.broadcast %329 : vector<1x32xf32> to vector<16x32xf32>
    %331 = arith.addf %328, %330 : vector<16x32xf32>
    %332 = vector.extract_strided_slice %324 {offsets = [0, 32], sizes = [32, 64], strides = [1, 1]} : vector<32x96xbf16> to vector<32x64xbf16>
    %333 = arith.truncf %250 : vector<16x32xf32> to vector<16x32xbf16>
    %cst_118 = arith.constant dense<0.000000e+00> : vector<16x64xf32>
    %334 = tpu.matmul %333, %332, %cst_118 {dimension_numbers = #tpu.dot_dimension_numbers<[1], [0], [0], [1], [0, 0, 1, 1], [], []>} : vector<16x32xbf16>, vector<32x64xbf16>, vector<16x64xf32> -> vector<16x64xf32>
    %335 = vector.extract_strided_slice %325 {offsets = [0, 32], sizes = [1, 64], strides = [1, 1]} : vector<1x96xf32> to vector<1x64xf32>
    %336 = vector.broadcast %335 : vector<1x64xf32> to vector<16x64xf32>
    %337 = arith.addf %334, %336 : vector<16x64xf32>
    %338 = vector.extract_strided_slice %337 {offsets = [0, 0], sizes = [16, 32], strides = [1, 1]} : vector<16x64xf32> to vector<16x32xf32>
    %339 = vector.extract_strided_slice %337 {offsets = [0, 32], sizes = [16, 32], strides = [1, 1]} : vector<16x64xf32> to vector<16x32xf32>
    %340 = vector.extract_strided_slice %331 {offsets = [0, 0], sizes = [16, 16], strides = [1, 1]} : vector<16x32xf32> to vector<16x16xf32>
    %341 = vector.extract_strided_slice %331 {offsets = [0, 16], sizes = [16, 16], strides = [1, 1]} : vector<16x32xf32> to vector<16x16xf32>
    %342 = tpu.concatenate %340, %341 in 0 : vector<16x16xf32>, vector<16x16xf32> -> vector<32x16xf32>
    %343 = vector.extract_strided_slice %338 {offsets = [0, 0], sizes = [16, 16], strides = [1, 1]} : vector<16x32xf32> to vector<16x16xf32>
    %344 = vector.extract_strided_slice %338 {offsets = [0, 16], sizes = [16, 16], strides = [1, 1]} : vector<16x32xf32> to vector<16x16xf32>
    %345 = tpu.concatenate %343, %344 in 0 : vector<16x16xf32>, vector<16x16xf32> -> vector<32x16xf32>
    %346 = vector.extract_strided_slice %339 {offsets = [0, 0], sizes = [16, 16], strides = [1, 1]} : vector<16x32xf32> to vector<16x16xf32>
    %347 = vector.extract_strided_slice %339 {offsets = [0, 16], sizes = [16, 16], strides = [1, 1]} : vector<16x32xf32> to vector<16x16xf32>
    %348 = tpu.concatenate %346, %347 in 0 : vector<16x16xf32>, vector<16x16xf32> -> vector<32x16xf32>
    %349 = arith.truncf %342 : vector<32x16xf32> to vector<32x16xbf16>
    %350 = arith.truncf %345 : vector<32x16xf32> to vector<32x16xbf16>
    %cst_119 = arith.constant dense<0.000000e+00> : vector<32x32xf32>
    %351 = tpu.matmul %349, %350, %cst_119 {dimension_numbers = #tpu.dot_dimension_numbers<[1], [1], [0], [0], [0, 0, 1, 0], [], []>} : vector<32x16xbf16>, vector<32x16xbf16>, vector<32x32xf32> -> vector<32x32xf32>
    %352 = arith.addf %351, %0 : vector<32x32xf32>
    %cst_120 = arith.constant dense<0xFF800000> : vector<32xf32>
    %353 = vector.multi_reduction <maximumf>, %352, %cst_120 [1] : vector<32x32xf32> to vector<32xf32>
    %354 = vector.shape_cast %353 : vector<32xf32> to vector<32x1xf32>
    %355 = vector.broadcast %354 : vector<32x1xf32> to vector<32x32xf32>
    %356 = arith.subf %352, %355 : vector<32x32xf32>
    %357 = math.exp %356 : vector<32x32xf32>
    %cst_121 = arith.constant dense<0.000000e+00> : vector<32xf32>
    %358 = vector.multi_reduction <add>, %357, %cst_121 [1] : vector<32x32xf32> to vector<32xf32>
    %359 = vector.shape_cast %358 : vector<32xf32> to vector<32x1xf32>
    %360 = tpu.reciprocal %359 {approx = true} : vector<32x1xf32> -> vector<32x1xf32>
    %361 = vector.broadcast %360 : vector<32x1xf32> to vector<32x32xf32>
    %362 = arith.mulf %357, %361 : vector<32x32xf32>
    %363 = arith.truncf %362 : vector<32x32xf32> to vector<32x32xbf16>
    %364 = arith.truncf %348 : vector<32x16xf32> to vector<32x16xbf16>
    %cst_122 = arith.constant dense<0.000000e+00> : vector<32x16xf32>
    %365 = tpu.matmul %363, %364, %cst_122 {dimension_numbers = #tpu.dot_dimension_numbers<[1], [0], [0], [1], [0, 0, 1, 1], [], []>} : vector<32x32xbf16>, vector<32x16xbf16>, vector<32x16xf32> -> vector<32x16xf32>
    %366 = vector.extract_strided_slice %365 {offsets = [0, 0], sizes = [16, 16], strides = [1, 1]} : vector<32x16xf32> to vector<16x16xf32>
    %367 = vector.extract_strided_slice %365 {offsets = [16, 0], sizes = [16, 16], strides = [1, 1]} : vector<32x16xf32> to vector<16x16xf32>
    %368 = tpu.concatenate %366, %367 in 1 : vector<16x16xf32>, vector<16x16xf32> -> vector<16x32xf32>
    %c11_123 = arith.constant 11 : index
    %c0_124 = arith.constant 0 : index
    %c0_125 = arith.constant 0 : index
    %369 = vector.load %arg4[%c11_123, %c0_124, %c0_125] : memref<21x64x128xbf16, #tpu.memory_space<vmem>>, vector<1x32x32xbf16>
    %370 = vector.shape_cast %369 : vector<1x32x32xbf16> to vector<32x32xbf16>
    %371 = arith.truncf %368 : vector<16x32xf32> to vector<16x32xbf16>
    %cst_126 = arith.constant dense<0.000000e+00> : vector<16x32xf32>
    %372 = tpu.matmul %371, %370, %cst_126 {dimension_numbers = #tpu.dot_dimension_numbers<[1], [0], [0], [1], [0, 0, 1, 1], [], []>} : vector<16x32xbf16>, vector<32x32xbf16>, vector<16x32xf32> -> vector<16x32xf32>
    %c23 = arith.constant 23 : index
    %c0_127 = arith.constant 0 : index
    %373 = vector.load %arg5[%c23, %c0_127] : memref<45x128xf32, #tpu.memory_space<vmem>>, vector<1x32xf32>
    %374 = vector.broadcast %373 : vector<1x32xf32> to vector<16x32xf32>
    %375 = arith.addf %372, %374 : vector<16x32xf32>
    %376 = arith.addf %322, %375 : vector<16x32xf32>
    %c24 = arith.constant 24 : index
    %c0_128 = arith.constant 0 : index
    %377 = vector.load %arg5[%c24, %c0_128] : memref<45x128xf32, #tpu.memory_space<vmem>>, vector<1x32xf32>
    %c25 = arith.constant 25 : index
    %c0_129 = arith.constant 0 : index
    %378 = vector.load %arg5[%c25, %c0_129] : memref<45x128xf32, #tpu.memory_space<vmem>>, vector<1x32xf32>
    %cst_130 = arith.constant dense<0.000000e+00> : vector<16xf32>
    %379 = vector.multi_reduction <add>, %376, %cst_130 [1] : vector<16x32xf32> to vector<16xf32>
    %380 = vector.shape_cast %379 : vector<16xf32> to vector<16x1xf32>
    %cst_131 = arith.constant 3.125000e-02 : f32
    %381 = vector.broadcast %cst_131 : f32 to vector<16x1xf32>
    %382 = arith.mulf %380, %381 : vector<16x1xf32>
    %383 = arith.mulf %376, %376 : vector<16x32xf32>
    %cst_132 = arith.constant dense<0.000000e+00> : vector<16xf32>
    %384 = vector.multi_reduction <add>, %383, %cst_132 [1] : vector<16x32xf32> to vector<16xf32>
    %385 = vector.shape_cast %384 : vector<16xf32> to vector<16x1xf32>
    %cst_133 = arith.constant 3.125000e-02 : f32
    %386 = vector.broadcast %cst_133 : f32 to vector<16x1xf32>
    %387 = arith.mulf %385, %386 : vector<16x1xf32>
    %388 = arith.mulf %382, %382 : vector<16x1xf32>
    %389 = arith.subf %387, %388 : vector<16x1xf32>
    %390 = vector.broadcast %382 : vector<16x1xf32> to vector<16x32xf32>
    %391 = arith.subf %376, %390 : vector<16x32xf32>
    %cst_134 = arith.constant 9.99999974E-6 : f32
    %392 = vector.broadcast %cst_134 : f32 to vector<16x1xf32>
    %393 = arith.addf %389, %392 : vector<16x1xf32>
    %394 = math.rsqrt %393 : vector<16x1xf32>
    %395 = vector.broadcast %394 : vector<16x1xf32> to vector<16x32xf32>
    %396 = arith.mulf %391, %395 : vector<16x32xf32>
    %397 = vector.broadcast %377 : vector<1x32xf32> to vector<16x32xf32>
    %398 = arith.mulf %396, %397 : vector<16x32xf32>
    %399 = vector.broadcast %378 : vector<1x32xf32> to vector<16x32xf32>
    %400 = arith.addf %398, %399 : vector<16x32xf32>
    %c12_135 = arith.constant 12 : index
    %c0_136 = arith.constant 0 : index
    %c0_137 = arith.constant 0 : index
    %401 = vector.load %arg4[%c12_135, %c0_136, %c0_137] : memref<21x64x128xbf16, #tpu.memory_space<vmem>>, vector<1x32x64xbf16>
    %402 = vector.shape_cast %401 : vector<1x32x64xbf16> to vector<32x64xbf16>
    %403 = arith.truncf %400 : vector<16x32xf32> to vector<16x32xbf16>
    %cst_138 = arith.constant dense<0.000000e+00> : vector<16x64xf32>
    %404 = tpu.matmul %403, %402, %cst_138 {dimension_numbers = #tpu.dot_dimension_numbers<[1], [0], [0], [1], [0, 0, 1, 1], [], []>} : vector<16x32xbf16>, vector<32x64xbf16>, vector<16x64xf32> -> vector<16x64xf32>
    %c26 = arith.constant 26 : index
    %c0_139 = arith.constant 0 : index
    %405 = vector.load %arg5[%c26, %c0_139] : memref<45x128xf32, #tpu.memory_space<vmem>>, vector<1x64xf32>
    %406 = vector.broadcast %405 : vector<1x64xf32> to vector<16x64xf32>
    %407 = arith.addf %404, %406 : vector<16x64xf32>
    %cst_140 = arith.constant 0.000000e+00 : f32
    %408 = vector.broadcast %cst_140 : f32 to vector<16x64xf32>
    %409 = arith.maximumf %407, %408 : vector<16x64xf32>
    %c13_141 = arith.constant 13 : index
    %c0_142 = arith.constant 0 : index
    %c0_143 = arith.constant 0 : index
    %410 = vector.load %arg4[%c13_141, %c0_142, %c0_143] : memref<21x64x128xbf16, #tpu.memory_space<vmem>>, vector<1x64x32xbf16>
    %411 = vector.shape_cast %410 : vector<1x64x32xbf16> to vector<64x32xbf16>
    %412 = arith.truncf %409 : vector<16x64xf32> to vector<16x64xbf16>
    %cst_144 = arith.constant dense<0.000000e+00> : vector<16x32xf32>
    %413 = tpu.matmul %412, %411, %cst_144 {dimension_numbers = #tpu.dot_dimension_numbers<[1], [0], [0], [1], [0, 0, 1, 1], [], []>} : vector<16x64xbf16>, vector<64x32xbf16>, vector<16x32xf32> -> vector<16x32xf32>
    %c27 = arith.constant 27 : index
    %c0_145 = arith.constant 0 : index
    %414 = vector.load %arg5[%c27, %c0_145] : memref<45x128xf32, #tpu.memory_space<vmem>>, vector<1x32xf32>
    %415 = vector.broadcast %414 : vector<1x32xf32> to vector<16x32xf32>
    %416 = arith.addf %413, %415 : vector<16x32xf32>
    %417 = arith.addf %400, %416 : vector<16x32xf32>
    %c28 = arith.constant 28 : index
    %c0_146 = arith.constant 0 : index
    %418 = vector.load %arg5[%c28, %c0_146] : memref<45x128xf32, #tpu.memory_space<vmem>>, vector<1x32xf32>
    %c29 = arith.constant 29 : index
    %c0_147 = arith.constant 0 : index
    %419 = vector.load %arg5[%c29, %c0_147] : memref<45x128xf32, #tpu.memory_space<vmem>>, vector<1x32xf32>
    %cst_148 = arith.constant dense<0.000000e+00> : vector<16xf32>
    %420 = vector.multi_reduction <add>, %417, %cst_148 [1] : vector<16x32xf32> to vector<16xf32>
    %421 = vector.shape_cast %420 : vector<16xf32> to vector<16x1xf32>
    %cst_149 = arith.constant 3.125000e-02 : f32
    %422 = vector.broadcast %cst_149 : f32 to vector<16x1xf32>
    %423 = arith.mulf %421, %422 : vector<16x1xf32>
    %424 = arith.mulf %417, %417 : vector<16x32xf32>
    %cst_150 = arith.constant dense<0.000000e+00> : vector<16xf32>
    %425 = vector.multi_reduction <add>, %424, %cst_150 [1] : vector<16x32xf32> to vector<16xf32>
    %426 = vector.shape_cast %425 : vector<16xf32> to vector<16x1xf32>
    %cst_151 = arith.constant 3.125000e-02 : f32
    %427 = vector.broadcast %cst_151 : f32 to vector<16x1xf32>
    %428 = arith.mulf %426, %427 : vector<16x1xf32>
    %429 = arith.mulf %423, %423 : vector<16x1xf32>
    %430 = arith.subf %428, %429 : vector<16x1xf32>
    %431 = vector.broadcast %423 : vector<16x1xf32> to vector<16x32xf32>
    %432 = arith.subf %417, %431 : vector<16x32xf32>
    %cst_152 = arith.constant 9.99999974E-6 : f32
    %433 = vector.broadcast %cst_152 : f32 to vector<16x1xf32>
    %434 = arith.addf %430, %433 : vector<16x1xf32>
    %435 = math.rsqrt %434 : vector<16x1xf32>
    %436 = vector.broadcast %435 : vector<16x1xf32> to vector<16x32xf32>
    %437 = arith.mulf %432, %436 : vector<16x32xf32>
    %438 = vector.broadcast %418 : vector<1x32xf32> to vector<16x32xf32>
    %439 = arith.mulf %437, %438 : vector<16x32xf32>
    %440 = vector.broadcast %419 : vector<1x32xf32> to vector<16x32xf32>
    %441 = arith.addf %439, %440 : vector<16x32xf32>
    %c14_153 = arith.constant 14 : index
    %c0_154 = arith.constant 0 : index
    %c0_155 = arith.constant 0 : index
    %442 = vector.load %arg4[%c14_153, %c0_154, %c0_155] : memref<21x64x128xbf16, #tpu.memory_space<vmem>>, vector<1x32x96xbf16>
    %443 = vector.shape_cast %442 : vector<1x32x96xbf16> to vector<32x96xbf16>
    %c30 = arith.constant 30 : index
    %c0_156 = arith.constant 0 : index
    %444 = vector.load %arg5[%c30, %c0_156] : memref<45x128xf32, #tpu.memory_space<vmem>>, vector<1x96xf32>
    %445 = arith.truncf %441 : vector<16x32xf32> to vector<16x32xbf16>
    %cst_157 = arith.constant dense<0.000000e+00> : vector<16x96xf32>
    %446 = tpu.matmul %445, %443, %cst_157 {dimension_numbers = #tpu.dot_dimension_numbers<[1], [0], [0], [1], [0, 0, 1, 1], [], []>} : vector<16x32xbf16>, vector<32x96xbf16>, vector<16x96xf32> -> vector<16x96xf32>
    %447 = vector.broadcast %444 : vector<1x96xf32> to vector<16x96xf32>
    %448 = arith.addf %446, %447 : vector<16x96xf32>
    %449 = vector.extract_strided_slice %448 {offsets = [0, 0], sizes = [16, 32], strides = [1, 1]} : vector<16x96xf32> to vector<16x32xf32>
    %450 = vector.extract_strided_slice %448 {offsets = [0, 32], sizes = [16, 32], strides = [1, 1]} : vector<16x96xf32> to vector<16x32xf32>
    %451 = vector.extract_strided_slice %448 {offsets = [0, 64], sizes = [16, 32], strides = [1, 1]} : vector<16x96xf32> to vector<16x32xf32>
    %452 = vector.extract_strided_slice %449 {offsets = [0, 0], sizes = [16, 16], strides = [1, 1]} : vector<16x32xf32> to vector<16x16xf32>
    %453 = vector.extract_strided_slice %449 {offsets = [0, 16], sizes = [16, 16], strides = [1, 1]} : vector<16x32xf32> to vector<16x16xf32>
    %454 = tpu.concatenate %452, %453 in 0 : vector<16x16xf32>, vector<16x16xf32> -> vector<32x16xf32>
    %455 = vector.extract_strided_slice %450 {offsets = [0, 0], sizes = [16, 16], strides = [1, 1]} : vector<16x32xf32> to vector<16x16xf32>
    %456 = vector.extract_strided_slice %450 {offsets = [0, 16], sizes = [16, 16], strides = [1, 1]} : vector<16x32xf32> to vector<16x16xf32>
    %457 = tpu.concatenate %455, %456 in 0 : vector<16x16xf32>, vector<16x16xf32> -> vector<32x16xf32>
    %458 = vector.extract_strided_slice %451 {offsets = [0, 0], sizes = [16, 16], strides = [1, 1]} : vector<16x32xf32> to vector<16x16xf32>
    %459 = vector.extract_strided_slice %451 {offsets = [0, 16], sizes = [16, 16], strides = [1, 1]} : vector<16x32xf32> to vector<16x16xf32>
    %460 = tpu.concatenate %458, %459 in 0 : vector<16x16xf32>, vector<16x16xf32> -> vector<32x16xf32>
    %461 = arith.truncf %454 : vector<32x16xf32> to vector<32x16xbf16>
    %462 = arith.truncf %457 : vector<32x16xf32> to vector<32x16xbf16>
    %cst_158 = arith.constant dense<0.000000e+00> : vector<32x32xf32>
    %463 = tpu.matmul %461, %462, %cst_158 {dimension_numbers = #tpu.dot_dimension_numbers<[1], [1], [0], [0], [0, 0, 1, 0], [], []>} : vector<32x16xbf16>, vector<32x16xbf16>, vector<32x32xf32> -> vector<32x32xf32>
    %464 = arith.addf %463, %1 : vector<32x32xf32>
    %cst_159 = arith.constant dense<0xFF800000> : vector<32xf32>
    %465 = vector.multi_reduction <maximumf>, %464, %cst_159 [1] : vector<32x32xf32> to vector<32xf32>
    %466 = vector.shape_cast %465 : vector<32xf32> to vector<32x1xf32>
    %467 = vector.broadcast %466 : vector<32x1xf32> to vector<32x32xf32>
    %468 = arith.subf %464, %467 : vector<32x32xf32>
    %469 = math.exp %468 : vector<32x32xf32>
    %cst_160 = arith.constant dense<0.000000e+00> : vector<32xf32>
    %470 = vector.multi_reduction <add>, %469, %cst_160 [1] : vector<32x32xf32> to vector<32xf32>
    %471 = vector.shape_cast %470 : vector<32xf32> to vector<32x1xf32>
    %472 = tpu.reciprocal %471 {approx = true} : vector<32x1xf32> -> vector<32x1xf32>
    %473 = vector.broadcast %472 : vector<32x1xf32> to vector<32x32xf32>
    %474 = arith.mulf %469, %473 : vector<32x32xf32>
    %475 = arith.truncf %474 : vector<32x32xf32> to vector<32x32xbf16>
    %476 = arith.truncf %460 : vector<32x16xf32> to vector<32x16xbf16>
    %cst_161 = arith.constant dense<0.000000e+00> : vector<32x16xf32>
    %477 = tpu.matmul %475, %476, %cst_161 {dimension_numbers = #tpu.dot_dimension_numbers<[1], [0], [0], [1], [0, 0, 1, 1], [], []>} : vector<32x32xbf16>, vector<32x16xbf16>, vector<32x16xf32> -> vector<32x16xf32>
    %478 = vector.extract_strided_slice %477 {offsets = [0, 0], sizes = [16, 16], strides = [1, 1]} : vector<32x16xf32> to vector<16x16xf32>
    %479 = vector.extract_strided_slice %477 {offsets = [16, 0], sizes = [16, 16], strides = [1, 1]} : vector<32x16xf32> to vector<16x16xf32>
    %480 = tpu.concatenate %478, %479 in 1 : vector<16x16xf32>, vector<16x16xf32> -> vector<16x32xf32>
    %c15_162 = arith.constant 15 : index
    %c0_163 = arith.constant 0 : index
    %c0_164 = arith.constant 0 : index
    %481 = vector.load %arg4[%c15_162, %c0_163, %c0_164] : memref<21x64x128xbf16, #tpu.memory_space<vmem>>, vector<1x32x32xbf16>
    %482 = vector.shape_cast %481 : vector<1x32x32xbf16> to vector<32x32xbf16>
    %483 = arith.truncf %480 : vector<16x32xf32> to vector<16x32xbf16>
    %cst_165 = arith.constant dense<0.000000e+00> : vector<16x32xf32>
    %484 = tpu.matmul %483, %482, %cst_165 {dimension_numbers = #tpu.dot_dimension_numbers<[1], [0], [0], [1], [0, 0, 1, 1], [], []>} : vector<16x32xbf16>, vector<32x32xbf16>, vector<16x32xf32> -> vector<16x32xf32>
    %c31 = arith.constant 31 : index
    %c0_166 = arith.constant 0 : index
    %485 = vector.load %arg5[%c31, %c0_166] : memref<45x128xf32, #tpu.memory_space<vmem>>, vector<1x32xf32>
    %486 = vector.broadcast %485 : vector<1x32xf32> to vector<16x32xf32>
    %487 = arith.addf %484, %486 : vector<16x32xf32>
    %488 = arith.addf %441, %487 : vector<16x32xf32>
    %c32 = arith.constant 32 : index
    %c0_167 = arith.constant 0 : index
    %489 = vector.load %arg5[%c32, %c0_167] : memref<45x128xf32, #tpu.memory_space<vmem>>, vector<1x32xf32>
    %c33 = arith.constant 33 : index
    %c0_168 = arith.constant 0 : index
    %490 = vector.load %arg5[%c33, %c0_168] : memref<45x128xf32, #tpu.memory_space<vmem>>, vector<1x32xf32>
    %cst_169 = arith.constant dense<0.000000e+00> : vector<16xf32>
    %491 = vector.multi_reduction <add>, %488, %cst_169 [1] : vector<16x32xf32> to vector<16xf32>
    %492 = vector.shape_cast %491 : vector<16xf32> to vector<16x1xf32>
    %cst_170 = arith.constant 3.125000e-02 : f32
    %493 = vector.broadcast %cst_170 : f32 to vector<16x1xf32>
    %494 = arith.mulf %492, %493 : vector<16x1xf32>
    %495 = arith.mulf %488, %488 : vector<16x32xf32>
    %cst_171 = arith.constant dense<0.000000e+00> : vector<16xf32>
    %496 = vector.multi_reduction <add>, %495, %cst_171 [1] : vector<16x32xf32> to vector<16xf32>
    %497 = vector.shape_cast %496 : vector<16xf32> to vector<16x1xf32>
    %cst_172 = arith.constant 3.125000e-02 : f32
    %498 = vector.broadcast %cst_172 : f32 to vector<16x1xf32>
    %499 = arith.mulf %497, %498 : vector<16x1xf32>
    %500 = arith.mulf %494, %494 : vector<16x1xf32>
    %501 = arith.subf %499, %500 : vector<16x1xf32>
    %502 = vector.broadcast %494 : vector<16x1xf32> to vector<16x32xf32>
    %503 = arith.subf %488, %502 : vector<16x32xf32>
    %cst_173 = arith.constant 9.99999974E-6 : f32
    %504 = vector.broadcast %cst_173 : f32 to vector<16x1xf32>
    %505 = arith.addf %501, %504 : vector<16x1xf32>
    %506 = math.rsqrt %505 : vector<16x1xf32>
    %507 = vector.broadcast %506 : vector<16x1xf32> to vector<16x32xf32>
    %508 = arith.mulf %503, %507 : vector<16x32xf32>
    %509 = vector.broadcast %489 : vector<1x32xf32> to vector<16x32xf32>
    %510 = arith.mulf %508, %509 : vector<16x32xf32>
    %511 = vector.broadcast %490 : vector<1x32xf32> to vector<16x32xf32>
    %512 = arith.addf %510, %511 : vector<16x32xf32>
    %c16_174 = arith.constant 16 : index
    %c0_175 = arith.constant 0 : index
    %c0_176 = arith.constant 0 : index
    %513 = vector.load %arg4[%c16_174, %c0_175, %c0_176] : memref<21x64x128xbf16, #tpu.memory_space<vmem>>, vector<1x32x96xbf16>
    %514 = vector.shape_cast %513 : vector<1x32x96xbf16> to vector<32x96xbf16>
    %c34 = arith.constant 34 : index
    %c0_177 = arith.constant 0 : index
    %515 = vector.load %arg5[%c34, %c0_177] : memref<45x128xf32, #tpu.memory_space<vmem>>, vector<1x96xf32>
    %516 = vector.extract_strided_slice %514 {offsets = [0, 0], sizes = [32, 32], strides = [1, 1]} : vector<32x96xbf16> to vector<32x32xbf16>
    %517 = arith.truncf %512 : vector<16x32xf32> to vector<16x32xbf16>
    %cst_178 = arith.constant dense<0.000000e+00> : vector<16x32xf32>
    %518 = tpu.matmul %517, %516, %cst_178 {dimension_numbers = #tpu.dot_dimension_numbers<[1], [0], [0], [1], [0, 0, 1, 1], [], []>} : vector<16x32xbf16>, vector<32x32xbf16>, vector<16x32xf32> -> vector<16x32xf32>
    %519 = vector.extract_strided_slice %515 {offsets = [0, 0], sizes = [1, 32], strides = [1, 1]} : vector<1x96xf32> to vector<1x32xf32>
    %520 = vector.broadcast %519 : vector<1x32xf32> to vector<16x32xf32>
    %521 = arith.addf %518, %520 : vector<16x32xf32>
    %522 = vector.extract_strided_slice %514 {offsets = [0, 32], sizes = [32, 64], strides = [1, 1]} : vector<32x96xbf16> to vector<32x64xbf16>
    %523 = arith.truncf %250 : vector<16x32xf32> to vector<16x32xbf16>
    %cst_179 = arith.constant dense<0.000000e+00> : vector<16x64xf32>
    %524 = tpu.matmul %523, %522, %cst_179 {dimension_numbers = #tpu.dot_dimension_numbers<[1], [0], [0], [1], [0, 0, 1, 1], [], []>} : vector<16x32xbf16>, vector<32x64xbf16>, vector<16x64xf32> -> vector<16x64xf32>
    %525 = vector.extract_strided_slice %515 {offsets = [0, 32], sizes = [1, 64], strides = [1, 1]} : vector<1x96xf32> to vector<1x64xf32>
    %526 = vector.broadcast %525 : vector<1x64xf32> to vector<16x64xf32>
    %527 = arith.addf %524, %526 : vector<16x64xf32>
    %528 = vector.extract_strided_slice %527 {offsets = [0, 0], sizes = [16, 32], strides = [1, 1]} : vector<16x64xf32> to vector<16x32xf32>
    %529 = vector.extract_strided_slice %527 {offsets = [0, 32], sizes = [16, 32], strides = [1, 1]} : vector<16x64xf32> to vector<16x32xf32>
    %530 = vector.extract_strided_slice %521 {offsets = [0, 0], sizes = [16, 16], strides = [1, 1]} : vector<16x32xf32> to vector<16x16xf32>
    %531 = vector.extract_strided_slice %521 {offsets = [0, 16], sizes = [16, 16], strides = [1, 1]} : vector<16x32xf32> to vector<16x16xf32>
    %532 = tpu.concatenate %530, %531 in 0 : vector<16x16xf32>, vector<16x16xf32> -> vector<32x16xf32>
    %533 = vector.extract_strided_slice %528 {offsets = [0, 0], sizes = [16, 16], strides = [1, 1]} : vector<16x32xf32> to vector<16x16xf32>
    %534 = vector.extract_strided_slice %528 {offsets = [0, 16], sizes = [16, 16], strides = [1, 1]} : vector<16x32xf32> to vector<16x16xf32>
    %535 = tpu.concatenate %533, %534 in 0 : vector<16x16xf32>, vector<16x16xf32> -> vector<32x16xf32>
    %536 = vector.extract_strided_slice %529 {offsets = [0, 0], sizes = [16, 16], strides = [1, 1]} : vector<16x32xf32> to vector<16x16xf32>
    %537 = vector.extract_strided_slice %529 {offsets = [0, 16], sizes = [16, 16], strides = [1, 1]} : vector<16x32xf32> to vector<16x16xf32>
    %538 = tpu.concatenate %536, %537 in 0 : vector<16x16xf32>, vector<16x16xf32> -> vector<32x16xf32>
    %539 = arith.truncf %532 : vector<32x16xf32> to vector<32x16xbf16>
    %540 = arith.truncf %535 : vector<32x16xf32> to vector<32x16xbf16>
    %cst_180 = arith.constant dense<0.000000e+00> : vector<32x32xf32>
    %541 = tpu.matmul %539, %540, %cst_180 {dimension_numbers = #tpu.dot_dimension_numbers<[1], [1], [0], [0], [0, 0, 1, 0], [], []>} : vector<32x16xbf16>, vector<32x16xbf16>, vector<32x32xf32> -> vector<32x32xf32>
    %542 = arith.addf %541, %0 : vector<32x32xf32>
    %cst_181 = arith.constant dense<0xFF800000> : vector<32xf32>
    %543 = vector.multi_reduction <maximumf>, %542, %cst_181 [1] : vector<32x32xf32> to vector<32xf32>
    %544 = vector.shape_cast %543 : vector<32xf32> to vector<32x1xf32>
    %545 = vector.broadcast %544 : vector<32x1xf32> to vector<32x32xf32>
    %546 = arith.subf %542, %545 : vector<32x32xf32>
    %547 = math.exp %546 : vector<32x32xf32>
    %cst_182 = arith.constant dense<0.000000e+00> : vector<32xf32>
    %548 = vector.multi_reduction <add>, %547, %cst_182 [1] : vector<32x32xf32> to vector<32xf32>
    %549 = vector.shape_cast %548 : vector<32xf32> to vector<32x1xf32>
    %550 = tpu.reciprocal %549 {approx = true} : vector<32x1xf32> -> vector<32x1xf32>
    %551 = vector.broadcast %550 : vector<32x1xf32> to vector<32x32xf32>
    %552 = arith.mulf %547, %551 : vector<32x32xf32>
    %553 = arith.truncf %552 : vector<32x32xf32> to vector<32x32xbf16>
    %554 = arith.truncf %538 : vector<32x16xf32> to vector<32x16xbf16>
    %cst_183 = arith.constant dense<0.000000e+00> : vector<32x16xf32>
    %555 = tpu.matmul %553, %554, %cst_183 {dimension_numbers = #tpu.dot_dimension_numbers<[1], [0], [0], [1], [0, 0, 1, 1], [], []>} : vector<32x32xbf16>, vector<32x16xbf16>, vector<32x16xf32> -> vector<32x16xf32>
    %556 = vector.extract_strided_slice %555 {offsets = [0, 0], sizes = [16, 16], strides = [1, 1]} : vector<32x16xf32> to vector<16x16xf32>
    %557 = vector.extract_strided_slice %555 {offsets = [16, 0], sizes = [16, 16], strides = [1, 1]} : vector<32x16xf32> to vector<16x16xf32>
    %558 = tpu.concatenate %556, %557 in 1 : vector<16x16xf32>, vector<16x16xf32> -> vector<16x32xf32>
    %c17_184 = arith.constant 17 : index
    %c0_185 = arith.constant 0 : index
    %c0_186 = arith.constant 0 : index
    %559 = vector.load %arg4[%c17_184, %c0_185, %c0_186] : memref<21x64x128xbf16, #tpu.memory_space<vmem>>, vector<1x32x32xbf16>
    %560 = vector.shape_cast %559 : vector<1x32x32xbf16> to vector<32x32xbf16>
    %561 = arith.truncf %558 : vector<16x32xf32> to vector<16x32xbf16>
    %cst_187 = arith.constant dense<0.000000e+00> : vector<16x32xf32>
    %562 = tpu.matmul %561, %560, %cst_187 {dimension_numbers = #tpu.dot_dimension_numbers<[1], [0], [0], [1], [0, 0, 1, 1], [], []>} : vector<16x32xbf16>, vector<32x32xbf16>, vector<16x32xf32> -> vector<16x32xf32>
    %c35 = arith.constant 35 : index
    %c0_188 = arith.constant 0 : index
    %563 = vector.load %arg5[%c35, %c0_188] : memref<45x128xf32, #tpu.memory_space<vmem>>, vector<1x32xf32>
    %564 = vector.broadcast %563 : vector<1x32xf32> to vector<16x32xf32>
    %565 = arith.addf %562, %564 : vector<16x32xf32>
    %566 = arith.addf %512, %565 : vector<16x32xf32>
    %c36 = arith.constant 36 : index
    %c0_189 = arith.constant 0 : index
    %567 = vector.load %arg5[%c36, %c0_189] : memref<45x128xf32, #tpu.memory_space<vmem>>, vector<1x32xf32>
    %c37 = arith.constant 37 : index
    %c0_190 = arith.constant 0 : index
    %568 = vector.load %arg5[%c37, %c0_190] : memref<45x128xf32, #tpu.memory_space<vmem>>, vector<1x32xf32>
    %cst_191 = arith.constant dense<0.000000e+00> : vector<16xf32>
    %569 = vector.multi_reduction <add>, %566, %cst_191 [1] : vector<16x32xf32> to vector<16xf32>
    %570 = vector.shape_cast %569 : vector<16xf32> to vector<16x1xf32>
    %cst_192 = arith.constant 3.125000e-02 : f32
    %571 = vector.broadcast %cst_192 : f32 to vector<16x1xf32>
    %572 = arith.mulf %570, %571 : vector<16x1xf32>
    %573 = arith.mulf %566, %566 : vector<16x32xf32>
    %cst_193 = arith.constant dense<0.000000e+00> : vector<16xf32>
    %574 = vector.multi_reduction <add>, %573, %cst_193 [1] : vector<16x32xf32> to vector<16xf32>
    %575 = vector.shape_cast %574 : vector<16xf32> to vector<16x1xf32>
    %cst_194 = arith.constant 3.125000e-02 : f32
    %576 = vector.broadcast %cst_194 : f32 to vector<16x1xf32>
    %577 = arith.mulf %575, %576 : vector<16x1xf32>
    %578 = arith.mulf %572, %572 : vector<16x1xf32>
    %579 = arith.subf %577, %578 : vector<16x1xf32>
    %580 = vector.broadcast %572 : vector<16x1xf32> to vector<16x32xf32>
    %581 = arith.subf %566, %580 : vector<16x32xf32>
    %cst_195 = arith.constant 9.99999974E-6 : f32
    %582 = vector.broadcast %cst_195 : f32 to vector<16x1xf32>
    %583 = arith.addf %579, %582 : vector<16x1xf32>
    %584 = math.rsqrt %583 : vector<16x1xf32>
    %585 = vector.broadcast %584 : vector<16x1xf32> to vector<16x32xf32>
    %586 = arith.mulf %581, %585 : vector<16x32xf32>
    %587 = vector.broadcast %567 : vector<1x32xf32> to vector<16x32xf32>
    %588 = arith.mulf %586, %587 : vector<16x32xf32>
    %589 = vector.broadcast %568 : vector<1x32xf32> to vector<16x32xf32>
    %590 = arith.addf %588, %589 : vector<16x32xf32>
    %c18_196 = arith.constant 18 : index
    %c0_197 = arith.constant 0 : index
    %c0_198 = arith.constant 0 : index
    %591 = vector.load %arg4[%c18_196, %c0_197, %c0_198] : memref<21x64x128xbf16, #tpu.memory_space<vmem>>, vector<1x32x64xbf16>
    %592 = vector.shape_cast %591 : vector<1x32x64xbf16> to vector<32x64xbf16>
    %593 = arith.truncf %590 : vector<16x32xf32> to vector<16x32xbf16>
    %cst_199 = arith.constant dense<0.000000e+00> : vector<16x64xf32>
    %594 = tpu.matmul %593, %592, %cst_199 {dimension_numbers = #tpu.dot_dimension_numbers<[1], [0], [0], [1], [0, 0, 1, 1], [], []>} : vector<16x32xbf16>, vector<32x64xbf16>, vector<16x64xf32> -> vector<16x64xf32>
    %c38 = arith.constant 38 : index
    %c0_200 = arith.constant 0 : index
    %595 = vector.load %arg5[%c38, %c0_200] : memref<45x128xf32, #tpu.memory_space<vmem>>, vector<1x64xf32>
    %596 = vector.broadcast %595 : vector<1x64xf32> to vector<16x64xf32>
    %597 = arith.addf %594, %596 : vector<16x64xf32>
    %cst_201 = arith.constant 0.000000e+00 : f32
    %598 = vector.broadcast %cst_201 : f32 to vector<16x64xf32>
    %599 = arith.maximumf %597, %598 : vector<16x64xf32>
    %c19_202 = arith.constant 19 : index
    %c0_203 = arith.constant 0 : index
    %c0_204 = arith.constant 0 : index
    %600 = vector.load %arg4[%c19_202, %c0_203, %c0_204] : memref<21x64x128xbf16, #tpu.memory_space<vmem>>, vector<1x64x32xbf16>
    %601 = vector.shape_cast %600 : vector<1x64x32xbf16> to vector<64x32xbf16>
    %602 = arith.truncf %599 : vector<16x64xf32> to vector<16x64xbf16>
    %cst_205 = arith.constant dense<0.000000e+00> : vector<16x32xf32>
    %603 = tpu.matmul %602, %601, %cst_205 {dimension_numbers = #tpu.dot_dimension_numbers<[1], [0], [0], [1], [0, 0, 1, 1], [], []>} : vector<16x64xbf16>, vector<64x32xbf16>, vector<16x32xf32> -> vector<16x32xf32>
    %c39 = arith.constant 39 : index
    %c0_206 = arith.constant 0 : index
    %604 = vector.load %arg5[%c39, %c0_206] : memref<45x128xf32, #tpu.memory_space<vmem>>, vector<1x32xf32>
    %605 = vector.broadcast %604 : vector<1x32xf32> to vector<16x32xf32>
    %606 = arith.addf %603, %605 : vector<16x32xf32>
    %607 = arith.addf %590, %606 : vector<16x32xf32>
    %c40 = arith.constant 40 : index
    %c0_207 = arith.constant 0 : index
    %608 = vector.load %arg5[%c40, %c0_207] : memref<45x128xf32, #tpu.memory_space<vmem>>, vector<1x32xf32>
    %c41 = arith.constant 41 : index
    %c0_208 = arith.constant 0 : index
    %609 = vector.load %arg5[%c41, %c0_208] : memref<45x128xf32, #tpu.memory_space<vmem>>, vector<1x32xf32>
    %cst_209 = arith.constant dense<0.000000e+00> : vector<16xf32>
    %610 = vector.multi_reduction <add>, %607, %cst_209 [1] : vector<16x32xf32> to vector<16xf32>
    %611 = vector.shape_cast %610 : vector<16xf32> to vector<16x1xf32>
    %cst_210 = arith.constant 3.125000e-02 : f32
    %612 = vector.broadcast %cst_210 : f32 to vector<16x1xf32>
    %613 = arith.mulf %611, %612 : vector<16x1xf32>
    %614 = arith.mulf %607, %607 : vector<16x32xf32>
    %cst_211 = arith.constant dense<0.000000e+00> : vector<16xf32>
    %615 = vector.multi_reduction <add>, %614, %cst_211 [1] : vector<16x32xf32> to vector<16xf32>
    %616 = vector.shape_cast %615 : vector<16xf32> to vector<16x1xf32>
    %cst_212 = arith.constant 3.125000e-02 : f32
    %617 = vector.broadcast %cst_212 : f32 to vector<16x1xf32>
    %618 = arith.mulf %616, %617 : vector<16x1xf32>
    %619 = arith.mulf %613, %613 : vector<16x1xf32>
    %620 = arith.subf %618, %619 : vector<16x1xf32>
    %621 = vector.broadcast %613 : vector<16x1xf32> to vector<16x32xf32>
    %622 = arith.subf %607, %621 : vector<16x32xf32>
    %cst_213 = arith.constant 9.99999974E-6 : f32
    %623 = vector.broadcast %cst_213 : f32 to vector<16x1xf32>
    %624 = arith.addf %620, %623 : vector<16x1xf32>
    %625 = math.rsqrt %624 : vector<16x1xf32>
    %626 = vector.broadcast %625 : vector<16x1xf32> to vector<16x32xf32>
    %627 = arith.mulf %622, %626 : vector<16x32xf32>
    %628 = vector.broadcast %608 : vector<1x32xf32> to vector<16x32xf32>
    %629 = arith.mulf %627, %628 : vector<16x32xf32>
    %630 = vector.broadcast %609 : vector<1x32xf32> to vector<16x32xf32>
    %631 = arith.addf %629, %630 : vector<16x32xf32>
    %c42 = arith.constant 42 : index
    %c0_214 = arith.constant 0 : index
    %632 = vector.load %arg5[%c42, %c0_214] : memref<45x128xf32, #tpu.memory_space<vmem>>, vector<1x32xf32>
    %c43 = arith.constant 43 : index
    %c0_215 = arith.constant 0 : index
    %633 = vector.load %arg5[%c43, %c0_215] : memref<45x128xf32, #tpu.memory_space<vmem>>, vector<1x32xf32>
    %cst_216 = arith.constant dense<0.000000e+00> : vector<16xf32>
    %634 = vector.multi_reduction <add>, %631, %cst_216 [1] : vector<16x32xf32> to vector<16xf32>
    %635 = vector.shape_cast %634 : vector<16xf32> to vector<16x1xf32>
    %cst_217 = arith.constant 3.125000e-02 : f32
    %636 = vector.broadcast %cst_217 : f32 to vector<16x1xf32>
    %637 = arith.mulf %635, %636 : vector<16x1xf32>
    %638 = arith.mulf %631, %631 : vector<16x32xf32>
    %cst_218 = arith.constant dense<0.000000e+00> : vector<16xf32>
    %639 = vector.multi_reduction <add>, %638, %cst_218 [1] : vector<16x32xf32> to vector<16xf32>
    %640 = vector.shape_cast %639 : vector<16xf32> to vector<16x1xf32>
    %cst_219 = arith.constant 3.125000e-02 : f32
    %641 = vector.broadcast %cst_219 : f32 to vector<16x1xf32>
    %642 = arith.mulf %640, %641 : vector<16x1xf32>
    %643 = arith.mulf %637, %637 : vector<16x1xf32>
    %644 = arith.subf %642, %643 : vector<16x1xf32>
    %645 = vector.broadcast %637 : vector<16x1xf32> to vector<16x32xf32>
    %646 = arith.subf %631, %645 : vector<16x32xf32>
    %cst_220 = arith.constant 9.99999974E-6 : f32
    %647 = vector.broadcast %cst_220 : f32 to vector<16x1xf32>
    %648 = arith.addf %644, %647 : vector<16x1xf32>
    %649 = math.rsqrt %648 : vector<16x1xf32>
    %650 = vector.broadcast %649 : vector<16x1xf32> to vector<16x32xf32>
    %651 = arith.mulf %646, %650 : vector<16x32xf32>
    %652 = vector.broadcast %632 : vector<1x32xf32> to vector<16x32xf32>
    %653 = arith.mulf %651, %652 : vector<16x32xf32>
    %654 = vector.broadcast %633 : vector<1x32xf32> to vector<16x32xf32>
    %655 = arith.addf %653, %654 : vector<16x32xf32>
    %c20_221 = arith.constant 20 : index
    %c0_222 = arith.constant 0 : index
    %c0_223 = arith.constant 0 : index
    %656 = vector.load %arg4[%c20_221, %c0_222, %c0_223] : memref<21x64x128xbf16, #tpu.memory_space<vmem>>, vector<1x32x128xbf16>
    %657 = vector.shape_cast %656 : vector<1x32x128xbf16> to vector<32x128xbf16>
    %658 = arith.truncf %655 : vector<16x32xf32> to vector<16x32xbf16>
    %cst_224 = arith.constant dense<0.000000e+00> : vector<16x128xf32>
    %659 = tpu.matmul %658, %657, %cst_224 {dimension_numbers = #tpu.dot_dimension_numbers<[1], [0], [0], [1], [0, 0, 1, 1], [], []>} : vector<16x32xbf16>, vector<32x128xbf16>, vector<16x128xf32> -> vector<16x128xf32>
    %c44 = arith.constant 44 : index
    %c0_225 = arith.constant 0 : index
    %660 = vector.load %arg5[%c44, %c0_225] : memref<45x128xf32, #tpu.memory_space<vmem>>, vector<1x128xf32>
    %661 = vector.broadcast %660 : vector<1x128xf32> to vector<16x128xf32>
    %662 = arith.addf %659, %661 : vector<16x128xf32>
    %c0_226 = arith.constant 0 : index
    %c0_227 = arith.constant 0 : index
    %663 = vector.load %arg6[%c0_226, %c0_227] : memref<16x128xf32, #tpu.memory_space<vmem>>, vector<16x128xf32>
    tpu.vector_store %arg6[%c0_226, %c0_227], %662 {strides = array<i32>} : memref<16x128xf32, #tpu.memory_space<vmem>>, vector<16x128xf32>,
    return
  }
}

</mosaic_0001>

<llo_original>
// kernel: forward.1
$region0: #{forward.1}
  #allocation0 [shape = 'u32[]', space=smem, size = 0x4, offset = 0x4, fixed_abs, tag = 'smem constant byte address 0x4 - core index']
  #allocation1 [shape = 'u32[144,128]{1,0:T(1,128)}', space=vmem, size = 0x12000, scoped, tag = 'internal scratch']
  %s0 = inlined_call_operand.vmem [shape: f32[16,32], index: 0, kind: input, shape index: {}]
  %s1 = inlined_call_operand.vmem [shape: f32[16,32], index: 1, kind: input, shape index: {}]
  %s2 = inlined_call_operand.vmem [shape: f32[32,32], index: 2, kind: input, shape index: {}]
  %s3 = inlined_call_operand.vmem [shape: f32[32,32], index: 3, kind: input, shape index: {}]
  %s4 = inlined_call_operand.hbm [shape: bf16[21,64,128], index: 4, kind: input, shape index: {}]
  %s5 = inlined_call_operand.vmem [shape: f32[45,128], index: 5, kind: input, shape index: {}]
  %s6 = inlined_call_operand.vmem [shape: f32[16,128], index: 6, kind: output, shape index: {}]
  %s7 = sld [smem:[#allocation0]]
  $region38: #{forward.1} parent=0
    _
  %s9 = ssub.s32 1, %s7
  %s10 = scalar_select 0, %s9, %s7
  $region1: #{forward.1} parent=0
    #allocation2 [shape = 'u8[344064]{0}', space=vmem, size = 0x54000, scoped, tag = 'input window, operand 4, single buffered']
    #allocation3 [shape = 's32[1]{0}', space=sflag, size = 0x4, scoped, tag = 'scoped memory for forward.1']
    %11 = vsyncpa [#allocation3], 0
    // Predicated region
    $region2: #{forward.1} parent=1 // pred_check
      _
    $region3: #{forward.1} parent=1 // pred_check_branch
      %13 = sbr.rel (0) target = $region5
    $region4: #{forward.1} parent=1 // pred_region
      _
    $region5: #{forward.1} parent=1 // pred_fallthru
      _
    // Predicated region
    $region6: #{forward.1} parent=1 // pred_check
      _
    $region7: #{forward.1} parent=1 // pred_check_branch
      %15 = sbr.rel (0) target = $region9
    $region8: #{forward.1} parent=1 // pred_region
      _
    $region9: #{forward.1} parent=1 // pred_fallthru
      _
    // Predicated region
    $region10: #{forward.1} parent=1 // pred_check
      _
    $region11: #{forward.1} parent=1 // pred_check_branch
      %17 = sbr.rel (0) target = $region13
    $region12: #{forward.1} parent=1 // pred_region
      _
    $region13: #{forward.1} parent=1 // pred_fallthru
      _
    // Predicated region
    $region14: #{forward.1} parent=1 // pred_check
      _
    $region15: #{forward.1} parent=1 // pred_check_branch
      %19 = sbr.rel (0) target = $region17
    $region16: #{forward.1} parent=1 // pred_region
      _
    $region17: #{forward.1} parent=1 // pred_fallthru
      _
    // Predicated region
    $region18: #{forward.1} parent=1 // pred_check
      _
    $region19: #{forward.1} parent=1 // pred_check_branch
      %21 = sbr.rel (0) target = $region21
    $region20: #{forward.1} parent=1 // pred_region
      %s23 = ssub.s32 10752, 10752
      %24 = vsyncadd [#allocation3], %s23
      %s25 = sshll.u32 [#allocation2], 4
      %s26 = int_to_ptr.vmem [resolvable:$true] %s25
      %31 = dma.hbm_to_vmem [thread:$0]  %s4, 10752, %s26, [#allocation3], 64, 64, 4
    $region21: #{forward.1} parent=1 // pred_fallthru
      _
    // Predicated region
    $region22: #{forward.1} parent=1 // pred_check
      _
    $region23: #{forward.1} parent=1 // pred_check_branch
      %33 = sbr.rel (0) target = $region25
    $region24: #{forward.1} parent=1 // pred_region
      _
    $region25: #{forward.1} parent=1 // pred_fallthru
      _
    // Predicated region
    $region26: #{forward.1} parent=1 // pred_check
      _
    $region27: #{forward.1} parent=1 // pred_check_branch
      %35 = sbr.rel (0) target = $region29
    $region28: #{forward.1} parent=1 // pred_region
      %36 = dma.done [#allocation3], 10752
    $region29: #{forward.1} parent=1 // pred_fallthru
      _
    %v38 = vld [vmem:[%s2] sm:$0xff]
    %v39 = vld [vmem:[%s2 + $0x8] sm:$0xff]
    %v40 = vld [vmem:[%s2 + $0x10] sm:$0xff]
    %v41 = vld [vmem:[%s2 + $0x18] sm:$0xff]
    %v42 = vld [vmem:[%s3] sm:$0xff]
    %v43 = vld [vmem:[%s3 + $0x8] sm:$0xff]
    %v44 = vld [vmem:[%s3 + $0x10] sm:$0xff]
    %v45 = vld [vmem:[%s3 + $0x18] sm:$0xff]
    %v46 = vld [vmem:[%s0] sm:$0xff]
    %v47 = vld [vmem:[%s0 + $0x8] sm:$0xff]
    %v48 = vld [vmem:[#allocation2] sm:$0xf]
    %v49 = vld [vmem:[#allocation2 + $0x4] sm:$0xf]
    %v50 = vld [vmem:[#allocation2 + $0x8] sm:$0xf]
    %v51 = vld [vmem:[#allocation2 + $0xc] sm:$0xf]
    %v52 = vld [vmem:[%s5] sm:$0x1]
    %v53 = vpack.c.bf16 %v47, %v46
    %v54 = vlaneseq
    %v55 = vshrl.u32 %v54, 7
    %v56 = vsub.s32 0, %v55
    %v57 = vrot.slane %v52, %v56
    %v62 = vunpack.c.l.b16 %v48
    %v63 = vunpack.c.l.b16 %v49
    %v64 = vunpack.c.l.b16 %v50
    %v65 = vunpack.c.l.b16 %v51
    %v66 = vpack.c.b16 %v63, %v62
    %v67 = vpack.c.b16 %v65, %v64
    %vm70 = vcmask 261120
    %v72 = vsel %vm70, %v53, 0
    %74 = vmatprep.subr.bf16.mxu0 0
    %75 = vmatpush1.bf16.msra.mxu0 %v66
    %76 = vmatprep.subr.bf16.mxu0 0
    %77 = vmatpush1.bf16.msra.mxu0 %v67
    %78 = vmatprep.subr.bf16.mxu0 0
    %79 = vmatpush1.bf16.msra.mxu0 0
    %80 = vmatprep.subr.bf16.mxu0 0
    %81 = vmatpush1.bf16.msra.mxu0 0
    %82 = vmatprep.subr.bf16.mxu0 0
    %83 = vmatpush1.bf16.msra.mxu0 0
    %84 = vmatprep.subr.bf16.mxu0 0
    %85 = vmatpush1.bf16.msra.mxu0 0
    %86 = vmatprep.subr.bf16.mxu0 0
    %87 = vmatpush1.bf16.msra.mxu0 0
    %88 = vmatprep.subr.bf16.mxu0 0
    %89 = vmatpush1.bf16.msra.mxu0 0
    %90 = vmatprep.subr.bf16.mxu0 0
    %91 = vmatpush1.bf16.msra.mxu0 0
    %92 = vmatprep.subr.bf16.mxu0 0
    %93 = vmatpush1.bf16.msra.mxu0 0
    %94 = vmatprep.subr.bf16.mxu0 0
    %95 = vmatpush1.bf16.msra.mxu0 0
    %96 = vmatprep.subr.bf16.mxu0 0
    %97 = vmatpush1.bf16.msra.mxu0 0
    %98 = vmatprep.subr.bf16.mxu0 0
    %99 = vmatpush1.bf16.msra.mxu0 0
    %100 = vmatprep.subr.bf16.mxu0 0
    %101 = vmatpush1.bf16.msra.mxu0 0
    %102 = vmatprep.subr.bf16.mxu0 0
    %103 = vmatpush1.bf16.msra.mxu0 0
    %104 = vmatprep.subr.bf16.mxu0 0
    %105 = vmatpush1.bf16.msra.mxu0 0
    %106 = vmatprep.mubr.bf16.mxu0 0
    %107 = vmatmul.mubr.bf16.gmra.mrb[0].mxu0 %v72
    %v108 = vpop.f32.mrb[0].mxu0
    %v109 = vadd.f32 %v57, %v108
    %v110 = vpop.f32.mrb[0].mxu0
    %v111 = vpop.f32.mrb[0].mxu0
    %v112 = vadd.f32 %v57, %v111
    %v113 = vpop.f32.mrb[0].mxu0
    %114 = vdwg.mxu0
    %117 = vrot.lane.b32.xlu0 %v109, 112
    %v118 = vpop.permute.xlu0 %117
    %119 = vrot.lane.b32.xlu0 %v112, 112
    %v120 = vpop.permute.xlu0 %119
    %v123 = vpack.c.bf16 %v112, %v109
    %v124 = vpack.c.bf16 %v120, %v118
    %127 = vrot.lane.b32.xlu0 %v123, 96
    %v128 = vpop.permute.xlu0 %127
    %129 = vrot.lane.b32.xlu0 %v124, 96
    %v130 = vpop.permute.xlu0 %129
    %vm131 = vcmask 130048
    %v133 = vsel %vm131, %v123, 0
    %v136 = vsel %vm131, %v124, 0
    %v139 = vsel %vm131, %v128, 0
    %v142 = vsel %vm131, %v130, 0
    %144 = vmatprep.subr.bf16.mxu0 0
    %145 = vmatpush1.bf16.xpose.msra.mxu0 %v139
    %146 = vmatprep.subr.bf16.mxu0 0
    %147 = vmatpush1.bf16.xpose.msra.mxu0 %v142
    %148 = vmatprep.subr.bf16.mxu0 0
    %149 = vmatpush1.bf16.xpose.msra.mxu0 0
    %150 = vmatprep.subr.bf16.mxu0 0
    %151 = vmatpush1.bf16.xpose.msra.mxu0 0
    %152 = vmatprep.subr.bf16.mxu0 0
    %153 = vmatpush1.bf16.xpose.msra.mxu0 0
    %154 = vmatprep.subr.bf16.mxu0 0
    %155 = vmatpush1.bf16.xpose.msra.mxu0 0
    %156 = vmatprep.subr.bf16.mxu0 0
    %157 = vmatpush1.bf16.xpose.msra.mxu0 0
    %158 = vmatprep.subr.bf16.mxu0 0
    %159 = vmatpush1.bf16.xpose.msra.mxu0 0
    %160 = vmatprep.subr.bf16.mxu0 0
    %161 = vmatpush1.bf16.xpose.msra.mxu0 0
    %162 = vmatprep.subr.bf16.mxu0 0
    %163 = vmatpush1.bf16.xpose.msra.mxu0 0
    %164 = vmatprep.subr.bf16.mxu0 0
    %165 = vmatpush1.bf16.xpose.msra.mxu0 0
    %166 = vmatprep.subr.bf16.mxu0 0
    %167 = vmatpush1.bf16.xpose.msra.mxu0 0
    %168 = vmatprep.subr.bf16.mxu0 0
    %169 = vmatpush1.bf16.xpose.msra.mxu0 0
    %170 = vmatprep.subr.bf16.mxu0 0
    %171 = vmatpush1.bf16.xpose.msra.mxu0 0
    %172 = vmatprep.subr.bf16.mxu0 0
    %173 = vmatpush1.bf16.xpose.msra.mxu0 0
    %174 = vmatprep.subr.bf16.mxu0 0
    %175 = vmatpush1.bf16.xpose.msra.mxu0 0
    %176 = vmatprep.mubr.bf16.mxu0 0
    %177 = vmatmul.mubr.bf16.gmra.mrb[0].mxu0 %v133
    %v178 = vpop.f32.mrb[0].mxu0
    %v179 = vadd.f32 %v38, %v178
    %v180 = vpop.f32.mrb[0].mxu0
    %v181 = vpop.f32.mrb[0].mxu0
    %v182 = vadd.f32 %v39, %v181
    %v183 = vpop.f32.mrb[0].mxu0
    %184 = vmatprep.mubr.bf16.mxu0 0
    %185 = vmatmul.mubr.bf16.gmra.mrb[0].mxu0 %v136
    %v186 = vpop.f32.mrb[0].mxu0
    %v187 = vadd.f32 %v40, %v186
    %v188 = vpop.f32.mrb[0].mxu0
    %v189 = vpop.f32.mrb[0].mxu0
    %v190 = vadd.f32 %v41, %v189
    %v191 = vpop.f32.mrb[0].mxu0
    %192 = vdwg.mxu0
    %v193 = vsel %vm70, %v179, -inf
    %194 = vmax.xlane.f32.xlu0 %v193
    %v195 = vpop.xlane.xlu0 %194
    %v196 = vsel %vm70, %v182, -inf
    %197 = vmax.xlane.f32.xlu0 %v196
    %v198 = vpop.xlane.xlu0 %197
    %v199 = vsel %vm70, %v187, -inf
    %200 = vmax.xlane.f32.xlu0 %v199
    %v201 = vpop.xlane.xlu0 %200
    %v202 = vsel %vm70, %v190, -inf
    %203 = vmax.xlane.f32.xlu0 %v202
    %v204 = vpop.xlane.xlu0 %203
    %v205 = vsub.f32 %v179, %v195
    %v206 = vsub.f32 %v182, %v198
    %v207 = vsub.f32 %v187, %v201
    %v208 = vsub.f32 %v190, %v204
    %v209 = vmul.f32 %v205, 1.442695
    %v210 = vpow.pop %v209
    %v211 = vmul.f32 %v206, 1.442695
    %v212 = vpow.pop %v211
    %v213 = vmul.f32 %v207, 1.442695
    %v214 = vpow.pop %v213
    %v215 = vmul.f32 %v208, 1.442695
    %v216 = vpow.pop %v215
    %v217 = vsel %vm70, %v210, 0.0
    %218 = vadd.xlane.f32.xlu0 %v217
    %v219 = vpop.xlane.xlu0 %218
    %v220 = vsel %vm70, %v212, 0.0
    %221 = vadd.xlane.f32.xlu0 %v220
    %v222 = vpop.xlane.xlu0 %221
    %v223 = vsel %vm70, %v214, 0.0
    %224 = vadd.xlane.f32.xlu0 %v223
    %v225 = vpop.xlane.xlu0 %224
    %v226 = vsel %vm70, %v216, 0.0
    %227 = vadd.xlane.f32.xlu0 %v226
    %v228 = vpop.xlane.xlu0 %227
    %v229 = vrcp.pop %v219
    %v230 = vrcp.pop %v222
    %v231 = vrcp.pop %v225
    %v232 = vrcp.pop %v228
    %v233 = vmul.f32 %v210, %v229
    %v234 = vmul.f32 %v212, %v230
    %v235 = vmul.f32 %v214, %v231
    %v236 = vmul.f32 %v216, %v232
    %v237 = vpack.c.bf16 %v234, %v233
    %v238 = vpack.c.bf16 %v236, %v235
    %239 = vrot.lane.b32.xlu0 %v123, 64
    %v240 = vpop.permute.xlu0 %239
    %241 = vrot.lane.b32.xlu0 %v124, 64
    %v242 = vpop.permute.xlu0 %241
    %v246 = vsel %vm70, %v237, 0
    %v249 = vsel %vm70, %v238, 0
    %251 = vmatprep.subr.bf16.mxu0 0
    %252 = vmatpush1.bf16.msra.mxu0 %v240
    %253 = vmatprep.subr.bf16.mxu0 0
    %254 = vmatpush1.bf16.msra.mxu0 %v242
    %255 = vmatprep.subr.bf16.mxu0 0
    %256 = vmatpush1.bf16.msra.mxu0 0
    %257 = vmatprep.subr.bf16.mxu0 0
    %258 = vmatpush1.bf16.msra.mxu0 0
    %259 = vmatprep.subr.bf16.mxu0 0
    %260 = vmatpush1.bf16.msra.mxu0 0
    %261 = vmatprep.subr.bf16.mxu0 0
    %262 = vmatpush1.bf16.msra.mxu0 0
    %263 = vmatprep.subr.bf16.mxu0 0
    %264 = vmatpush1.bf16.msra.mxu0 0
    %265 = vmatprep.subr.bf16.mxu0 0
    %266 = vmatpush1.bf16.msra.mxu0 0
    %267 = vmatprep.subr.bf16.mxu0 0
    %268 = vmatpush1.bf16.msra.mxu0 0
    %269 = vmatprep.subr.bf16.mxu0 0
    %270 = vmatpush1.bf16.msra.mxu0 0
    %271 = vmatprep.subr.bf16.mxu0 0
    %272 = vmatpush1.bf16.msra.mxu0 0
    %273 = vmatprep.subr.bf16.mxu0 0
    %274 = vmatpush1.bf16.msra.mxu0 0
    %275 = vmatprep.subr.bf16.mxu0 0
    %276 = vmatpush1.bf16.msra.mxu0 0
    %277 = vmatprep.subr.bf16.mxu0 0
    %278 = vmatpush1.bf16.msra.mxu0 0
    %279 = vmatprep.subr.bf16.mxu0 0
    %280 = vmatpush1.bf16.msra.mxu0 0
    %281 = vmatprep.subr.bf16.mxu0 0
    %282 = vmatpush1.bf16.msra.mxu0 0
    %283 = vmatprep.mubr.bf16.mxu0 0
    %284 = vmatmul.mubr.bf16.gmra.mrb[0].mxu0 %v246
    %v285 = vpop.f32.mrb[0].mxu0
    %v286 = vadd.f32 0.0, %v285
    %v287 = vpop.f32.mrb[0].mxu0
    %v288 = vpop.f32.mrb[0].mxu0
    %v289 = vadd.f32 0.0, %v288
    %v290 = vpop.f32.mrb[0].mxu0
    %291 = vmatprep.mubr.bf16.mxu0 0
    %292 = vmatmul.mubr.bf16.gmra.mrb[0].mxu0 %v249
    %v293 = vpop.f32.mrb[0].mxu0
    %v294 = vadd.f32 0.0, %v293
    %v295 = vpop.f32.mrb[0].mxu0
    %v296 = vpop.f32.mrb[0].mxu0
    %v297 = vadd.f32 0.0, %v296
    %v298 = vpop.f32.mrb[0].mxu0
    %299 = vdwg.mxu0
    %302 = vrot.lane.b32.xlu0 %v294, 16
    %v303 = vpop.permute.xlu0 %302
    %304 = vrot.lane.b32.xlu0 %v297, 16
    %v305 = vpop.permute.xlu0 %304
    %v308 = vsel %vm131, %v286, %v303
    %v309 = vsel %vm131, %v289, %v305
    %s310 = scalar_lea.vmem [#allocation2], 32
    %v311 = vld [vmem:[%s310] sm:$0xf]
    %v312 = vld [vmem:[%s310 + $0x4] sm:$0xf]
    %v313 = vld [vmem:[%s310 + $0x8] sm:$0xf]
    %v314 = vld [vmem:[%s310 + $0xc] sm:$0xf]
    %v315 = vpack.c.bf16 %v309, %v308
    %v316 = vld [vmem:[%s5 + $0x1] sm:$0x1]
    %v317 = vlaneseq
    %v318 = vshrl.u32 %v317, 7
    %v319 = vsub.s32 0, %v318
    %v320 = vrot.slane %v316, %v319
    %v325 = vunpack.c.l.b16 %v311
    %v326 = vunpack.c.l.b16 %v312
    %v327 = vunpack.c.l.b16 %v313
    %v328 = vunpack.c.l.b16 %v314
    %v329 = vpack.c.b16 %v326, %v325
    %v330 = vpack.c.b16 %v328, %v327
    %v334 = vsel %vm70, %v315, 0
    %336 = vmatprep.subr.bf16.mxu0 0
    %337 = vmatpush1.bf16.msra.mxu0 %v329
    %338 = vmatprep.subr.bf16.mxu0 0
    %339 = vmatpush1.bf16.msra.mxu0 %v330
    %340 = vmatprep.subr.bf16.mxu0 0
    %341 = vmatpush1.bf16.msra.mxu0 0
    %342 = vmatprep.subr.bf16.mxu0 0
    %343 = vmatpush1.bf16.msra.mxu0 0
    %344 = vmatprep.subr.bf16.mxu0 0
    %345 = vmatpush1.bf16.msra.mxu0 0
    %346 = vmatprep.subr.bf16.mxu0 0
    %347 = vmatpush1.bf16.msra.mxu0 0
    %348 = vmatprep.subr.bf16.mxu0 0
    %349 = vmatpush1.bf16.msra.mxu0 0
    %350 = vmatprep.subr.bf16.mxu0 0
    %351 = vmatpush1.bf16.msra.mxu0 0
    %352 = vmatprep.subr.bf16.mxu0 0
    %353 = vmatpush1.bf16.msra.mxu0 0
    %354 = vmatprep.subr.bf16.mxu0 0
    %355 = vmatpush1.bf16.msra.mxu0 0
    %356 = vmatprep.subr.bf16.mxu0 0
    %357 = vmatpush1.bf16.msra.mxu0 0
    %358 = vmatprep.subr.bf16.mxu0 0
    %359 = vmatpush1.bf16.msra.mxu0 0
    %360 = vmatprep.subr.bf16.mxu0 0
    %361 = vmatpush1.bf16.msra.mxu0 0
    %362 = vmatprep.subr.bf16.mxu0 0
    %363 = vmatpush1.bf16.msra.mxu0 0
    %364 = vmatprep.subr.bf16.mxu0 0
    %365 = vmatpush1.bf16.msra.mxu0 0
    %366 = vmatprep.subr.bf16.mxu0 0
    %367 = vmatpush1.bf16.msra.mxu0 0
    %368 = vmatprep.mubr.bf16.mxu0 0
    %369 = vmatmul.mubr.bf16.gmra.mrb[0].mxu0 %v334
    %v370 = vpop.f32.mrb[0].mxu0
    %v371 = vadd.f32 %v320, %v370
    %v372 = vpop.f32.mrb[0].mxu0
    %v373 = vpop.f32.mrb[0].mxu0
    %v374 = vadd.f32 %v320, %v373
    %v375 = vpop.f32.mrb[0].mxu0
    %376 = vdwg.mxu0
    %v377 = vadd.f32 %v46, %v371
    %v378 = vadd.f32 %v47, %v374
    %v379 = vld [vmem:[%s5 + $0x2] sm:$0x1]
    %v380 = vld [vmem:[%s5 + $0x3] sm:$0x1]
    %v381 = vsel %vm70, %v377, 0.0
    %382 = vadd.xlane.f32.xlu0 %v381
    %v383 = vpop.xlane.xlu0 %382
    %v384 = vsel %vm70, %v378, 0.0
    %385 = vadd.xlane.f32.xlu0 %v384
    %v386 = vpop.xlane.xlu0 %385
    %v387 = vmul.f32 %v383, 0.03125
    %v388 = vmul.f32 %v386, 0.03125
    %v389 = vmul.f32 %v377, %v377
    %v390 = vmul.f32 %v378, %v378
    %v391 = vsel %vm70, %v389, 0.0
    %392 = vadd.xlane.f32.xlu0 %v391
    %v393 = vpop.xlane.xlu0 %392
    %v394 = vsel %vm70, %v390, 0.0
    %395 = vadd.xlane.f32.xlu0 %v394
    %v396 = vpop.xlane.xlu0 %395
    %v397 = vmul.f32 %v393, 0.03125
    %v398 = vmul.f32 %v396, 0.03125
    %v399 = vmul.f32 %v387, %v387
    %v400 = vmul.f32 %v388, %v388
    %v401 = vsub.f32 %v397, %v399
    %v402 = vsub.f32 %v398, %v400
    %v403 = vsub.f32 %v377, %v387
    %v404 = vsub.f32 %v378, %v388
    %v405 = vadd.f32 %v401, 1e-05
    %v406 = vadd.f32 %v402, 1e-05
    %v407 = vrsqrt.pop %v405
    %v408 = vrsqrt.pop %v406
    %v409 = vmul.f32 %v403, %v407
    %v410 = vmul.f32 %v404, %v408
    %v411 = vlaneseq
    %v412 = vshrl.u32 %v411, 7
    %v413 = vsub.s32 0, %v412
    %v414 = vrot.slane %v379, %v413
    %v415 = vmul.f32 %v409, %v414
    %v416 = vmul.f32 %v410, %v414
    %v417 = vlaneseq
    %v418 = vshrl.u32 %v417, 7
    %v419 = vsub.s32 0, %v418
    %v420 = vrot.slane %v380, %v419
    %v421 = vadd.f32 %v415, %v420
    %v422 = vadd.f32 %v416, %v420
    %s423 = scalar_lea.vmem [#allocation2], 64
    %v424 = vld [vmem:[%s423] sm:$0xf]
    %v425 = vld [vmem:[%s423 + $0x4] sm:$0xf]
    %v426 = vld [vmem:[%s423 + $0x8] sm:$0xf]
    %v427 = vld [vmem:[%s423 + $0xc] sm:$0xf]
    %v428 = vpack.c.bf16 %v422, %v421
    %v429 = vld [vmem:[%s5 + $0x4] sm:$0x1]
    %v430 = vlaneseq
    %v431 = vshrl.u32 %v430, 7
    %v432 = vsub.s32 0, %v431
    %v433 = vrot.slane %v429, %v432
    %v438 = vunpack.c.l.b16 %v424
    %v439 = vunpack.c.l.b16 %v425
    %v440 = vunpack.c.l.b16 %v426
    %v441 = vunpack.c.l.b16 %v427
    %v442 = vpack.c.b16 %v439, %v438
    %v443 = vpack.c.b16 %v441, %v440
    %v447 = vsel %vm70, %v428, 0
    %449 = vmatprep.subr.bf16.mxu0 0
    %450 = vmatpush1.bf16.msra.mxu0 %v442
    %451 = vmatprep.subr.bf16.mxu0 0
    %452 = vmatpush1.bf16.msra.mxu0 %v443
    %453 = vmatprep.subr.bf16.mxu0 0
    %454 = vmatpush1.bf16.msra.mxu0 0
    %455 = vmatprep.subr.bf16.mxu0 0
    %456 = vmatpush1.bf16.msra.mxu0 0
    %457 = vmatprep.subr.bf16.mxu0 0
    %458 = vmatpush1.bf16.msra.mxu0 0
    %459 = vmatprep.subr.bf16.mxu0 0
    %460 = vmatpush1.bf16.msra.mxu0 0
    %461 = vmatprep.subr.bf16.mxu0 0
    %462 = vmatpush1.bf16.msra.mxu0 0
    %463 = vmatprep.subr.bf16.mxu0 0
    %464 = vmatpush1.bf16.msra.mxu0 0
    %465 = vmatprep.subr.bf16.mxu0 0
    %466 = vmatpush1.bf16.msra.mxu0 0
    %467 = vmatprep.subr.bf16.mxu0 0
    %468 = vmatpush1.bf16.msra.mxu0 0
    %469 = vmatprep.subr.bf16.mxu0 0
    %470 = vmatpush1.bf16.msra.mxu0 0
    %471 = vmatprep.subr.bf16.mxu0 0
    %472 = vmatpush1.bf16.msra.mxu0 0
    %473 = vmatprep.subr.bf16.mxu0 0
    %474 = vmatpush1.bf16.msra.mxu0 0
    %475 = vmatprep.subr.bf16.mxu0 0
    %476 = vmatpush1.bf16.msra.mxu0 0
    %477 = vmatprep.subr.bf16.mxu0 0
    %478 = vmatpush1.bf16.msra.mxu0 0
    %479 = vmatprep.subr.bf16.mxu0 0
    %480 = vmatpush1.bf16.msra.mxu0 0
    %481 = vmatprep.mubr.bf16.mxu0 0
    %482 = vmatmul.mubr.bf16.gmra.mrb[0].mxu0 %v447
    %v483 = vpop.f32.mrb[0].mxu0
    %v484 = vadd.f32 %v433, %v483
    %v485 = vpop.f32.mrb[0].mxu0
    %v486 = vpop.f32.mrb[0].mxu0
    %v487 = vadd.f32 %v433, %v486
    %v488 = vpop.f32.mrb[0].mxu0
    %489 = vdwg.mxu0
    %v490 = vmax.f32 %v484, 0.0
    %v491 = vmax.f32 %v487, 0.0
    %s492 = scalar_lea.vmem [#allocation2], 96
    %v493 = vld [vmem:[%s492] sm:$0xf]
    %v494 = vld [vmem:[%s492 + $0x4] sm:$0xf]
    %v495 = vld [vmem:[%s492 + $0x8] sm:$0xf]
    %v496 = vld [vmem:[%s492 + $0xc] sm:$0xf]
    %v497 = vld [vmem:[%s492 + $0x10] sm:$0xf]
    %v498 = vld [vmem:[%s492 + $0x14] sm:$0xf]
    %v499 = vld [vmem:[%s492 + $0x18] sm:$0xf]
    %v500 = vld [vmem:[%s492 + $0x1c] sm:$0xf]
    %v501 = vpack.c.bf16 %v491, %v490
    %v502 = vld [vmem:[%s5 + $0x5] sm:$0x1]
    %v503 = vlaneseq
    %v504 = vshrl.u32 %v503, 7
    %v505 = vsub.s32 0, %v504
    %v506 = vrot.slane %v502, %v505
    %v515 = vunpack.c.l.b16 %v493
    %v516 = vunpack.c.l.b16 %v494
    %v517 = vunpack.c.l.b16 %v495
    %v518 = vunpack.c.l.b16 %v496
    %v519 = vunpack.c.l.b16 %v497
    %v520 = vunpack.c.l.b16 %v498
    %v521 = vunpack.c.l.b16 %v499
    %v522 = vunpack.c.l.b16 %v500
    %v523 = vpack.c.b16 %v516, %v515
    %v524 = vpack.c.b16 %v518, %v517
    %v525 = vpack.c.b16 %v520, %v519
    %v526 = vpack.c.b16 %v522, %v521
    %vm531 = vcmask 523264
    %v533 = vsel %vm531, %v501, 0
    %535 = vmatprep.subr.bf16.mxu0 0
    %536 = vmatpush1.bf16.msra.mxu0 %v523
    %537 = vmatprep.subr.bf16.mxu0 0
    %538 = vmatpush1.bf16.msra.mxu0 %v524
    %539 = vmatprep.subr.bf16.mxu0 0
    %540 = vmatpush1.bf16.msra.mxu0 %v525
    %541 = vmatprep.subr.bf16.mxu0 0
    %542 = vmatpush1.bf16.msra.mxu0 %v526
    %543 = vmatprep.subr.bf16.mxu0 0
    %544 = vmatpush1.bf16.msra.mxu0 0
    %545 = vmatprep.subr.bf16.mxu0 0
    %546 = vmatpush1.bf16.msra.mxu0 0
    %547 = vmatprep.subr.bf16.mxu0 0
    %548 = vmatpush1.bf16.msra.mxu0 0
    %549 = vmatprep.subr.bf16.mxu0 0
    %550 = vmatpush1.bf16.msra.mxu0 0
    %551 = vmatprep.subr.bf16.mxu0 0
    %552 = vmatpush1.bf16.msra.mxu0 0
    %553 = vmatprep.subr.bf16.mxu0 0
    %554 = vmatpush1.bf16.msra.mxu0 0
    %555 = vmatprep.subr.bf16.mxu0 0
    %556 = vmatpush1.bf16.msra.mxu0 0
    %557 = vmatprep.subr.bf16.mxu0 0
    %558 = vmatpush1.bf16.msra.mxu0 0
    %559 = vmatprep.subr.bf16.mxu0 0
    %560 = vmatpush1.bf16.msra.mxu0 0
    %561 = vmatprep.subr.bf16.mxu0 0
    %562 = vmatpush1.bf16.msra.mxu0 0
    %563 = vmatprep.subr.bf16.mxu0 0
    %564 = vmatpush1.bf16.msra.mxu0 0
    %565 = vmatprep.subr.bf16.mxu0 0
    %566 = vmatpush1.bf16.msra.mxu0 0
    %567 = vmatprep.mubr.bf16.mxu0 0
    %568 = vmatmul.mubr.bf16.gmra.mrb[0].mxu0 %v533
    %v569 = vpop.f32.mrb[0].mxu0
    %v570 = vadd.f32 %v506, %v569
    %v571 = vpop.f32.mrb[0].mxu0
    %v572 = vpop.f32.mrb[0].mxu0
    %v573 = vadd.f32 %v506, %v572
    %v574 = vpop.f32.mrb[0].mxu0
    %575 = vdwg.mxu0
    %v576 = vadd.f32 %v421, %v570
    %v577 = vadd.f32 %v422, %v573
    %v578 = vld [vmem:[%s5 + $0x6] sm:$0x1]
    %v579 = vld [vmem:[%s5 + $0x7] sm:$0x1]
    %v580 = vsel %vm70, %v576, 0.0
    %581 = vadd.xlane.f32.xlu0 %v580
    %v582 = vpop.xlane.xlu0 %581
    %v583 = vsel %vm70, %v577, 0.0
    %584 = vadd.xlane.f32.xlu0 %v583
    %v585 = vpop.xlane.xlu0 %584
    %v586 = vmul.f32 %v582, 0.03125
    %v587 = vmul.f32 %v585, 0.03125
    %v588 = vmul.f32 %v576, %v576
    %v589 = vmul.f32 %v577, %v577
    %v590 = vsel %vm70, %v588, 0.0
    %591 = vadd.xlane.f32.xlu0 %v590
    %v592 = vpop.xlane.xlu0 %591
    %v593 = vsel %vm70, %v589, 0.0
    %594 = vadd.xlane.f32.xlu0 %v593
    %v595 = vpop.xlane.xlu0 %594
    %v596 = vmul.f32 %v592, 0.03125
    %v597 = vmul.f32 %v595, 0.03125
    %v598 = vmul.f32 %v586, %v586
    %v599 = vmul.f32 %v587, %v587
    %v600 = vsub.f32 %v596, %v598
    %v601 = vsub.f32 %v597, %v599
    %v602 = vsub.f32 %v576, %v586
    %v603 = vsub.f32 %v577, %v587
    %v604 = vadd.f32 %v600, 1e-05
    %v605 = vadd.f32 %v601, 1e-05
    %v606 = vrsqrt.pop %v604
    %v607 = vrsqrt.pop %v605
    %v608 = vmul.f32 %v602, %v606
    %v609 = vmul.f32 %v603, %v607
    %v610 = vlaneseq
    %v611 = vshrl.u32 %v610, 7
    %v612 = vsub.s32 0, %v611
    %v613 = vrot.slane %v578, %v612
    %v614 = vmul.f32 %v608, %v613
    %v615 = vmul.f32 %v609, %v613
    %v616 = vlaneseq
    %v617 = vshrl.u32 %v616, 7
    %v618 = vsub.s32 0, %v617
    %v619 = vrot.slane %v579, %v618
    %v620 = vadd.f32 %v614, %v619
    %v621 = vadd.f32 %v615, %v619
    %s622 = scalar_lea.vmem [#allocation2], 128
    %v623 = vld [vmem:[%s622] sm:$0xf]
    %v624 = vld [vmem:[%s622 + $0x4] sm:$0xf]
    %v625 = vld [vmem:[%s622 + $0x8] sm:$0xf]
    %v626 = vld [vmem:[%s622 + $0xc] sm:$0xf]
    %v627 = vld [vmem:[%s5 + $0x8] sm:$0x1]
    %v628 = vpack.c.bf16 %v621, %v620
    %v629 = vlaneseq
    %v630 = vshrl.u32 %v629, 7
    %v631 = vsub.s32 0, %v630
    %v632 = vrot.slane %v627, %v631
    %v637 = vunpack.c.l.b16 %v623
    %v638 = vunpack.c.l.b16 %v624
    %v639 = vunpack.c.l.b16 %v625
    %v640 = vunpack.c.l.b16 %v626
    %v641 = vpack.c.b16 %v638, %v637
    %v642 = vpack.c.b16 %v640, %v639
    %v646 = vsel %vm70, %v628, 0
    %648 = vmatprep.subr.bf16.mxu0 0
    %649 = vmatpush1.bf16.msra.mxu0 %v641
    %650 = vmatprep.subr.bf16.mxu0 0
    %651 = vmatpush1.bf16.msra.mxu0 %v642
    %652 = vmatprep.subr.bf16.mxu0 0
    %653 = vmatpush1.bf16.msra.mxu0 0
    %654 = vmatprep.subr.bf16.mxu0 0
    %655 = vmatpush1.bf16.msra.mxu0 0
    %656 = vmatprep.subr.bf16.mxu0 0
    %657 = vmatpush1.bf16.msra.mxu0 0
    %658 = vmatprep.subr.bf16.mxu0 0
    %659 = vmatpush1.bf16.msra.mxu0 0
    %660 = vmatprep.subr.bf16.mxu0 0
    %661 = vmatpush1.bf16.msra.mxu0 0
    %662 = vmatprep.subr.bf16.mxu0 0
    %663 = vmatpush1.bf16.msra.mxu0 0
    %664 = vmatprep.subr.bf16.mxu0 0
    %665 = vmatpush1.bf16.msra.mxu0 0
    %666 = vmatprep.subr.bf16.mxu0 0
    %667 = vmatpush1.bf16.msra.mxu0 0
    %668 = vmatprep.subr.bf16.mxu0 0
    %669 = vmatpush1.bf16.msra.mxu0 0
    %670 = vmatprep.subr.bf16.mxu0 0
    %671 = vmatpush1.bf16.msra.mxu0 0
    %672 = vmatprep.subr.bf16.mxu0 0
    %673 = vmatpush1.bf16.msra.mxu0 0
    %674 = vmatprep.subr.bf16.mxu0 0
    %675 = vmatpush1.bf16.msra.mxu0 0
    %676 = vmatprep.subr.bf16.mxu0 0
    %677 = vmatpush1.bf16.msra.mxu0 0
    %678 = vmatprep.subr.bf16.mxu0 0
    %679 = vmatpush1.bf16.msra.mxu0 0
    %680 = vmatprep.mubr.bf16.mxu0 0
    %681 = vmatmul.mubr.bf16.gmra.mrb[0].mxu0 %v646
    %v682 = vpop.f32.mrb[0].mxu0
    %v683 = vadd.f32 %v632, %v682
    %v684 = vpop.f32.mrb[0].mxu0
    %v685 = vpop.f32.mrb[0].mxu0
    %v686 = vadd.f32 %v632, %v685
    %v687 = vpop.f32.mrb[0].mxu0
    %688 = vdwg.mxu0
    %691 = vrot.lane.b32.xlu0 %v683, 112
    %v692 = vpop.permute.xlu0 %691
    %693 = vrot.lane.b32.xlu0 %v686, 112
    %v694 = vpop.permute.xlu0 %693
    %v697 = vpack.c.bf16 %v686, %v683
    %v698 = vpack.c.bf16 %v694, %v692
    %701 = vrot.lane.b32.xlu0 %v697, 96
    %v702 = vpop.permute.xlu0 %701
    %703 = vrot.lane.b32.xlu0 %v698, 96
    %v704 = vpop.permute.xlu0 %703
    %v706 = vsel %vm131, %v697, 0
    %v709 = vsel %vm131, %v698, 0
    %v712 = vsel %vm131, %v702, 0
    %v715 = vsel %vm131, %v704, 0
    %717 = vmatprep.subr.bf16.mxu0 0
    %718 = vmatpush1.bf16.xpose.msra.mxu0 %v712
    %719 = vmatprep.subr.bf16.mxu0 0
    %720 = vmatpush1.bf16.xpose.msra.mxu0 %v715
    %721 = vmatprep.subr.bf16.mxu0 0
    %722 = vmatpush1.bf16.xpose.msra.mxu0 0
    %723 = vmatprep.subr.bf16.mxu0 0
    %724 = vmatpush1.bf16.xpose.msra.mxu0 0
    %725 = vmatprep.subr.bf16.mxu0 0
    %726 = vmatpush1.bf16.xpose.msra.mxu0 0
    %727 = vmatprep.subr.bf16.mxu0 0
    %728 = vmatpush1.bf16.xpose.msra.mxu0 0
    %729 = vmatprep.subr.bf16.mxu0 0
    %730 = vmatpush1.bf16.xpose.msra.mxu0 0
    %731 = vmatprep.subr.bf16.mxu0 0
    %732 = vmatpush1.bf16.xpose.msra.mxu0 0
    %733 = vmatprep.subr.bf16.mxu0 0
    %734 = vmatpush1.bf16.xpose.msra.mxu0 0
    %735 = vmatprep.subr.bf16.mxu0 0
    %736 = vmatpush1.bf16.xpose.msra.mxu0 0
    %737 = vmatprep.subr.bf16.mxu0 0
    %738 = vmatpush1.bf16.xpose.msra.mxu0 0
    %739 = vmatprep.subr.bf16.mxu0 0
    %740 = vmatpush1.bf16.xpose.msra.mxu0 0
    %741 = vmatprep.subr.bf16.mxu0 0
    %742 = vmatpush1.bf16.xpose.msra.mxu0 0
    %743 = vmatprep.subr.bf16.mxu0 0
    %744 = vmatpush1.bf16.xpose.msra.mxu0 0
    %745 = vmatprep.subr.bf16.mxu0 0
    %746 = vmatpush1.bf16.xpose.msra.mxu0 0
    %747 = vmatprep.subr.bf16.mxu0 0
    %748 = vmatpush1.bf16.xpose.msra.mxu0 0
    %749 = vmatprep.mubr.bf16.mxu0 0
    %750 = vmatmul.mubr.bf16.gmra.mrb[0].mxu0 %v706
    %v751 = vpop.f32.mrb[0].mxu0
    %v752 = vadd.f32 %v38, %v751
    %v753 = vpop.f32.mrb[0].mxu0
    %v754 = vpop.f32.mrb[0].mxu0
    %v755 = vadd.f32 %v39, %v754
    %v756 = vpop.f32.mrb[0].mxu0
    %757 = vmatprep.mubr.bf16.mxu0 0
    %758 = vmatmul.mubr.bf16.gmra.mrb[0].mxu0 %v709
    %v759 = vpop.f32.mrb[0].mxu0
    %v760 = vadd.f32 %v40, %v759
    %v761 = vpop.f32.mrb[0].mxu0
    %v762 = vpop.f32.mrb[0].mxu0
    %v763 = vadd.f32 %v41, %v762
    %v764 = vpop.f32.mrb[0].mxu0
    %765 = vdwg.mxu0
    %v766 = vsel %vm70, %v752, -inf
    %767 = vmax.xlane.f32.xlu0 %v766
    %v768 = vpop.xlane.xlu0 %767
    %v769 = vsel %vm70, %v755, -inf
    %770 = vmax.xlane.f32.xlu0 %v769
    %v771 = vpop.xlane.xlu0 %770
    %v772 = vsel %vm70, %v760, -inf
    %773 = vmax.xlane.f32.xlu0 %v772
    %v774 = vpop.xlane.xlu0 %773
    %v775 = vsel %vm70, %v763, -inf
    %776 = vmax.xlane.f32.xlu0 %v775
    %v777 = vpop.xlane.xlu0 %776
    %v778 = vsub.f32 %v752, %v768
    %v779 = vsub.f32 %v755, %v771
    %v780 = vsub.f32 %v760, %v774
    %v781 = vsub.f32 %v763, %v777
    %v782 = vmul.f32 %v778, 1.442695
    %v783 = vpow.pop %v782
    %v784 = vmul.f32 %v779, 1.442695
    %v785 = vpow.pop %v784
    %v786 = vmul.f32 %v780, 1.442695
    %v787 = vpow.pop %v786
    %v788 = vmul.f32 %v781, 1.442695
    %v789 = vpow.pop %v788
    %v790 = vsel %vm70, %v783, 0.0
    %791 = vadd.xlane.f32.xlu0 %v790
    %v792 = vpop.xlane.xlu0 %791
    %v793 = vsel %vm70, %v785, 0.0
    %794 = vadd.xlane.f32.xlu0 %v793
    %v795 = vpop.xlane.xlu0 %794
    %v796 = vsel %vm70, %v787, 0.0
    %797 = vadd.xlane.f32.xlu0 %v796
    %v798 = vpop.xlane.xlu0 %797
    %v799 = vsel %vm70, %v789, 0.0
    %800 = vadd.xlane.f32.xlu0 %v799
    %v801 = vpop.xlane.xlu0 %800
    %v802 = vrcp.pop %v792
    %v803 = vrcp.pop %v795
    %v804 = vrcp.pop %v798
    %v805 = vrcp.pop %v801
    %v806 = vmul.f32 %v783, %v802
    %v807 = vmul.f32 %v785, %v803
    %v808 = vmul.f32 %v787, %v804
    %v809 = vmul.f32 %v789, %v805
    %v810 = vpack.c.bf16 %v807, %v806
    %v811 = vpack.c.bf16 %v809, %v808
    %812 = vrot.lane.b32.xlu0 %v697, 64
    %v813 = vpop.permute.xlu0 %812
    %814 = vrot.lane.b32.xlu0 %v698, 64
    %v815 = vpop.permute.xlu0 %814
    %v819 = vsel %vm70, %v810, 0
    %v822 = vsel %vm70, %v811, 0
    %824 = vmatprep.subr.bf16.mxu0 0
    %825 = vmatpush1.bf16.msra.mxu0 %v813
    %826 = vmatprep.subr.bf16.mxu0 0
    %827 = vmatpush1.bf16.msra.mxu0 %v815
    %828 = vmatprep.subr.bf16.mxu0 0
    %829 = vmatpush1.bf16.msra.mxu0 0
    %830 = vmatprep.subr.bf16.mxu0 0
    %831 = vmatpush1.bf16.msra.mxu0 0
    %832 = vmatprep.subr.bf16.mxu0 0
    %833 = vmatpush1.bf16.msra.mxu0 0
    %834 = vmatprep.subr.bf16.mxu0 0
    %835 = vmatpush1.bf16.msra.mxu0 0
    %836 = vmatprep.subr.bf16.mxu0 0
    %837 = vmatpush1.bf16.msra.mxu0 0
    %838 = vmatprep.subr.bf16.mxu0 0
    %839 = vmatpush1.bf16.msra.mxu0 0
    %840 = vmatprep.subr.bf16.mxu0 0
    %841 = vmatpush1.bf16.msra.mxu0 0
    %842 = vmatprep.subr.bf16.mxu0 0
    %843 = vmatpush1.bf16.msra.mxu0 0
    %844 = vmatprep.subr.bf16.mxu0 0
    %845 = vmatpush1.bf16.msra.mxu0 0
    %846 = vmatprep.subr.bf16.mxu0 0
    %847 = vmatpush1.bf16.msra.mxu0 0
    %848 = vmatprep.subr.bf16.mxu0 0
    %849 = vmatpush1.bf16.msra.mxu0 0
    %850 = vmatprep.subr.bf16.mxu0 0
    %851 = vmatpush1.bf16.msra.mxu0 0
    %852 = vmatprep.subr.bf16.mxu0 0
    %853 = vmatpush1.bf16.msra.mxu0 0
    %854 = vmatprep.subr.bf16.mxu0 0
    %855 = vmatpush1.bf16.msra.mxu0 0
    %856 = vmatprep.mubr.bf16.mxu0 0
    %857 = vmatmul.mubr.bf16.gmra.mrb[0].mxu0 %v819
    %v858 = vpop.f32.mrb[0].mxu0
    %v859 = vadd.f32 0.0, %v858
    %v860 = vpop.f32.mrb[0].mxu0
    %v861 = vpop.f32.mrb[0].mxu0
    %v862 = vadd.f32 0.0, %v861
    %v863 = vpop.f32.mrb[0].mxu0
    %864 = vmatprep.mubr.bf16.mxu0 0
    %865 = vmatmul.mubr.bf16.gmra.mrb[0].mxu0 %v822
    %v866 = vpop.f32.mrb[0].mxu0
    %v867 = vadd.f32 0.0, %v866
    %v868 = vpop.f32.mrb[0].mxu0
    %v869 = vpop.f32.mrb[0].mxu0
    %v870 = vadd.f32 0.0, %v869
    %v871 = vpop.f32.mrb[0].mxu0
    %872 = vdwg.mxu0
    %875 = vrot.lane.b32.xlu0 %v867, 16
    %v876 = vpop.permute.xlu0 %875
    %877 = vrot.lane.b32.xlu0 %v870, 16
    %v878 = vpop.permute.xlu0 %877
    %v881 = vsel %vm131, %v859, %v876
    %v882 = vsel %vm131, %v862, %v878
    %s883 = scalar_lea.vmem [#allocation2], 160
    %v884 = vld [vmem:[%s883] sm:$0xf]
    %v885 = vld [vmem:[%s883 + $0x4] sm:$0xf]
    %v886 = vld [vmem:[%s883 + $0x8] sm:$0xf]
    %v887 = vld [vmem:[%s883 + $0xc] sm:$0xf]
    %v888 = vpack.c.bf16 %v882, %v881
    %v889 = vld [vmem:[%s5 + $0x9] sm:$0x1]
    %v890 = vlaneseq
    %v891 = vshrl.u32 %v890, 7
    %v892 = vsub.s32 0, %v891
    %v893 = vrot.slane %v889, %v892
    %v898 = vunpack.c.l.b16 %v884
    %v899 = vunpack.c.l.b16 %v885
    %v900 = vunpack.c.l.b16 %v886
    %v901 = vunpack.c.l.b16 %v887
    %v902 = vpack.c.b16 %v899, %v898
    %v903 = vpack.c.b16 %v901, %v900
    %v907 = vsel %vm70, %v888, 0
    %909 = vmatprep.subr.bf16.mxu0 0
    %910 = vmatpush1.bf16.msra.mxu0 %v902
    %911 = vmatprep.subr.bf16.mxu0 0
    %912 = vmatpush1.bf16.msra.mxu0 %v903
    %913 = vmatprep.subr.bf16.mxu0 0
    %914 = vmatpush1.bf16.msra.mxu0 0
    %915 = vmatprep.subr.bf16.mxu0 0
    %916 = vmatpush1.bf16.msra.mxu0 0
    %917 = vmatprep.subr.bf16.mxu0 0
    %918 = vmatpush1.bf16.msra.mxu0 0
    %919 = vmatprep.subr.bf16.mxu0 0
    %920 = vmatpush1.bf16.msra.mxu0 0
    %921 = vmatprep.subr.bf16.mxu0 0
    %922 = vmatpush1.bf16.msra.mxu0 0
    %923 = vmatprep.subr.bf16.mxu0 0
    %924 = vmatpush1.bf16.msra.mxu0 0
    %925 = vmatprep.subr.bf16.mxu0 0
    %926 = vmatpush1.bf16.msra.mxu0 0
    %927 = vmatprep.subr.bf16.mxu0 0
    %928 = vmatpush1.bf16.msra.mxu0 0
    %929 = vmatprep.subr.bf16.mxu0 0
    %930 = vmatpush1.bf16.msra.mxu0 0
    %931 = vmatprep.subr.bf16.mxu0 0
    %932 = vmatpush1.bf16.msra.mxu0 0
    %933 = vmatprep.subr.bf16.mxu0 0
    %934 = vmatpush1.bf16.msra.mxu0 0
    %935 = vmatprep.subr.bf16.mxu0 0
    %936 = vmatpush1.bf16.msra.mxu0 0
    %937 = vmatprep.subr.bf16.mxu0 0
    %938 = vmatpush1.bf16.msra.mxu0 0
    %939 = vmatprep.subr.bf16.mxu0 0
    %940 = vmatpush1.bf16.msra.mxu0 0
    %941 = vmatprep.mubr.bf16.mxu0 0
    %942 = vmatmul.mubr.bf16.gmra.mrb[0].mxu0 %v907
    %v943 = vpop.f32.mrb[0].mxu0
    %v944 = vadd.f32 %v893, %v943
    %v945 = vpop.f32.mrb[0].mxu0
    %v946 = vpop.f32.mrb[0].mxu0
    %v947 = vadd.f32 %v893, %v946
    %v948 = vpop.f32.mrb[0].mxu0
    %949 = vdwg.mxu0
    %v950 = vadd.f32 %v620, %v944
    %v951 = vadd.f32 %v621, %v947
    %v952 = vld [vmem:[%s5 + $0xa] sm:$0x1]
    %v953 = vld [vmem:[%s5 + $0xb] sm:$0x1]
    %v954 = vsel %vm70, %v950, 0.0
    %955 = vadd.xlane.f32.xlu0 %v954
    %v956 = vpop.xlane.xlu0 %955
    %v957 = vsel %vm70, %v951, 0.0
    %958 = vadd.xlane.f32.xlu0 %v957
    %v959 = vpop.xlane.xlu0 %958
    %v960 = vmul.f32 %v956, 0.03125
    %v961 = vmul.f32 %v959, 0.03125
    %v962 = vmul.f32 %v950, %v950
    %v963 = vmul.f32 %v951, %v951
    %v964 = vsel %vm70, %v962, 0.0
    %965 = vadd.xlane.f32.xlu0 %v964
    %v966 = vpop.xlane.xlu0 %965
    %v967 = vsel %vm70, %v963, 0.0
    %968 = vadd.xlane.f32.xlu0 %v967
    %v969 = vpop.xlane.xlu0 %968
    %v970 = vmul.f32 %v966, 0.03125
    %v971 = vmul.f32 %v969, 0.03125
    %v972 = vmul.f32 %v960, %v960
    %v973 = vmul.f32 %v961, %v961
    %v974 = vsub.f32 %v970, %v972
    %v975 = vsub.f32 %v971, %v973
    %v976 = vsub.f32 %v950, %v960
    %v977 = vsub.f32 %v951, %v961
    %v978 = vadd.f32 %v974, 1e-05
    %v979 = vadd.f32 %v975, 1e-05
    %v980 = vrsqrt.pop %v978
    %v981 = vrsqrt.pop %v979
    %v982 = vmul.f32 %v976, %v980
    %v983 = vmul.f32 %v977, %v981
    %v984 = vlaneseq
    %v985 = vshrl.u32 %v984, 7
    %v986 = vsub.s32 0, %v985
    %v987 = vrot.slane %v952, %v986
    %v988 = vmul.f32 %v982, %v987
    %v989 = vmul.f32 %v983, %v987
    %v990 = vlaneseq
    %v991 = vshrl.u32 %v990, 7
    %v992 = vsub.s32 0, %v991
    %v993 = vrot.slane %v953, %v992
    %v994 = vadd.f32 %v988, %v993
    %v995 = vadd.f32 %v989, %v993
    %s996 = scalar_lea.vmem [#allocation2], 192
    %v997 = vld [vmem:[%s996] sm:$0xf]
    %v998 = vld [vmem:[%s996 + $0x4] sm:$0xf]
    %v999 = vld [vmem:[%s996 + $0x8] sm:$0xf]
    %v1000 = vld [vmem:[%s996 + $0xc] sm:$0xf]
    %v1001 = vpack.c.bf16 %v995, %v994
    %v1002 = vld [vmem:[%s5 + $0xc] sm:$0x1]
    %v1003 = vlaneseq
    %v1004 = vshrl.u32 %v1003, 7
    %v1005 = vsub.s32 0, %v1004
    %v1006 = vrot.slane %v1002, %v1005
    %v1011 = vunpack.c.l.b16 %v997
    %v1012 = vunpack.c.l.b16 %v998
    %v1013 = vunpack.c.l.b16 %v999
    %v1014 = vunpack.c.l.b16 %v1000
    %v1015 = vpack.c.b16 %v1012, %v1011
    %v1016 = vpack.c.b16 %v1014, %v1013
    %v1020 = vsel %vm70, %v1001, 0
    %1022 = vmatprep.subr.bf16.mxu0 0
    %1023 = vmatpush1.bf16.msra.mxu0 %v1015
    %1024 = vmatprep.subr.bf16.mxu0 0
    %1025 = vmatpush1.bf16.msra.mxu0 %v1016
    %1026 = vmatprep.subr.bf16.mxu0 0
    %1027 = vmatpush1.bf16.msra.mxu0 0
    %1028 = vmatprep.subr.bf16.mxu0 0
    %1029 = vmatpush1.bf16.msra.mxu0 0
    %1030 = vmatprep.subr.bf16.mxu0 0
    %1031 = vmatpush1.bf16.msra.mxu0 0
    %1032 = vmatprep.subr.bf16.mxu0 0
    %1033 = vmatpush1.bf16.msra.mxu0 0
    %1034 = vmatprep.subr.bf16.mxu0 0
    %1035 = vmatpush1.bf16.msra.mxu0 0
    %1036 = vmatprep.subr.bf16.mxu0 0
    %1037 = vmatpush1.bf16.msra.mxu0 0
    %1038 = vmatprep.subr.bf16.mxu0 0
    %1039 = vmatpush1.bf16.msra.mxu0 0
    %1040 = vmatprep.subr.bf16.mxu0 0
    %1041 = vmatpush1.bf16.msra.mxu0 0
    %1042 = vmatprep.subr.bf16.mxu0 0
    %1043 = vmatpush1.bf16.msra.mxu0 0
    %1044 = vmatprep.subr.bf16.mxu0 0
    %1045 = vmatpush1.bf16.msra.mxu0 0
    %1046 = vmatprep.subr.bf16.mxu0 0
    %1047 = vmatpush1.bf16.msra.mxu0 0
    %1048 = vmatprep.subr.bf16.mxu0 0
    %1049 = vmatpush1.bf16.msra.mxu0 0
    %1050 = vmatprep.subr.bf16.mxu0 0
    %1051 = vmatpush1.bf16.msra.mxu0 0
    %1052 = vmatprep.subr.bf16.mxu0 0
    %1053 = vmatpush1.bf16.msra.mxu0 0
    %1054 = vmatprep.mubr.bf16.mxu0 0
    %1055 = vmatmul.mubr.bf16.gmra.mrb[0].mxu0 %v1020
    %v1056 = vpop.f32.mrb[0].mxu0
    %v1057 = vadd.f32 %v1006, %v1056
    %v1058 = vpop.f32.mrb[0].mxu0
    %v1059 = vpop.f32.mrb[0].mxu0
    %v1060 = vadd.f32 %v1006, %v1059
    %v1061 = vpop.f32.mrb[0].mxu0
    %1062 = vdwg.mxu0
    %v1063 = vmax.f32 %v1057, 0.0
    %v1064 = vmax.f32 %v1060, 0.0
    %s1065 = scalar_lea.vmem [#allocation2], 224
    %v1066 = vld [vmem:[%s1065] sm:$0xf]
    %v1067 = vld [vmem:[%s1065 + $0x4] sm:$0xf]
    %v1068 = vld [vmem:[%s1065 + $0x8] sm:$0xf]
    %v1069 = vld [vmem:[%s1065 + $0xc] sm:$0xf]
    %v1070 = vld [vmem:[%s1065 + $0x10] sm:$0xf]
    %v1071 = vld [vmem:[%s1065 + $0x14] sm:$0xf]
    %v1072 = vld [vmem:[%s1065 + $0x18] sm:$0xf]
    %v1073 = vld [vmem:[%s1065 + $0x1c] sm:$0xf]
    %v1074 = vpack.c.bf16 %v1064, %v1063
    %v1075 = vld [vmem:[%s5 + $0xd] sm:$0x1]
    %v1076 = vlaneseq
    %v1077 = vshrl.u32 %v1076, 7
    %v1078 = vsub.s32 0, %v1077
    %v1079 = vrot.slane %v1075, %v1078
    %v1088 = vunpack.c.l.b16 %v1066
    %v1089 = vunpack.c.l.b16 %v1067
    %v1090 = vunpack.c.l.b16 %v1068
    %v1091 = vunpack.c.l.b16 %v1069
    %v1092 = vunpack.c.l.b16 %v1070
    %v1093 = vunpack.c.l.b16 %v1071
    %v1094 = vunpack.c.l.b16 %v1072
    %v1095 = vunpack.c.l.b16 %v1073
    %v1096 = vpack.c.b16 %v1089, %v1088
    %v1097 = vpack.c.b16 %v1091, %v1090
    %v1098 = vpack.c.b16 %v1093, %v1092
    %v1099 = vpack.c.b16 %v1095, %v1094
    %v1105 = vsel %vm531, %v1074, 0
    %1107 = vmatprep.subr.bf16.mxu0 0
    %1108 = vmatpush1.bf16.msra.mxu0 %v1096
    %1109 = vmatprep.subr.bf16.mxu0 0
    %1110 = vmatpush1.bf16.msra.mxu0 %v1097
    %1111 = vmatprep.subr.bf16.mxu0 0
    %1112 = vmatpush1.bf16.msra.mxu0 %v1098
    %1113 = vmatprep.subr.bf16.mxu0 0
    %1114 = vmatpush1.bf16.msra.mxu0 %v1099
    %1115 = vmatprep.subr.bf16.mxu0 0
    %1116 = vmatpush1.bf16.msra.mxu0 0
    %1117 = vmatprep.subr.bf16.mxu0 0
    %1118 = vmatpush1.bf16.msra.mxu0 0
    %1119 = vmatprep.subr.bf16.mxu0 0
    %1120 = vmatpush1.bf16.msra.mxu0 0
    %1121 = vmatprep.subr.bf16.mxu0 0
    %1122 = vmatpush1.bf16.msra.mxu0 0
    %1123 = vmatprep.subr.bf16.mxu0 0
    %1124 = vmatpush1.bf16.msra.mxu0 0
    %1125 = vmatprep.subr.bf16.mxu0 0
    %1126 = vmatpush1.bf16.msra.mxu0 0
    %1127 = vmatprep.subr.bf16.mxu0 0
    %1128 = vmatpush1.bf16.msra.mxu0 0
    %1129 = vmatprep.subr.bf16.mxu0 0
    %1130 = vmatpush1.bf16.msra.mxu0 0
    %1131 = vmatprep.subr.bf16.mxu0 0
    %1132 = vmatpush1.bf16.msra.mxu0 0
    %1133 = vmatprep.subr.bf16.mxu0 0
    %1134 = vmatpush1.bf16.msra.mxu0 0
    %1135 = vmatprep.subr.bf16.mxu0 0
    %1136 = vmatpush1.bf16.msra.mxu0 0
    %1137 = vmatprep.subr.bf16.mxu0 0
    %1138 = vmatpush1.bf16.msra.mxu0 0
    %1139 = vmatprep.mubr.bf16.mxu0 0
    %1140 = vmatmul.mubr.bf16.gmra.mrb[0].mxu0 %v1105
    %v1141 = vpop.f32.mrb[0].mxu0
    %v1142 = vadd.f32 %v1079, %v1141
    %v1143 = vpop.f32.mrb[0].mxu0
    %v1144 = vpop.f32.mrb[0].mxu0
    %v1145 = vadd.f32 %v1079, %v1144
    %v1146 = vpop.f32.mrb[0].mxu0
    %1147 = vdwg.mxu0
    %v1148 = vadd.f32 %v994, %v1142
    %v1149 = vadd.f32 %v995, %v1145
    %v1150 = vld [vmem:[%s5 + $0xe] sm:$0x1]
    %v1151 = vld [vmem:[%s5 + $0xf] sm:$0x1]
    %v1152 = vsel %vm70, %v1148, 0.0
    %1153 = vadd.xlane.f32.xlu0 %v1152
    %v1154 = vpop.xlane.xlu0 %1153
    %v1155 = vsel %vm70, %v1149, 0.0
    %1156 = vadd.xlane.f32.xlu0 %v1155
    %v1157 = vpop.xlane.xlu0 %1156
    %v1158 = vmul.f32 %v1154, 0.03125
    %v1159 = vmul.f32 %v1157, 0.03125
    %v1160 = vmul.f32 %v1148, %v1148
    %v1161 = vmul.f32 %v1149, %v1149
    %v1162 = vsel %vm70, %v1160, 0.0
    %1163 = vadd.xlane.f32.xlu0 %v1162
    %v1164 = vpop.xlane.xlu0 %1163
    %v1165 = vsel %vm70, %v1161, 0.0
    %1166 = vadd.xlane.f32.xlu0 %v1165
    %v1167 = vpop.xlane.xlu0 %1166
    %v1168 = vmul.f32 %v1164, 0.03125
    %v1169 = vmul.f32 %v1167, 0.03125
    %v1170 = vmul.f32 %v1158, %v1158
    %v1171 = vmul.f32 %v1159, %v1159
    %v1172 = vsub.f32 %v1168, %v1170
    %v1173 = vsub.f32 %v1169, %v1171
    %v1174 = vsub.f32 %v1148, %v1158
    %v1175 = vsub.f32 %v1149, %v1159
    %v1176 = vadd.f32 %v1172, 1e-05
    %v1177 = vadd.f32 %v1173, 1e-05
    %v1178 = vrsqrt.pop %v1176
    %v1179 = vrsqrt.pop %v1177
    %v1180 = vmul.f32 %v1174, %v1178
    %v1181 = vmul.f32 %v1175, %v1179
    %v1182 = vlaneseq
    %v1183 = vshrl.u32 %v1182, 7
    %v1184 = vsub.s32 0, %v1183
    %v1185 = vrot.slane %v1150, %v1184
    %v1186 = vmul.f32 %v1180, %v1185
    %v1187 = vmul.f32 %v1181, %v1185
    %v1188 = vlaneseq
    %v1189 = vshrl.u32 %v1188, 7
    %v1190 = vsub.s32 0, %v1189
    %v1191 = vrot.slane %v1151, %v1190
    %v1192 = vadd.f32 %v1186, %v1191
    %v1193 = vadd.f32 %v1187, %v1191
    %v1194 = vld [vmem:[%s5 + $0x10] sm:$0x1]
    %v1195 = vld [vmem:[%s5 + $0x11] sm:$0x1]
    %v1196 = vsel %vm70, %v1192, 0.0
    %1197 = vadd.xlane.f32.xlu0 %v1196
    %v1198 = vpop.xlane.xlu0 %1197
    %v1199 = vsel %vm70, %v1193, 0.0
    %1200 = vadd.xlane.f32.xlu0 %v1199
    %v1201 = vpop.xlane.xlu0 %1200
    %v1202 = vmul.f32 %v1198, 0.03125
    %v1203 = vmul.f32 %v1201, 0.03125
    %v1204 = vmul.f32 %v1192, %v1192
    %v1205 = vmul.f32 %v1193, %v1193
    %v1206 = vsel %vm70, %v1204, 0.0
    %1207 = vadd.xlane.f32.xlu0 %v1206
    %v1208 = vpop.xlane.xlu0 %1207
    %v1209 = vsel %vm70, %v1205, 0.0
    %1210 = vadd.xlane.f32.xlu0 %v1209
    %v1211 = vpop.xlane.xlu0 %1210
    %v1212 = vmul.f32 %v1208, 0.03125
    %v1213 = vmul.f32 %v1211, 0.03125
    %v1214 = vmul.f32 %v1202, %v1202
    %v1215 = vmul.f32 %v1203, %v1203
    %v1216 = vsub.f32 %v1212, %v1214
    %v1217 = vsub.f32 %v1213, %v1215
    %v1218 = vsub.f32 %v1192, %v1202
    %v1219 = vsub.f32 %v1193, %v1203
    %v1220 = vadd.f32 %v1216, 1e-05
    %v1221 = vadd.f32 %v1217, 1e-05
    %v1222 = vrsqrt.pop %v1220
    %v1223 = vrsqrt.pop %v1221
    %v1224 = vmul.f32 %v1218, %v1222
    %v1225 = vmul.f32 %v1219, %v1223
    %v1226 = vlaneseq
    %v1227 = vshrl.u32 %v1226, 7
    %v1228 = vsub.s32 0, %v1227
    %v1229 = vrot.slane %v1194, %v1228
    %v1230 = vmul.f32 %v1224, %v1229
    %v1231 = vmul.f32 %v1225, %v1229
    %v1232 = vlaneseq
    %v1233 = vshrl.u32 %v1232, 7
    %v1234 = vsub.s32 0, %v1233
    %v1235 = vrot.slane %v1195, %v1234
    %v1236 = vadd.f32 %v1230, %v1235
    %v1237 = vadd.f32 %v1231, %v1235
    %v1238 = vld [vmem:[%s1] sm:$0xff]
    %v1239 = vld [vmem:[%s1 + $0x8] sm:$0xff]
    %s1240 = scalar_lea.vmem [#allocation2], 256
    %v1241 = vld [vmem:[%s1240] sm:$0xf]
    %v1242 = vld [vmem:[%s1240 + $0x4] sm:$0xf]
    %v1243 = vld [vmem:[%s1240 + $0x8] sm:$0xf]
    %v1244 = vld [vmem:[%s1240 + $0xc] sm:$0xf]
    %v1245 = vld [vmem:[%s5 + $0x12] sm:$0x1]
    %v1246 = vpack.c.bf16 %v1239, %v1238
    %v1247 = vlaneseq
    %v1248 = vshrl.u32 %v1247, 7
    %v1249 = vsub.s32 0, %v1248
    %v1250 = vrot.slane %v1245, %v1249
    %v1255 = vunpack.c.l.b16 %v1241
    %v1256 = vunpack.c.l.b16 %v1242
    %v1257 = vunpack.c.l.b16 %v1243
    %v1258 = vunpack.c.l.b16 %v1244
    %v1259 = vpack.c.b16 %v1256, %v1255
    %v1260 = vpack.c.b16 %v1258, %v1257
    %v1264 = vsel %vm70, %v1246, 0
    %1266 = vmatprep.subr.bf16.mxu0 0
    %1267 = vmatpush1.bf16.msra.mxu0 %v1259
    %1268 = vmatprep.subr.bf16.mxu0 0
    %1269 = vmatpush1.bf16.msra.mxu0 %v1260
    %1270 = vmatprep.subr.bf16.mxu0 0
    %1271 = vmatpush1.bf16.msra.mxu0 0
    %1272 = vmatprep.subr.bf16.mxu0 0
    %1273 = vmatpush1.bf16.msra.mxu0 0
    %1274 = vmatprep.subr.bf16.mxu0 0
    %1275 = vmatpush1.bf16.msra.mxu0 0
    %1276 = vmatprep.subr.bf16.mxu0 0
    %1277 = vmatpush1.bf16.msra.mxu0 0
    %1278 = vmatprep.subr.bf16.mxu0 0
    %1279 = vmatpush1.bf16.msra.mxu0 0
    %1280 = vmatprep.subr.bf16.mxu0 0
    %1281 = vmatpush1.bf16.msra.mxu0 0
    %1282 = vmatprep.subr.bf16.mxu0 0
    %1283 = vmatpush1.bf16.msra.mxu0 0
    %1284 = vmatprep.subr.bf16.mxu0 0
    %1285 = vmatpush1.bf16.msra.mxu0 0
    %1286 = vmatprep.subr.bf16.mxu0 0
    %1287 = vmatpush1.bf16.msra.mxu0 0
    %1288 = vmatprep.subr.bf16.mxu0 0
    %1289 = vmatpush1.bf16.msra.mxu0 0
    %1290 = vmatprep.subr.bf16.mxu0 0
    %1291 = vmatpush1.bf16.msra.mxu0 0
    %1292 = vmatprep.subr.bf16.mxu0 0
    %1293 = vmatpush1.bf16.msra.mxu0 0
    %1294 = vmatprep.subr.bf16.mxu0 0
    %1295 = vmatpush1.bf16.msra.mxu0 0
    %1296 = vmatprep.subr.bf16.mxu0 0
    %1297 = vmatpush1.bf16.msra.mxu0 0
    %1298 = vmatprep.mubr.bf16.mxu0 0
    %1299 = vmatmul.mubr.bf16.gmra.mrb[0].mxu0 %v1264
    %v1300 = vpop.f32.mrb[0].mxu0
    %v1301 = vadd.f32 %v1250, %v1300
    %v1302 = vpop.f32.mrb[0].mxu0
    %v1303 = vpop.f32.mrb[0].mxu0
    %v1304 = vadd.f32 %v1250, %v1303
    %v1305 = vpop.f32.mrb[0].mxu0
    %1306 = vdwg.mxu0
    %1309 = vrot.lane.b32.xlu0 %v1301, 112
    %v1310 = vpop.permute.xlu0 %1309
    %1311 = vrot.lane.b32.xlu0 %v1304, 112
    %v1312 = vpop.permute.xlu0 %1311
    %v1315 = vpack.c.bf16 %v1304, %v1301
    %v1316 = vpack.c.bf16 %v1312, %v1310
    %1319 = vrot.lane.b32.xlu0 %v1315, 96
    %v1320 = vpop.permute.xlu0 %1319
    %1321 = vrot.lane.b32.xlu0 %v1316, 96
    %v1322 = vpop.permute.xlu0 %1321
    %v1324 = vsel %vm131, %v1315, 0
    %v1327 = vsel %vm131, %v1316, 0
    %v1330 = vsel %vm131, %v1320, 0
    %v1333 = vsel %vm131, %v1322, 0
    %1335 = vmatprep.subr.bf16.mxu0 0
    %1336 = vmatpush1.bf16.xpose.msra.mxu0 %v1330
    %1337 = vmatprep.subr.bf16.mxu0 0
    %1338 = vmatpush1.bf16.xpose.msra.mxu0 %v1333
    %1339 = vmatprep.subr.bf16.mxu0 0
    %1340 = vmatpush1.bf16.xpose.msra.mxu0 0
    %1341 = vmatprep.subr.bf16.mxu0 0
    %1342 = vmatpush1.bf16.xpose.msra.mxu0 0
    %1343 = vmatprep.subr.bf16.mxu0 0
    %1344 = vmatpush1.bf16.xpose.msra.mxu0 0
    %1345 = vmatprep.subr.bf16.mxu0 0
    %1346 = vmatpush1.bf16.xpose.msra.mxu0 0
    %1347 = vmatprep.subr.bf16.mxu0 0
    %1348 = vmatpush1.bf16.xpose.msra.mxu0 0
    %1349 = vmatprep.subr.bf16.mxu0 0
    %1350 = vmatpush1.bf16.xpose.msra.mxu0 0
    %1351 = vmatprep.subr.bf16.mxu0 0
    %1352 = vmatpush1.bf16.xpose.msra.mxu0 0
    %1353 = vmatprep.subr.bf16.mxu0 0
    %1354 = vmatpush1.bf16.xpose.msra.mxu0 0
    %1355 = vmatprep.subr.bf16.mxu0 0
    %1356 = vmatpush1.bf16.xpose.msra.mxu0 0
    %1357 = vmatprep.subr.bf16.mxu0 0
    %1358 = vmatpush1.bf16.xpose.msra.mxu0 0
    %1359 = vmatprep.subr.bf16.mxu0 0
    %1360 = vmatpush1.bf16.xpose.msra.mxu0 0
    %1361 = vmatprep.subr.bf16.mxu0 0
    %1362 = vmatpush1.bf16.xpose.msra.mxu0 0
    %1363 = vmatprep.subr.bf16.mxu0 0
    %1364 = vmatpush1.bf16.xpose.msra.mxu0 0
    %1365 = vmatprep.subr.bf16.mxu0 0
    %1366 = vmatpush1.bf16.xpose.msra.mxu0 0
    %1367 = vmatprep.mubr.bf16.mxu0 0
    %1368 = vmatmul.mubr.bf16.gmra.mrb[0].mxu0 %v1324
    %v1369 = vpop.f32.mrb[0].mxu0
    %v1370 = vadd.f32 %v42, %v1369
    %v1371 = vpop.f32.mrb[0].mxu0
    %v1372 = vpop.f32.mrb[0].mxu0
    %v1373 = vadd.f32 %v43, %v1372
    %v1374 = vpop.f32.mrb[0].mxu0
    %1375 = vmatprep.mubr.bf16.mxu0 0
    %1376 = vmatmul.mubr.bf16.gmra.mrb[0].mxu0 %v1327
    %v1377 = vpop.f32.mrb[0].mxu0
    %v1378 = vadd.f32 %v44, %v1377
    %v1379 = vpop.f32.mrb[0].mxu0
    %v1380 = vpop.f32.mrb[0].mxu0
    %v1381 = vadd.f32 %v45, %v1380
    %v1382 = vpop.f32.mrb[0].mxu0
    %1383 = vdwg.mxu0
    %v1384 = vsel %vm70, %v1370, -inf
    %1385 = vmax.xlane.f32.xlu0 %v1384
    %v1386 = vpop.xlane.xlu0 %1385
    %v1387 = vsel %vm70, %v1373, -inf
    %1388 = vmax.xlane.f32.xlu0 %v1387
    %v1389 = vpop.xlane.xlu0 %1388
    %v1390 = vsel %vm70, %v1378, -inf
    %1391 = vmax.xlane.f32.xlu0 %v1390
    %v1392 = vpop.xlane.xlu0 %1391
    %v1393 = vsel %vm70, %v1381, -inf
    %1394 = vmax.xlane.f32.xlu0 %v1393
    %v1395 = vpop.xlane.xlu0 %1394
    %v1396 = vsub.f32 %v1370, %v1386
    %v1397 = vsub.f32 %v1373, %v1389
    %v1398 = vsub.f32 %v1378, %v1392
    %v1399 = vsub.f32 %v1381, %v1395
    %v1400 = vmul.f32 %v1396, 1.442695
    %v1401 = vpow.pop %v1400
    %v1402 = vmul.f32 %v1397, 1.442695
    %v1403 = vpow.pop %v1402
    %v1404 = vmul.f32 %v1398, 1.442695
    %v1405 = vpow.pop %v1404
    %v1406 = vmul.f32 %v1399, 1.442695
    %v1407 = vpow.pop %v1406
    %v1408 = vsel %vm70, %v1401, 0.0
    %1409 = vadd.xlane.f32.xlu0 %v1408
    %v1410 = vpop.xlane.xlu0 %1409
    %v1411 = vsel %vm70, %v1403, 0.0
    %1412 = vadd.xlane.f32.xlu0 %v1411
    %v1413 = vpop.xlane.xlu0 %1412
    %v1414 = vsel %vm70, %v1405, 0.0
    %1415 = vadd.xlane.f32.xlu0 %v1414
    %v1416 = vpop.xlane.xlu0 %1415
    %v1417 = vsel %vm70, %v1407, 0.0
    %1418 = vadd.xlane.f32.xlu0 %v1417
    %v1419 = vpop.xlane.xlu0 %1418
    %v1420 = vrcp.pop %v1410
    %v1421 = vrcp.pop %v1413
    %v1422 = vrcp.pop %v1416
    %v1423 = vrcp.pop %v1419
    %v1424 = vmul.f32 %v1401, %v1420
    %v1425 = vmul.f32 %v1403, %v1421
    %v1426 = vmul.f32 %v1405, %v1422
    %v1427 = vmul.f32 %v1407, %v1423
    %v1428 = vpack.c.bf16 %v1425, %v1424
    %v1429 = vpack.c.bf16 %v1427, %v1426
    %1430 = vrot.lane.b32.xlu0 %v1315, 64
    %v1431 = vpop.permute.xlu0 %1430
    %1432 = vrot.lane.b32.xlu0 %v1316, 64
    %v1433 = vpop.permute.xlu0 %1432
    %v1437 = vsel %vm70, %v1428, 0
    %v1440 = vsel %vm70, %v1429, 0
    %1442 = vmatprep.subr.bf16.mxu0 0
    %1443 = vmatpush1.bf16.msra.mxu0 %v1431
    %1444 = vmatprep.subr.bf16.mxu0 0
    %1445 = vmatpush1.bf16.msra.mxu0 %v1433
    %1446 = vmatprep.subr.bf16.mxu0 0
    %1447 = vmatpush1.bf16.msra.mxu0 0
    %1448 = vmatprep.subr.bf16.mxu0 0
    %1449 = vmatpush1.bf16.msra.mxu0 0
    %1450 = vmatprep.subr.bf16.mxu0 0
    %1451 = vmatpush1.bf16.msra.mxu0 0
    %1452 = vmatprep.subr.bf16.mxu0 0
    %1453 = vmatpush1.bf16.msra.mxu0 0
    %1454 = vmatprep.subr.bf16.mxu0 0
    %1455 = vmatpush1.bf16.msra.mxu0 0
    %1456 = vmatprep.subr.bf16.mxu0 0
    %1457 = vmatpush1.bf16.msra.mxu0 0
    %1458 = vmatprep.subr.bf16.mxu0 0
    %1459 = vmatpush1.bf16.msra.mxu0 0
    %1460 = vmatprep.subr.bf16.mxu0 0
    %1461 = vmatpush1.bf16.msra.mxu0 0
    %1462 = vmatprep.subr.bf16.mxu0 0
    %1463 = vmatpush1.bf16.msra.mxu0 0
    %1464 = vmatprep.subr.bf16.mxu0 0
    %1465 = vmatpush1.bf16.msra.mxu0 0
    %1466 = vmatprep.subr.bf16.mxu0 0
    %1467 = vmatpush1.bf16.msra.mxu0 0
    %1468 = vmatprep.subr.bf16.mxu0 0
    %1469 = vmatpush1.bf16.msra.mxu0 0
    %1470 = vmatprep.subr.bf16.mxu0 0
    %1471 = vmatpush1.bf16.msra.mxu0 0
    %1472 = vmatprep.subr.bf16.mxu0 0
    %1473 = vmatpush1.bf16.msra.mxu0 0
    %1474 = vmatprep.mubr.bf16.mxu0 0
    %1475 = vmatmul.mubr.bf16.gmra.mrb[0].mxu0 %v1437
    %v1476 = vpop.f32.mrb[0].mxu0
    %v1477 = vadd.f32 0.0, %v1476
    %v1478 = vpop.f32.mrb[0].mxu0
    %v1479 = vpop.f32.mrb[0].mxu0
    %v1480 = vadd.f32 0.0, %v1479
    %v1481 = vpop.f32.mrb[0].mxu0
    %1482 = vmatprep.mubr.bf16.mxu0 0
    %1483 = vmatmul.mubr.bf16.gmra.mrb[0].mxu0 %v1440
    %v1484 = vpop.f32.mrb[0].mxu0
    %v1485 = vadd.f32 0.0, %v1484
    %v1486 = vpop.f32.mrb[0].mxu0
    %v1487 = vpop.f32.mrb[0].mxu0
    %v1488 = vadd.f32 0.0, %v1487
    %v1489 = vpop.f32.mrb[0].mxu0
    %1490 = vdwg.mxu0
    %1493 = vrot.lane.b32.xlu0 %v1485, 16
    %v1494 = vpop.permute.xlu0 %1493
    %1495 = vrot.lane.b32.xlu0 %v1488, 16
    %v1496 = vpop.permute.xlu0 %1495
    %v1499 = vsel %vm131, %v1477, %v1494
    %v1500 = vsel %vm131, %v1480, %v1496
    %s1501 = scalar_lea.vmem [#allocation2], 288
    %v1502 = vld [vmem:[%s1501] sm:$0xf]
    %v1503 = vld [vmem:[%s1501 + $0x4] sm:$0xf]
    %v1504 = vld [vmem:[%s1501 + $0x8] sm:$0xf]
    %v1505 = vld [vmem:[%s1501 + $0xc] sm:$0xf]
    %v1506 = vpack.c.bf16 %v1500, %v1499
    %v1507 = vld [vmem:[%s5 + $0x13] sm:$0x1]
    %v1508 = vlaneseq
    %v1509 = vshrl.u32 %v1508, 7
    %v1510 = vsub.s32 0, %v1509
    %v1511 = vrot.slane %v1507, %v1510
    %v1516 = vunpack.c.l.b16 %v1502
    %v1517 = vunpack.c.l.b16 %v1503
    %v1518 = vunpack.c.l.b16 %v1504
    %v1519 = vunpack.c.l.b16 %v1505
    %v1520 = vpack.c.b16 %v1517, %v1516
    %v1521 = vpack.c.b16 %v1519, %v1518
    %v1525 = vsel %vm70, %v1506, 0
    %1527 = vmatprep.subr.bf16.mxu0 0
    %1528 = vmatpush1.bf16.msra.mxu0 %v1520
    %1529 = vmatprep.subr.bf16.mxu0 0
    %1530 = vmatpush1.bf16.msra.mxu0 %v1521
    %1531 = vmatprep.subr.bf16.mxu0 0
    %1532 = vmatpush1.bf16.msra.mxu0 0
    %1533 = vmatprep.subr.bf16.mxu0 0
    %1534 = vmatpush1.bf16.msra.mxu0 0
    %1535 = vmatprep.subr.bf16.mxu0 0
    %1536 = vmatpush1.bf16.msra.mxu0 0
    %1537 = vmatprep.subr.bf16.mxu0 0
    %1538 = vmatpush1.bf16.msra.mxu0 0
    %1539 = vmatprep.subr.bf16.mxu0 0
    %1540 = vmatpush1.bf16.msra.mxu0 0
    %1541 = vmatprep.subr.bf16.mxu0 0
    %1542 = vmatpush1.bf16.msra.mxu0 0
    %1543 = vmatprep.subr.bf16.mxu0 0
    %1544 = vmatpush1.bf16.msra.mxu0 0
    %1545 = vmatprep.subr.bf16.mxu0 0
    %1546 = vmatpush1.bf16.msra.mxu0 0
    %1547 = vmatprep.subr.bf16.mxu0 0
    %1548 = vmatpush1.bf16.msra.mxu0 0
    %1549 = vmatprep.subr.bf16.mxu0 0
    %1550 = vmatpush1.bf16.msra.mxu0 0
    %1551 = vmatprep.subr.bf16.mxu0 0
    %1552 = vmatpush1.bf16.msra.mxu0 0
    %1553 = vmatprep.subr.bf16.mxu0 0
    %1554 = vmatpush1.bf16.msra.mxu0 0
    %1555 = vmatprep.subr.bf16.mxu0 0
    %1556 = vmatpush1.bf16.msra.mxu0 0
    %1557 = vmatprep.subr.bf16.mxu0 0
    %1558 = vmatpush1.bf16.msra.mxu0 0
    %1559 = vmatprep.mubr.bf16.mxu0 0
    %1560 = vmatmul.mubr.bf16.gmra.mrb[0].mxu0 %v1525
    %v1561 = vpop.f32.mrb[0].mxu0
    %v1562 = vadd.f32 %v1511, %v1561
    %v1563 = vpop.f32.mrb[0].mxu0
    %v1564 = vpop.f32.mrb[0].mxu0
    %v1565 = vadd.f32 %v1511, %v1564
    %v1566 = vpop.f32.mrb[0].mxu0
    %1567 = vdwg.mxu0
    %v1568 = vadd.f32 %v1238, %v1562
    %v1569 = vadd.f32 %v1239, %v1565
    %v1570 = vld [vmem:[%s5 + $0x14] sm:$0x1]
    %v1571 = vld [vmem:[%s5 + $0x15] sm:$0x1]
    %v1572 = vsel %vm70, %v1568, 0.0
    %1573 = vadd.xlane.f32.xlu0 %v1572
    %v1574 = vpop.xlane.xlu0 %1573
    %v1575 = vsel %vm70, %v1569, 0.0
    %1576 = vadd.xlane.f32.xlu0 %v1575
    %v1577 = vpop.xlane.xlu0 %1576
    %v1578 = vmul.f32 %v1574, 0.03125
    %v1579 = vmul.f32 %v1577, 0.03125
    %v1580 = vmul.f32 %v1568, %v1568
    %v1581 = vmul.f32 %v1569, %v1569
    %v1582 = vsel %vm70, %v1580, 0.0
    %1583 = vadd.xlane.f32.xlu0 %v1582
    %v1584 = vpop.xlane.xlu0 %1583
    %v1585 = vsel %vm70, %v1581, 0.0
    %1586 = vadd.xlane.f32.xlu0 %v1585
    %v1587 = vpop.xlane.xlu0 %1586
    %v1588 = vmul.f32 %v1584, 0.03125
    %v1589 = vmul.f32 %v1587, 0.03125
    %v1590 = vmul.f32 %v1578, %v1578
    %v1591 = vmul.f32 %v1579, %v1579
    %v1592 = vsub.f32 %v1588, %v1590
    %v1593 = vsub.f32 %v1589, %v1591
    %v1594 = vsub.f32 %v1568, %v1578
    %v1595 = vsub.f32 %v1569, %v1579
    %v1596 = vadd.f32 %v1592, 1e-05
    %v1597 = vadd.f32 %v1593, 1e-05
    %v1598 = vrsqrt.pop %v1596
    %v1599 = vrsqrt.pop %v1597
    %v1600 = vmul.f32 %v1594, %v1598
    %v1601 = vmul.f32 %v1595, %v1599
    %v1602 = vlaneseq
    %v1603 = vshrl.u32 %v1602, 7
    %v1604 = vsub.s32 0, %v1603
    %v1605 = vrot.slane %v1570, %v1604
    %v1606 = vmul.f32 %v1600, %v1605
    %v1607 = vmul.f32 %v1601, %v1605
    %v1608 = vlaneseq
    %v1609 = vshrl.u32 %v1608, 7
    %v1610 = vsub.s32 0, %v1609
    %v1611 = vrot.slane %v1571, %v1610
    %v1612 = vadd.f32 %v1606, %v1611
    %v1613 = vadd.f32 %v1607, %v1611
    %s1614 = scalar_lea.vmem [#allocation2], 320
    %v1615 = vld [vmem:[%s1614] sm:$0xf]
    %v1616 = vld [vmem:[%s1614 + $0x4] sm:$0xf]
    %v1617 = vld [vmem:[%s1614 + $0x8] sm:$0xf]
    %v1618 = vld [vmem:[%s1614 + $0xc] sm:$0xf]
    %v1619 = vld [vmem:[%s5 + $0x16] sm:$0x1]
    %v1620 = vpack.c.bf16 %v1613, %v1612
    %v1621 = vlaneseq
    %v1622 = vshrl.u32 %v1621, 7
    %v1623 = vsub.s32 0, %v1622
    %v1624 = vrot.slane %v1619, %v1623
    %v1629 = vunpack.c.l.b16 %v1615
    %v1630 = vunpack.c.l.b16 %v1616
    %v1631 = vunpack.c.l.b16 %v1617
    %v1632 = vunpack.c.l.b16 %v1618
    %v1633 = vpack.c.b16 %v1630, %v1629
    %v1634 = vpack.c.b16 %v1632, %v1631
    %v1638 = vsel %vm70, %v1620, 0
    %1640 = vmatprep.subr.bf16.mxu0 0
    %1641 = vmatpush1.bf16.msra.mxu0 %v1633
    %1642 = vmatprep.subr.bf16.mxu0 0
    %1643 = vmatpush1.bf16.msra.mxu0 %v1634
    %1644 = vmatprep.subr.bf16.mxu0 0
    %1645 = vmatpush1.bf16.msra.mxu0 0
    %1646 = vmatprep.subr.bf16.mxu0 0
    %1647 = vmatpush1.bf16.msra.mxu0 0
    %1648 = vmatprep.subr.bf16.mxu0 0
    %1649 = vmatpush1.bf16.msra.mxu0 0
    %1650 = vmatprep.subr.bf16.mxu0 0
    %1651 = vmatpush1.bf16.msra.mxu0 0
    %1652 = vmatprep.subr.bf16.mxu0 0
    %1653 = vmatpush1.bf16.msra.mxu0 0
    %1654 = vmatprep.subr.bf16.mxu0 0
    %1655 = vmatpush1.bf16.msra.mxu0 0
    %1656 = vmatprep.subr.bf16.mxu0 0
    %1657 = vmatpush1.bf16.msra.mxu0 0
    %1658 = vmatprep.subr.bf16.mxu0 0
    %1659 = vmatpush1.bf16.msra.mxu0 0
    %1660 = vmatprep.subr.bf16.mxu0 0
    %1661 = vmatpush1.bf16.msra.mxu0 0
    %1662 = vmatprep.subr.bf16.mxu0 0
    %1663 = vmatpush1.bf16.msra.mxu0 0
    %1664 = vmatprep.subr.bf16.mxu0 0
    %1665 = vmatpush1.bf16.msra.mxu0 0
    %1666 = vmatprep.subr.bf16.mxu0 0
    %1667 = vmatpush1.bf16.msra.mxu0 0
    %1668 = vmatprep.subr.bf16.mxu0 0
    %1669 = vmatpush1.bf16.msra.mxu0 0
    %1670 = vmatprep.subr.bf16.mxu0 0
    %1671 = vmatpush1.bf16.msra.mxu0 0
    %1672 = vmatprep.mubr.bf16.mxu0 0
    %1673 = vmatmul.mubr.bf16.gmra.mrb[0].mxu0 %v1638
    %v1674 = vpop.f32.mrb[0].mxu0
    %v1675 = vadd.f32 %v1624, %v1674
    %v1676 = vpop.f32.mrb[0].mxu0
    %v1677 = vpop.f32.mrb[0].mxu0
    %v1678 = vadd.f32 %v1624, %v1677
    %v1679 = vpop.f32.mrb[0].mxu0
    %1680 = vdwg.mxu0
    %v1681 = vpack.c.bf16 %v1237, %v1236
    %1682 = vrot.lane.b32.xlu0 %v1633, 96
    %v1683 = vpop.permute.xlu0 %1682
    %1684 = vrot.lane.b32.xlu0 %v1634, 96
    %v1685 = vpop.permute.xlu0 %1684
    %1689 = vrot.lane.b32.xlu0 %v1624, 96
    %v1690 = vpop.permute.xlu0 %1689
    %v1693 = vsel %vm70, %v1681, 0
    %1695 = vmatprep.subr.bf16.mxu0 0
    %1696 = vmatpush1.bf16.msra.mxu0 %v1683
    %1697 = vmatprep.subr.bf16.mxu0 0
    %1698 = vmatpush1.bf16.msra.mxu0 %v1685
    %1699 = vmatprep.subr.bf16.mxu0 0
    %1700 = vmatpush1.bf16.msra.mxu0 0
    %1701 = vmatprep.subr.bf16.mxu0 0
    %1702 = vmatpush1.bf16.msra.mxu0 0
    %1703 = vmatprep.subr.bf16.mxu0 0
    %1704 = vmatpush1.bf16.msra.mxu0 0
    %1705 = vmatprep.subr.bf16.mxu0 0
    %1706 = vmatpush1.bf16.msra.mxu0 0
    %1707 = vmatprep.subr.bf16.mxu0 0
    %1708 = vmatpush1.bf16.msra.mxu0 0
    %1709 = vmatprep.subr.bf16.mxu0 0
    %1710 = vmatpush1.bf16.msra.mxu0 0
    %1711 = vmatprep.subr.bf16.mxu0 0
    %1712 = vmatpush1.bf16.msra.mxu0 0
    %1713 = vmatprep.subr.bf16.mxu0 0
    %1714 = vmatpush1.bf16.msra.mxu0 0
    %1715 = vmatprep.subr.bf16.mxu0 0
    %1716 = vmatpush1.bf16.msra.mxu0 0
    %1717 = vmatprep.subr.bf16.mxu0 0
    %1718 = vmatpush1.bf16.msra.mxu0 0
    %1719 = vmatprep.subr.bf16.mxu0 0
    %1720 = vmatpush1.bf16.msra.mxu0 0
    %1721 = vmatprep.subr.bf16.mxu0 0
    %1722 = vmatpush1.bf16.msra.mxu0 0
    %1723 = vmatprep.subr.bf16.mxu0 0
    %1724 = vmatpush1.bf16.msra.mxu0 0
    %1725 = vmatprep.subr.bf16.mxu0 0
    %1726 = vmatpush1.bf16.msra.mxu0 0
    %1727 = vmatprep.mubr.bf16.mxu0 0
    %1728 = vmatmul.mubr.bf16.gmra.mrb[0].mxu0 %v1693
    %v1729 = vpop.f32.mrb[0].mxu0
    %v1730 = vadd.f32 %v1690, %v1729
    %v1731 = vpop.f32.mrb[0].mxu0
    %v1732 = vpop.f32.mrb[0].mxu0
    %v1733 = vadd.f32 %v1690, %v1732
    %v1734 = vpop.f32.mrb[0].mxu0
    %1735 = vdwg.mxu0
    %1738 = vrot.lane.b32.xlu0 %v1675, 112
    %v1739 = vpop.permute.xlu0 %1738
    %1740 = vrot.lane.b32.xlu0 %v1678, 112
    %v1741 = vpop.permute.xlu0 %1740
    %1746 = vrot.lane.b32.xlu0 %v1730, 112
    %v1747 = vpop.permute.xlu0 %1746
    %1748 = vrot.lane.b32.xlu0 %v1733, 112
    %v1749 = vpop.permute.xlu0 %1748
    %v1752 = vpack.c.bf16 %v1678, %v1675
    %v1753 = vpack.c.bf16 %v1741, %v1739
    %v1754 = vpack.c.bf16 %v1733, %v1730
    %v1755 = vpack.c.bf16 %v1749, %v1747
    %v1757 = vsel %vm131, %v1752, 0
    %v1760 = vsel %vm131, %v1753, 0
    %v1763 = vsel %vm131, %v1754, 0
    %v1766 = vsel %vm131, %v1755, 0
    %1768 = vmatprep.subr.bf16.mxu0 0
    %1769 = vmatpush1.bf16.xpose.msra.mxu0 %v1763
    %1770 = vmatprep.subr.bf16.mxu0 0
    %1771 = vmatpush1.bf16.xpose.msra.mxu0 %v1766
    %1772 = vmatprep.subr.bf16.mxu0 0
    %1773 = vmatpush1.bf16.xpose.msra.mxu0 0
    %1774 = vmatprep.subr.bf16.mxu0 0
    %1775 = vmatpush1.bf16.xpose.msra.mxu0 0
    %1776 = vmatprep.subr.bf16.mxu0 0
    %1777 = vmatpush1.bf16.xpose.msra.mxu0 0
    %1778 = vmatprep.subr.bf16.mxu0 0
    %1779 = vmatpush1.bf16.xpose.msra.mxu0 0
    %1780 = vmatprep.subr.bf16.mxu0 0
    %1781 = vmatpush1.bf16.xpose.msra.mxu0 0
    %1782 = vmatprep.subr.bf16.mxu0 0
    %1783 = vmatpush1.bf16.xpose.msra.mxu0 0
    %1784 = vmatprep.subr.bf16.mxu0 0
    %1785 = vmatpush1.bf16.xpose.msra.mxu0 0
    %1786 = vmatprep.subr.bf16.mxu0 0
    %1787 = vmatpush1.bf16.xpose.msra.mxu0 0
    %1788 = vmatprep.subr.bf16.mxu0 0
    %1789 = vmatpush1.bf16.xpose.msra.mxu0 0
    %1790 = vmatprep.subr.bf16.mxu0 0
    %1791 = vmatpush1.bf16.xpose.msra.mxu0 0
    %1792 = vmatprep.subr.bf16.mxu0 0
    %1793 = vmatpush1.bf16.xpose.msra.mxu0 0
    %1794 = vmatprep.subr.bf16.mxu0 0
    %1795 = vmatpush1.bf16.xpose.msra.mxu0 0
    %1796 = vmatprep.subr.bf16.mxu0 0
    %1797 = vmatpush1.bf16.xpose.msra.mxu0 0
    %1798 = vmatprep.subr.bf16.mxu0 0
    %1799 = vmatpush1.bf16.xpose.msra.mxu0 0
    %1800 = vmatprep.mubr.bf16.mxu0 0
    %1801 = vmatmul.mubr.bf16.gmra.mrb[0].mxu0 %v1757
    %v1802 = vpop.f32.mrb[0].mxu0
    %v1803 = vadd.f32 %v38, %v1802
    %v1804 = vpop.f32.mrb[0].mxu0
    %v1805 = vpop.f32.mrb[0].mxu0
    %v1806 = vadd.f32 %v39, %v1805
    %v1807 = vpop.f32.mrb[0].mxu0
    %1808 = vmatprep.mubr.bf16.mxu0 0
    %1809 = vmatmul.mubr.bf16.gmra.mrb[0].mxu0 %v1760
    %v1810 = vpop.f32.mrb[0].mxu0
    %v1811 = vadd.f32 %v40, %v1810
    %v1812 = vpop.f32.mrb[0].mxu0
    %v1813 = vpop.f32.mrb[0].mxu0
    %v1814 = vadd.f32 %v41, %v1813
    %v1815 = vpop.f32.mrb[0].mxu0
    %1816 = vdwg.mxu0
    %v1817 = vsel %vm70, %v1803, -inf
    %1818 = vmax.xlane.f32.xlu0 %v1817
    %v1819 = vpop.xlane.xlu0 %1818
    %v1820 = vsel %vm70, %v1806, -inf
    %1821 = vmax.xlane.f32.xlu0 %v1820
    %v1822 = vpop.xlane.xlu0 %1821
    %v1823 = vsel %vm70, %v1811, -inf
    %1824 = vmax.xlane.f32.xlu0 %v1823
    %v1825 = vpop.xlane.xlu0 %1824
    %v1826 = vsel %vm70, %v1814, -inf
    %1827 = vmax.xlane.f32.xlu0 %v1826
    %v1828 = vpop.xlane.xlu0 %1827
    %v1829 = vsub.f32 %v1803, %v1819
    %v1830 = vsub.f32 %v1806, %v1822
    %v1831 = vsub.f32 %v1811, %v1825
    %v1832 = vsub.f32 %v1814, %v1828
    %v1833 = vmul.f32 %v1829, 1.442695
    %v1834 = vpow.pop %v1833
    %v1835 = vmul.f32 %v1830, 1.442695
    %v1836 = vpow.pop %v1835
    %v1837 = vmul.f32 %v1831, 1.442695
    %v1838 = vpow.pop %v1837
    %v1839 = vmul.f32 %v1832, 1.442695
    %v1840 = vpow.pop %v1839
    %v1841 = vsel %vm70, %v1834, 0.0
    %1842 = vadd.xlane.f32.xlu0 %v1841
    %v1843 = vpop.xlane.xlu0 %1842
    %v1844 = vsel %vm70, %v1836, 0.0
    %1845 = vadd.xlane.f32.xlu0 %v1844
    %v1846 = vpop.xlane.xlu0 %1845
    %v1847 = vsel %vm70, %v1838, 0.0
    %1848 = vadd.xlane.f32.xlu0 %v1847
    %v1849 = vpop.xlane.xlu0 %1848
    %v1850 = vsel %vm70, %v1840, 0.0
    %1851 = vadd.xlane.f32.xlu0 %v1850
    %v1852 = vpop.xlane.xlu0 %1851
    %v1853 = vrcp.pop %v1843
    %v1854 = vrcp.pop %v1846
    %v1855 = vrcp.pop %v1849
    %v1856 = vrcp.pop %v1852
    %v1857 = vmul.f32 %v1834, %v1853
    %v1858 = vmul.f32 %v1836, %v1854
    %v1859 = vmul.f32 %v1838, %v1855
    %v1860 = vmul.f32 %v1840, %v1856
    %v1861 = vpack.c.bf16 %v1858, %v1857
    %v1862 = vpack.c.bf16 %v1860, %v1859
    %1865 = vrot.lane.b32.xlu0 %v1754, 96
    %v1866 = vpop.permute.xlu0 %1865
    %1867 = vrot.lane.b32.xlu0 %v1755, 96
    %v1868 = vpop.permute.xlu0 %1867
    %v1872 = vsel %vm70, %v1861, 0
    %v1875 = vsel %vm70, %v1862, 0
    %1877 = vmatprep.subr.bf16.mxu0 0
    %1878 = vmatpush1.bf16.msra.mxu0 %v1866
    %1879 = vmatprep.subr.bf16.mxu0 0
    %1880 = vmatpush1.bf16.msra.mxu0 %v1868
    %1881 = vmatprep.subr.bf16.mxu0 0
    %1882 = vmatpush1.bf16.msra.mxu0 0
    %1883 = vmatprep.subr.bf16.mxu0 0
    %1884 = vmatpush1.bf16.msra.mxu0 0
    %1885 = vmatprep.subr.bf16.mxu0 0
    %1886 = vmatpush1.bf16.msra.mxu0 0
    %1887 = vmatprep.subr.bf16.mxu0 0
    %1888 = vmatpush1.bf16.msra.mxu0 0
    %1889 = vmatprep.subr.bf16.mxu0 0
    %1890 = vmatpush1.bf16.msra.mxu0 0
    %1891 = vmatprep.subr.bf16.mxu0 0
    %1892 = vmatpush1.bf16.msra.mxu0 0
    %1893 = vmatprep.subr.bf16.mxu0 0
    %1894 = vmatpush1.bf16.msra.mxu0 0
    %1895 = vmatprep.subr.bf16.mxu0 0
    %1896 = vmatpush1.bf16.msra.mxu0 0
    %1897 = vmatprep.subr.bf16.mxu0 0
    %1898 = vmatpush1.bf16.msra.mxu0 0
    %1899 = vmatprep.subr.bf16.mxu0 0
    %1900 = vmatpush1.bf16.msra.mxu0 0
    %1901 = vmatprep.subr.bf16.mxu0 0
    %1902 = vmatpush1.bf16.msra.mxu0 0
    %1903 = vmatprep.subr.bf16.mxu0 0
    %1904 = vmatpush1.bf16.msra.mxu0 0
    %1905 = vmatprep.subr.bf16.mxu0 0
    %1906 = vmatpush1.bf16.msra.mxu0 0
    %1907 = vmatprep.subr.bf16.mxu0 0
    %1908 = vmatpush1.bf16.msra.mxu0 0
    %1909 = vmatprep.mubr.bf16.mxu0 0
    %1910 = vmatmul.mubr.bf16.gmra.mrb[0].mxu0 %v1872
    %v1911 = vpop.f32.mrb[0].mxu0
    %v1912 = vadd.f32 0.0, %v1911
    %v1913 = vpop.f32.mrb[0].mxu0
    %v1914 = vpop.f32.mrb[0].mxu0
    %v1915 = vadd.f32 0.0, %v1914
    %v1916 = vpop.f32.mrb[0].mxu0
    %1917 = vmatprep.mubr.bf16.mxu0 0
    %1918 = vmatmul.mubr.bf16.gmra.mrb[0].mxu0 %v1875
    %v1919 = vpop.f32.mrb[0].mxu0
    %v1920 = vadd.f32 0.0, %v1919
    %v1921 = vpop.f32.mrb[0].mxu0
    %v1922 = vpop.f32.mrb[0].mxu0
    %v1923 = vadd.f32 0.0, %v1922
    %v1924 = vpop.f32.mrb[0].mxu0
    %1925 = vdwg.mxu0
    %1928 = vrot.lane.b32.xlu0 %v1920, 16
    %v1929 = vpop.permute.xlu0 %1928
    %1930 = vrot.lane.b32.xlu0 %v1923, 16
    %v1931 = vpop.permute.xlu0 %1930
    %v1934 = vsel %vm131, %v1912, %v1929
    %v1935 = vsel %vm131, %v1915, %v1931
    %s1936 = scalar_lea.vmem [#allocation2], 352
    %v1937 = vld [vmem:[%s1936] sm:$0xf]
    %v1938 = vld [vmem:[%s1936 + $0x4] sm:$0xf]
    %v1939 = vld [vmem:[%s1936 + $0x8] sm:$0xf]
    %v1940 = vld [vmem:[%s1936 + $0xc] sm:$0xf]
    %v1941 = vpack.c.bf16 %v1935, %v1934
    %v1942 = vld [vmem:[%s5 + $0x17] sm:$0x1]
    %v1943 = vlaneseq
    %v1944 = vshrl.u32 %v1943, 7
    %v1945 = vsub.s32 0, %v1944
    %v1946 = vrot.slane %v1942, %v1945
    %v1951 = vunpack.c.l.b16 %v1937
    %v1952 = vunpack.c.l.b16 %v1938
    %v1953 = vunpack.c.l.b16 %v1939
    %v1954 = vunpack.c.l.b16 %v1940
    %v1955 = vpack.c.b16 %v1952, %v1951
    %v1956 = vpack.c.b16 %v1954, %v1953
    %v1960 = vsel %vm70, %v1941, 0
    %1962 = vmatprep.subr.bf16.mxu0 0
    %1963 = vmatpush1.bf16.msra.mxu0 %v1955
    %1964 = vmatprep.subr.bf16.mxu0 0
    %1965 = vmatpush1.bf16.msra.mxu0 %v1956
    %1966 = vmatprep.subr.bf16.mxu0 0
    %1967 = vmatpush1.bf16.msra.mxu0 0
    %1968 = vmatprep.subr.bf16.mxu0 0
    %1969 = vmatpush1.bf16.msra.mxu0 0
    %1970 = vmatprep.subr.bf16.mxu0 0
    %1971 = vmatpush1.bf16.msra.mxu0 0
    %1972 = vmatprep.subr.bf16.mxu0 0
    %1973 = vmatpush1.bf16.msra.mxu0 0
    %1974 = vmatprep.subr.bf16.mxu0 0
    %1975 = vmatpush1.bf16.msra.mxu0 0
    %1976 = vmatprep.subr.bf16.mxu0 0
    %1977 = vmatpush1.bf16.msra.mxu0 0
    %1978 = vmatprep.subr.bf16.mxu0 0
    %1979 = vmatpush1.bf16.msra.mxu0 0
    %1980 = vmatprep.subr.bf16.mxu0 0
    %1981 = vmatpush1.bf16.msra.mxu0 0
    %1982 = vmatprep.subr.bf16.mxu0 0
    %1983 = vmatpush1.bf16.msra.mxu0 0
    %1984 = vmatprep.subr.bf16.mxu0 0
    %1985 = vmatpush1.bf16.msra.mxu0 0
    %1986 = vmatprep.subr.bf16.mxu0 0
    %1987 = vmatpush1.bf16.msra.mxu0 0
    %1988 = vmatprep.subr.bf16.mxu0 0
    %1989 = vmatpush1.bf16.msra.mxu0 0
    %1990 = vmatprep.subr.bf16.mxu0 0
    %1991 = vmatpush1.bf16.msra.mxu0 0
    %1992 = vmatprep.subr.bf16.mxu0 0
    %1993 = vmatpush1.bf16.msra.mxu0 0
    %1994 = vmatprep.mubr.bf16.mxu0 0
    %1995 = vmatmul.mubr.bf16.gmra.mrb[0].mxu0 %v1960
    %v1996 = vpop.f32.mrb[0].mxu0
    %v1997 = vadd.f32 %v1946, %v1996
    %v1998 = vpop.f32.mrb[0].mxu0
    %v1999 = vpop.f32.mrb[0].mxu0
    %v2000 = vadd.f32 %v1946, %v1999
    %v2001 = vpop.f32.mrb[0].mxu0
    %2002 = vdwg.mxu0
    %v2003 = vadd.f32 %v1612, %v1997
    %v2004 = vadd.f32 %v1613, %v2000
    %v2005 = vld [vmem:[%s5 + $0x18] sm:$0x1]
    %v2006 = vld [vmem:[%s5 + $0x19] sm:$0x1]
    %v2007 = vsel %vm70, %v2003, 0.0
    %2008 = vadd.xlane.f32.xlu0 %v2007
    %v2009 = vpop.xlane.xlu0 %2008
    %v2010 = vsel %vm70, %v2004, 0.0
    %2011 = vadd.xlane.f32.xlu0 %v2010
    %v2012 = vpop.xlane.xlu0 %2011
    %v2013 = vmul.f32 %v2009, 0.03125
    %v2014 = vmul.f32 %v2012, 0.03125
    %v2015 = vmul.f32 %v2003, %v2003
    %v2016 = vmul.f32 %v2004, %v2004
    %v2017 = vsel %vm70, %v2015, 0.0
    %2018 = vadd.xlane.f32.xlu0 %v2017
    %v2019 = vpop.xlane.xlu0 %2018
    %v2020 = vsel %vm70, %v2016, 0.0
    %2021 = vadd.xlane.f32.xlu0 %v2020
    %v2022 = vpop.xlane.xlu0 %2021
    %v2023 = vmul.f32 %v2019, 0.03125
    %v2024 = vmul.f32 %v2022, 0.03125
    %v2025 = vmul.f32 %v2013, %v2013
    %v2026 = vmul.f32 %v2014, %v2014
    %v2027 = vsub.f32 %v2023, %v2025
    %v2028 = vsub.f32 %v2024, %v2026
    %v2029 = vsub.f32 %v2003, %v2013
    %v2030 = vsub.f32 %v2004, %v2014
    %v2031 = vadd.f32 %v2027, 1e-05
    %v2032 = vadd.f32 %v2028, 1e-05
    %v2033 = vrsqrt.pop %v2031
    %v2034 = vrsqrt.pop %v2032
    %v2035 = vmul.f32 %v2029, %v2033
    %v2036 = vmul.f32 %v2030, %v2034
    %v2037 = vlaneseq
    %v2038 = vshrl.u32 %v2037, 7
    %v2039 = vsub.s32 0, %v2038
    %v2040 = vrot.slane %v2005, %v2039
    %v2041 = vmul.f32 %v2035, %v2040
    %v2042 = vmul.f32 %v2036, %v2040
    %v2043 = vlaneseq
    %v2044 = vshrl.u32 %v2043, 7
    %v2045 = vsub.s32 0, %v2044
    %v2046 = vrot.slane %v2006, %v2045
    %v2047 = vadd.f32 %v2041, %v2046
    %v2048 = vadd.f32 %v2042, %v2046
    %s2049 = scalar_lea.vmem [#allocation2], 384
    %v2050 = vld [vmem:[%s2049] sm:$0xf]
    %v2051 = vld [vmem:[%s2049 + $0x4] sm:$0xf]
    %v2052 = vld [vmem:[%s2049 + $0x8] sm:$0xf]
    %v2053 = vld [vmem:[%s2049 + $0xc] sm:$0xf]
    %v2054 = vpack.c.bf16 %v2048, %v2047
    %v2055 = vld [vmem:[%s5 + $0x1a] sm:$0x1]
    %v2056 = vlaneseq
    %v2057 = vshrl.u32 %v2056, 7
    %v2058 = vsub.s32 0, %v2057
    %v2059 = vrot.slane %v2055, %v2058
    %v2064 = vunpack.c.l.b16 %v2050
    %v2065 = vunpack.c.l.b16 %v2051
    %v2066 = vunpack.c.l.b16 %v2052
    %v2067 = vunpack.c.l.b16 %v2053
    %v2068 = vpack.c.b16 %v2065, %v2064
    %v2069 = vpack.c.b16 %v2067, %v2066
    %v2073 = vsel %vm70, %v2054, 0
    %2075 = vmatprep.subr.bf16.mxu0 0
    %2076 = vmatpush1.bf16.msra.mxu0 %v2068
    %2077 = vmatprep.subr.bf16.mxu0 0
    %2078 = vmatpush1.bf16.msra.mxu0 %v2069
    %2079 = vmatprep.subr.bf16.mxu0 0
    %2080 = vmatpush1.bf16.msra.mxu0 0
    %2081 = vmatprep.subr.bf16.mxu0 0
    %2082 = vmatpush1.bf16.msra.mxu0 0
    %2083 = vmatprep.subr.bf16.mxu0 0
    %2084 = vmatpush1.bf16.msra.mxu0 0
    %2085 = vmatprep.subr.bf16.mxu0 0
    %2086 = vmatpush1.bf16.msra.mxu0 0
    %2087 = vmatprep.subr.bf16.mxu0 0
    %2088 = vmatpush1.bf16.msra.mxu0 0
    %2089 = vmatprep.subr.bf16.mxu0 0
    %2090 = vmatpush1.bf16.msra.mxu0 0
    %2091 = vmatprep.subr.bf16.mxu0 0
    %2092 = vmatpush1.bf16.msra.mxu0 0
    %2093 = vmatprep.subr.bf16.mxu0 0
    %2094 = vmatpush1.bf16.msra.mxu0 0
    %2095 = vmatprep.subr.bf16.mxu0 0
    %2096 = vmatpush1.bf16.msra.mxu0 0
    %2097 = vmatprep.subr.bf16.mxu0 0
    %2098 = vmatpush1.bf16.msra.mxu0 0
    %2099 = vmatprep.subr.bf16.mxu0 0
    %2100 = vmatpush1.bf16.msra.mxu0 0
    %2101 = vmatprep.subr.bf16.mxu0 0
    %2102 = vmatpush1.bf16.msra.mxu0 0
    %2103 = vmatprep.subr.bf16.mxu0 0
    %2104 = vmatpush1.bf16.msra.mxu0 0
    %2105 = vmatprep.subr.bf16.mxu0 0
    %2106 = vmatpush1.bf16.msra.mxu0 0
    %2107 = vmatprep.mubr.bf16.mxu0 0
    %2108 = vmatmul.mubr.bf16.gmra.mrb[0].mxu0 %v2073
    %v2109 = vpop.f32.mrb[0].mxu0
    %v2110 = vadd.f32 %v2059, %v2109
    %v2111 = vpop.f32.mrb[0].mxu0
    %v2112 = vpop.f32.mrb[0].mxu0
    %v2113 = vadd.f32 %v2059, %v2112
    %v2114 = vpop.f32.mrb[0].mxu0
    %2115 = vdwg.mxu0
    %v2116 = vmax.f32 %v2110, 0.0
    %v2117 = vmax.f32 %v2113, 0.0
    %s2118 = scalar_lea.vmem [#allocation2], 416
    %v2119 = vld [vmem:[%s2118] sm:$0xf]
    %v2120 = vld [vmem:[%s2118 + $0x4] sm:$0xf]
    %v2121 = vld [vmem:[%s2118 + $0x8] sm:$0xf]
    %v2122 = vld [vmem:[%s2118 + $0xc] sm:$0xf]
    %v2123 = vld [vmem:[%s2118 + $0x10] sm:$0xf]
    %v2124 = vld [vmem:[%s2118 + $0x14] sm:$0xf]
    %v2125 = vld [vmem:[%s2118 + $0x18] sm:$0xf]
    %v2126 = vld [vmem:[%s2118 + $0x1c] sm:$0xf]
    %v2127 = vpack.c.bf16 %v2117, %v2116
    %v2128 = vld [vmem:[%s5 + $0x1b] sm:$0x1]
    %v2129 = vlaneseq
    %v2130 = vshrl.u32 %v2129, 7
    %v2131 = vsub.s32 0, %v2130
    %v2132 = vrot.slane %v2128, %v2131
    %v2141 = vunpack.c.l.b16 %v2119
    %v2142 = vunpack.c.l.b16 %v2120
    %v2143 = vunpack.c.l.b16 %v2121
    %v2144 = vunpack.c.l.b16 %v2122
    %v2145 = vunpack.c.l.b16 %v2123
    %v2146 = vunpack.c.l.b16 %v2124
    %v2147 = vunpack.c.l.b16 %v2125
    %v2148 = vunpack.c.l.b16 %v2126
    %v2149 = vpack.c.b16 %v2142, %v2141
    %v2150 = vpack.c.b16 %v2144, %v2143
    %v2151 = vpack.c.b16 %v2146, %v2145
    %v2152 = vpack.c.b16 %v2148, %v2147
    %v2158 = vsel %vm531, %v2127, 0
    %2160 = vmatprep.subr.bf16.mxu0 0
    %2161 = vmatpush1.bf16.msra.mxu0 %v2149
    %2162 = vmatprep.subr.bf16.mxu0 0
    %2163 = vmatpush1.bf16.msra.mxu0 %v2150
    %2164 = vmatprep.subr.bf16.mxu0 0
    %2165 = vmatpush1.bf16.msra.mxu0 %v2151
    %2166 = vmatprep.subr.bf16.mxu0 0
    %2167 = vmatpush1.bf16.msra.mxu0 %v2152
    %2168 = vmatprep.subr.bf16.mxu0 0
    %2169 = vmatpush1.bf16.msra.mxu0 0
    %2170 = vmatprep.subr.bf16.mxu0 0
    %2171 = vmatpush1.bf16.msra.mxu0 0
    %2172 = vmatprep.subr.bf16.mxu0 0
    %2173 = vmatpush1.bf16.msra.mxu0 0
    %2174 = vmatprep.subr.bf16.mxu0 0
    %2175 = vmatpush1.bf16.msra.mxu0 0
    %2176 = vmatprep.subr.bf16.mxu0 0
    %2177 = vmatpush1.bf16.msra.mxu0 0
    %2178 = vmatprep.subr.bf16.mxu0 0
    %2179 = vmatpush1.bf16.msra.mxu0 0
    %2180 = vmatprep.subr.bf16.mxu0 0
    %2181 = vmatpush1.bf16.msra.mxu0 0
    %2182 = vmatprep.subr.bf16.mxu0 0
    %2183 = vmatpush1.bf16.msra.mxu0 0
    %2184 = vmatprep.subr.bf16.mxu0 0
    %2185 = vmatpush1.bf16.msra.mxu0 0
    %2186 = vmatprep.subr.bf16.mxu0 0
    %2187 = vmatpush1.bf16.msra.mxu0 0
    %2188 = vmatprep.subr.bf16.mxu0 0
    %2189 = vmatpush1.bf16.msra.mxu0 0
    %2190 = vmatprep.subr.bf16.mxu0 0
    %2191 = vmatpush1.bf16.msra.mxu0 0
    %2192 = vmatprep.mubr.bf16.mxu0 0
    %2193 = vmatmul.mubr.bf16.gmra.mrb[0].mxu0 %v2158
    %v2194 = vpop.f32.mrb[0].mxu0
    %v2195 = vadd.f32 %v2132, %v2194
    %v2196 = vpop.f32.mrb[0].mxu0
    %v2197 = vpop.f32.mrb[0].mxu0
    %v2198 = vadd.f32 %v2132, %v2197
    %v2199 = vpop.f32.mrb[0].mxu0
    %2200 = vdwg.mxu0
    %v2201 = vadd.f32 %v2047, %v2195
    %v2202 = vadd.f32 %v2048, %v2198
    %v2203 = vld [vmem:[%s5 + $0x1c] sm:$0x1]
    %v2204 = vld [vmem:[%s5 + $0x1d] sm:$0x1]
    %v2205 = vsel %vm70, %v2201, 0.0
    %2206 = vadd.xlane.f32.xlu0 %v2205
    %v2207 = vpop.xlane.xlu0 %2206
    %v2208 = vsel %vm70, %v2202, 0.0
    %2209 = vadd.xlane.f32.xlu0 %v2208
    %v2210 = vpop.xlane.xlu0 %2209
    %v2211 = vmul.f32 %v2207, 0.03125
    %v2212 = vmul.f32 %v2210, 0.03125
    %v2213 = vmul.f32 %v2201, %v2201
    %v2214 = vmul.f32 %v2202, %v2202
    %v2215 = vsel %vm70, %v2213, 0.0
    %2216 = vadd.xlane.f32.xlu0 %v2215
    %v2217 = vpop.xlane.xlu0 %2216
    %v2218 = vsel %vm70, %v2214, 0.0
    %2219 = vadd.xlane.f32.xlu0 %v2218
    %v2220 = vpop.xlane.xlu0 %2219
    %v2221 = vmul.f32 %v2217, 0.03125
    %v2222 = vmul.f32 %v2220, 0.03125
    %v2223 = vmul.f32 %v2211, %v2211
    %v2224 = vmul.f32 %v2212, %v2212
    %v2225 = vsub.f32 %v2221, %v2223
    %v2226 = vsub.f32 %v2222, %v2224
    %v2227 = vsub.f32 %v2201, %v2211
    %v2228 = vsub.f32 %v2202, %v2212
    %v2229 = vadd.f32 %v2225, 1e-05
    %v2230 = vadd.f32 %v2226, 1e-05
    %v2231 = vrsqrt.pop %v2229
    %v2232 = vrsqrt.pop %v2230
    %v2233 = vmul.f32 %v2227, %v2231
    %v2234 = vmul.f32 %v2228, %v2232
    %v2235 = vlaneseq
    %v2236 = vshrl.u32 %v2235, 7
    %v2237 = vsub.s32 0, %v2236
    %v2238 = vrot.slane %v2203, %v2237
    %v2239 = vmul.f32 %v2233, %v2238
    %v2240 = vmul.f32 %v2234, %v2238
    %v2241 = vlaneseq
    %v2242 = vshrl.u32 %v2241, 7
    %v2243 = vsub.s32 0, %v2242
    %v2244 = vrot.slane %v2204, %v2243
    %v2245 = vadd.f32 %v2239, %v2244
    %v2246 = vadd.f32 %v2240, %v2244
    %s2247 = scalar_lea.vmem [#allocation2], 448
    %v2248 = vld [vmem:[%s2247] sm:$0xf]
    %v2249 = vld [vmem:[%s2247 + $0x4] sm:$0xf]
    %v2250 = vld [vmem:[%s2247 + $0x8] sm:$0xf]
    %v2251 = vld [vmem:[%s2247 + $0xc] sm:$0xf]
    %v2252 = vld [vmem:[%s5 + $0x1e] sm:$0x1]
    %v2253 = vpack.c.bf16 %v2246, %v2245
    %v2254 = vlaneseq
    %v2255 = vshrl.u32 %v2254, 7
    %v2256 = vsub.s32 0, %v2255
    %v2257 = vrot.slane %v2252, %v2256
    %v2262 = vunpack.c.l.b16 %v2248
    %v2263 = vunpack.c.l.b16 %v2249
    %v2264 = vunpack.c.l.b16 %v2250
    %v2265 = vunpack.c.l.b16 %v2251
    %v2266 = vpack.c.b16 %v2263, %v2262
    %v2267 = vpack.c.b16 %v2265, %v2264
    %v2271 = vsel %vm70, %v2253, 0
    %2273 = vmatprep.subr.bf16.mxu0 0
    %2274 = vmatpush1.bf16.msra.mxu0 %v2266
    %2275 = vmatprep.subr.bf16.mxu0 0
    %2276 = vmatpush1.bf16.msra.mxu0 %v2267
    %2277 = vmatprep.subr.bf16.mxu0 0
    %2278 = vmatpush1.bf16.msra.mxu0 0
    %2279 = vmatprep.subr.bf16.mxu0 0
    %2280 = vmatpush1.bf16.msra.mxu0 0
    %2281 = vmatprep.subr.bf16.mxu0 0
    %2282 = vmatpush1.bf16.msra.mxu0 0
    %2283 = vmatprep.subr.bf16.mxu0 0
    %2284 = vmatpush1.bf16.msra.mxu0 0
    %2285 = vmatprep.subr.bf16.mxu0 0
    %2286 = vmatpush1.bf16.msra.mxu0 0
    %2287 = vmatprep.subr.bf16.mxu0 0
    %2288 = vmatpush1.bf16.msra.mxu0 0
    %2289 = vmatprep.subr.bf16.mxu0 0
    %2290 = vmatpush1.bf16.msra.mxu0 0
    %2291 = vmatprep.subr.bf16.mxu0 0
    %2292 = vmatpush1.bf16.msra.mxu0 0
    %2293 = vmatprep.subr.bf16.mxu0 0
    %2294 = vmatpush1.bf16.msra.mxu0 0
    %2295 = vmatprep.subr.bf16.mxu0 0
    %2296 = vmatpush1.bf16.msra.mxu0 0
    %2297 = vmatprep.subr.bf16.mxu0 0
    %2298 = vmatpush1.bf16.msra.mxu0 0
    %2299 = vmatprep.subr.bf16.mxu0 0
    %2300 = vmatpush1.bf16.msra.mxu0 0
    %2301 = vmatprep.subr.bf16.mxu0 0
    %2302 = vmatpush1.bf16.msra.mxu0 0
    %2303 = vmatprep.subr.bf16.mxu0 0
    %2304 = vmatpush1.bf16.msra.mxu0 0
    %2305 = vmatprep.mubr.bf16.mxu0 0
    %2306 = vmatmul.mubr.bf16.gmra.mrb[0].mxu0 %v2271
    %v2307 = vpop.f32.mrb[0].mxu0
    %v2308 = vadd.f32 %v2257, %v2307
    %v2309 = vpop.f32.mrb[0].mxu0
    %v2310 = vpop.f32.mrb[0].mxu0
    %v2311 = vadd.f32 %v2257, %v2310
    %v2312 = vpop.f32.mrb[0].mxu0
    %2313 = vdwg.mxu0
    %2316 = vrot.lane.b32.xlu0 %v2308, 112
    %v2317 = vpop.permute.xlu0 %2316
    %2318 = vrot.lane.b32.xlu0 %v2311, 112
    %v2319 = vpop.permute.xlu0 %2318
    %v2322 = vpack.c.bf16 %v2311, %v2308
    %v2323 = vpack.c.bf16 %v2319, %v2317
    %2326 = vrot.lane.b32.xlu0 %v2322, 96
    %v2327 = vpop.permute.xlu0 %2326
    %2328 = vrot.lane.b32.xlu0 %v2323, 96
    %v2329 = vpop.permute.xlu0 %2328
    %v2331 = vsel %vm131, %v2322, 0
    %v2334 = vsel %vm131, %v2323, 0
    %v2337 = vsel %vm131, %v2327, 0
    %v2340 = vsel %vm131, %v2329, 0
    %2342 = vmatprep.subr.bf16.mxu0 0
    %2343 = vmatpush1.bf16.xpose.msra.mxu0 %v2337
    %2344 = vmatprep.subr.bf16.mxu0 0
    %2345 = vmatpush1.bf16.xpose.msra.mxu0 %v2340
    %2346 = vmatprep.subr.bf16.mxu0 0
    %2347 = vmatpush1.bf16.xpose.msra.mxu0 0
    %2348 = vmatprep.subr.bf16.mxu0 0
    %2349 = vmatpush1.bf16.xpose.msra.mxu0 0
    %2350 = vmatprep.subr.bf16.mxu0 0
    %2351 = vmatpush1.bf16.xpose.msra.mxu0 0
    %2352 = vmatprep.subr.bf16.mxu0 0
    %2353 = vmatpush1.bf16.xpose.msra.mxu0 0
    %2354 = vmatprep.subr.bf16.mxu0 0
    %2355 = vmatpush1.bf16.xpose.msra.mxu0 0
    %2356 = vmatprep.subr.bf16.mxu0 0
    %2357 = vmatpush1.bf16.xpose.msra.mxu0 0
    %2358 = vmatprep.subr.bf16.mxu0 0
    %2359 = vmatpush1.bf16.xpose.msra.mxu0 0
    %2360 = vmatprep.subr.bf16.mxu0 0
    %2361 = vmatpush1.bf16.xpose.msra.mxu0 0
    %2362 = vmatprep.subr.bf16.mxu0 0
    %2363 = vmatpush1.bf16.xpose.msra.mxu0 0
    %2364 = vmatprep.subr.bf16.mxu0 0
    %2365 = vmatpush1.bf16.xpose.msra.mxu0 0
    %2366 = vmatprep.subr.bf16.mxu0 0
    %2367 = vmatpush1.bf16.xpose.msra.mxu0 0
    %2368 = vmatprep.subr.bf16.mxu0 0
    %2369 = vmatpush1.bf16.xpose.msra.mxu0 0
    %2370 = vmatprep.subr.bf16.mxu0 0
    %2371 = vmatpush1.bf16.xpose.msra.mxu0 0
    %2372 = vmatprep.subr.bf16.mxu0 0
    %2373 = vmatpush1.bf16.xpose.msra.mxu0 0
    %2374 = vmatprep.mubr.bf16.mxu0 0
    %2375 = vmatmul.mubr.bf16.gmra.mrb[0].mxu0 %v2331
    %v2376 = vpop.f32.mrb[0].mxu0
    %v2377 = vadd.f32 %v42, %v2376
    %v2378 = vpop.f32.mrb[0].mxu0
    %v2379 = vpop.f32.mrb[0].mxu0
    %v2380 = vadd.f32 %v43, %v2379
    %v2381 = vpop.f32.mrb[0].mxu0
    %2382 = vmatprep.mubr.bf16.mxu0 0
    %2383 = vmatmul.mubr.bf16.gmra.mrb[0].mxu0 %v2334
    %v2384 = vpop.f32.mrb[0].mxu0
    %v2385 = vadd.f32 %v44, %v2384
    %v2386 = vpop.f32.mrb[0].mxu0
    %v2387 = vpop.f32.mrb[0].mxu0
    %v2388 = vadd.f32 %v45, %v2387
    %v2389 = vpop.f32.mrb[0].mxu0
    %2390 = vdwg.mxu0
    %v2391 = vsel %vm70, %v2377, -inf
    %2392 = vmax.xlane.f32.xlu0 %v2391
    %v2393 = vpop.xlane.xlu0 %2392
    %v2394 = vsel %vm70, %v2380, -inf
    %2395 = vmax.xlane.f32.xlu0 %v2394
    %v2396 = vpop.xlane.xlu0 %2395
    %v2397 = vsel %vm70, %v2385, -inf
    %2398 = vmax.xlane.f32.xlu0 %v2397
    %v2399 = vpop.xlane.xlu0 %2398
    %v2400 = vsel %vm70, %v2388, -inf
    %2401 = vmax.xlane.f32.xlu0 %v2400
    %v2402 = vpop.xlane.xlu0 %2401
    %v2403 = vsub.f32 %v2377, %v2393
    %v2404 = vsub.f32 %v2380, %v2396
    %v2405 = vsub.f32 %v2385, %v2399
    %v2406 = vsub.f32 %v2388, %v2402
    %v2407 = vmul.f32 %v2403, 1.442695
    %v2408 = vpow.pop %v2407
    %v2409 = vmul.f32 %v2404, 1.442695
    %v2410 = vpow.pop %v2409
    %v2411 = vmul.f32 %v2405, 1.442695
    %v2412 = vpow.pop %v2411
    %v2413 = vmul.f32 %v2406, 1.442695
    %v2414 = vpow.pop %v2413
    %v2415 = vsel %vm70, %v2408, 0.0
    %2416 = vadd.xlane.f32.xlu0 %v2415
    %v2417 = vpop.xlane.xlu0 %2416
    %v2418 = vsel %vm70, %v2410, 0.0
    %2419 = vadd.xlane.f32.xlu0 %v2418
    %v2420 = vpop.xlane.xlu0 %2419
    %v2421 = vsel %vm70, %v2412, 0.0
    %2422 = vadd.xlane.f32.xlu0 %v2421
    %v2423 = vpop.xlane.xlu0 %2422
    %v2424 = vsel %vm70, %v2414, 0.0
    %2425 = vadd.xlane.f32.xlu0 %v2424
    %v2426 = vpop.xlane.xlu0 %2425
    %v2427 = vrcp.pop %v2417
    %v2428 = vrcp.pop %v2420
    %v2429 = vrcp.pop %v2423
    %v2430 = vrcp.pop %v2426
    %v2431 = vmul.f32 %v2408, %v2427
    %v2432 = vmul.f32 %v2410, %v2428
    %v2433 = vmul.f32 %v2412, %v2429
    %v2434 = vmul.f32 %v2414, %v2430
    %v2435 = vpack.c.bf16 %v2432, %v2431
    %v2436 = vpack.c.bf16 %v2434, %v2433
    %2437 = vrot.lane.b32.xlu0 %v2322, 64
    %v2438 = vpop.permute.xlu0 %2437
    %2439 = vrot.lane.b32.xlu0 %v2323, 64
    %v2440 = vpop.permute.xlu0 %2439
    %v2444 = vsel %vm70, %v2435, 0
    %v2447 = vsel %vm70, %v2436, 0
    %2449 = vmatprep.subr.bf16.mxu0 0
    %2450 = vmatpush1.bf16.msra.mxu0 %v2438
    %2451 = vmatprep.subr.bf16.mxu0 0
    %2452 = vmatpush1.bf16.msra.mxu0 %v2440
    %2453 = vmatprep.subr.bf16.mxu0 0
    %2454 = vmatpush1.bf16.msra.mxu0 0
    %2455 = vmatprep.subr.bf16.mxu0 0
    %2456 = vmatpush1.bf16.msra.mxu0 0
    %2457 = vmatprep.subr.bf16.mxu0 0
    %2458 = vmatpush1.bf16.msra.mxu0 0
    %2459 = vmatprep.subr.bf16.mxu0 0
    %2460 = vmatpush1.bf16.msra.mxu0 0
    %2461 = vmatprep.subr.bf16.mxu0 0
    %2462 = vmatpush1.bf16.msra.mxu0 0
    %2463 = vmatprep.subr.bf16.mxu0 0
    %2464 = vmatpush1.bf16.msra.mxu0 0
    %2465 = vmatprep.subr.bf16.mxu0 0
    %2466 = vmatpush1.bf16.msra.mxu0 0
    %2467 = vmatprep.subr.bf16.mxu0 0
    %2468 = vmatpush1.bf16.msra.mxu0 0
    %2469 = vmatprep.subr.bf16.mxu0 0
    %2470 = vmatpush1.bf16.msra.mxu0 0
    %2471 = vmatprep.subr.bf16.mxu0 0
    %2472 = vmatpush1.bf16.msra.mxu0 0
    %2473 = vmatprep.subr.bf16.mxu0 0
    %2474 = vmatpush1.bf16.msra.mxu0 0
    %2475 = vmatprep.subr.bf16.mxu0 0
    %2476 = vmatpush1.bf16.msra.mxu0 0
    %2477 = vmatprep.subr.bf16.mxu0 0
    %2478 = vmatpush1.bf16.msra.mxu0 0
    %2479 = vmatprep.subr.bf16.mxu0 0
    %2480 = vmatpush1.bf16.msra.mxu0 0
    %2481 = vmatprep.mubr.bf16.mxu0 0
    %2482 = vmatmul.mubr.bf16.gmra.mrb[0].mxu0 %v2444
    %v2483 = vpop.f32.mrb[0].mxu0
    %v2484 = vadd.f32 0.0, %v2483
    %v2485 = vpop.f32.mrb[0].mxu0
    %v2486 = vpop.f32.mrb[0].mxu0
    %v2487 = vadd.f32 0.0, %v2486
    %v2488 = vpop.f32.mrb[0].mxu0
    %2489 = vmatprep.mubr.bf16.mxu0 0
    %2490 = vmatmul.mubr.bf16.gmra.mrb[0].mxu0 %v2447
    %v2491 = vpop.f32.mrb[0].mxu0
    %v2492 = vadd.f32 0.0, %v2491
    %v2493 = vpop.f32.mrb[0].mxu0
    %v2494 = vpop.f32.mrb[0].mxu0
    %v2495 = vadd.f32 0.0, %v2494
    %v2496 = vpop.f32.mrb[0].mxu0
    %2497 = vdwg.mxu0
    %2500 = vrot.lane.b32.xlu0 %v2492, 16
    %v2501 = vpop.permute.xlu0 %2500
    %2502 = vrot.lane.b32.xlu0 %v2495, 16
    %v2503 = vpop.permute.xlu0 %2502
    %v2506 = vsel %vm131, %v2484, %v2501
    %v2507 = vsel %vm131, %v2487, %v2503
    %s2508 = scalar_lea.vmem [#allocation2], 480
    %v2509 = vld [vmem:[%s2508] sm:$0xf]
    %v2510 = vld [vmem:[%s2508 + $0x4] sm:$0xf]
    %v2511 = vld [vmem:[%s2508 + $0x8] sm:$0xf]
    %v2512 = vld [vmem:[%s2508 + $0xc] sm:$0xf]
    %v2513 = vpack.c.bf16 %v2507, %v2506
    %v2514 = vld [vmem:[%s5 + $0x1f] sm:$0x1]
    %v2515 = vlaneseq
    %v2516 = vshrl.u32 %v2515, 7
    %v2517 = vsub.s32 0, %v2516
    %v2518 = vrot.slane %v2514, %v2517
    %v2523 = vunpack.c.l.b16 %v2509
    %v2524 = vunpack.c.l.b16 %v2510
    %v2525 = vunpack.c.l.b16 %v2511
    %v2526 = vunpack.c.l.b16 %v2512
    %v2527 = vpack.c.b16 %v2524, %v2523
    %v2528 = vpack.c.b16 %v2526, %v2525
    %v2532 = vsel %vm70, %v2513, 0
    %2534 = vmatprep.subr.bf16.mxu0 0
    %2535 = vmatpush1.bf16.msra.mxu0 %v2527
    %2536 = vmatprep.subr.bf16.mxu0 0
    %2537 = vmatpush1.bf16.msra.mxu0 %v2528
    %2538 = vmatprep.subr.bf16.mxu0 0
    %2539 = vmatpush1.bf16.msra.mxu0 0
    %2540 = vmatprep.subr.bf16.mxu0 0
    %2541 = vmatpush1.bf16.msra.mxu0 0
    %2542 = vmatprep.subr.bf16.mxu0 0
    %2543 = vmatpush1.bf16.msra.mxu0 0
    %2544 = vmatprep.subr.bf16.mxu0 0
    %2545 = vmatpush1.bf16.msra.mxu0 0
    %2546 = vmatprep.subr.bf16.mxu0 0
    %2547 = vmatpush1.bf16.msra.mxu0 0
    %2548 = vmatprep.subr.bf16.mxu0 0
    %2549 = vmatpush1.bf16.msra.mxu0 0
    %2550 = vmatprep.subr.bf16.mxu0 0
    %2551 = vmatpush1.bf16.msra.mxu0 0
    %2552 = vmatprep.subr.bf16.mxu0 0
    %2553 = vmatpush1.bf16.msra.mxu0 0
    %2554 = vmatprep.subr.bf16.mxu0 0
    %2555 = vmatpush1.bf16.msra.mxu0 0
    %2556 = vmatprep.subr.bf16.mxu0 0
    %2557 = vmatpush1.bf16.msra.mxu0 0
    %2558 = vmatprep.subr.bf16.mxu0 0
    %2559 = vmatpush1.bf16.msra.mxu0 0
    %2560 = vmatprep.subr.bf16.mxu0 0
    %2561 = vmatpush1.bf16.msra.mxu0 0
    %2562 = vmatprep.subr.bf16.mxu0 0
    %2563 = vmatpush1.bf16.msra.mxu0 0
    %2564 = vmatprep.subr.bf16.mxu0 0
    %2565 = vmatpush1.bf16.msra.mxu0 0
    %2566 = vmatprep.mubr.bf16.mxu0 0
    %2567 = vmatmul.mubr.bf16.gmra.mrb[0].mxu0 %v2532
    %v2568 = vpop.f32.mrb[0].mxu0
    %v2569 = vadd.f32 %v2518, %v2568
    %v2570 = vpop.f32.mrb[0].mxu0
    %v2571 = vpop.f32.mrb[0].mxu0
    %v2572 = vadd.f32 %v2518, %v2571
    %v2573 = vpop.f32.mrb[0].mxu0
    %2574 = vdwg.mxu0
    %v2575 = vadd.f32 %v2245, %v2569
    %v2576 = vadd.f32 %v2246, %v2572
    %v2577 = vld [vmem:[%s5 + $0x20] sm:$0x1]
    %v2578 = vld [vmem:[%s5 + $0x21] sm:$0x1]
    %v2579 = vsel %vm70, %v2575, 0.0
    %2580 = vadd.xlane.f32.xlu0 %v2579
    %v2581 = vpop.xlane.xlu0 %2580
    %v2582 = vsel %vm70, %v2576, 0.0
    %2583 = vadd.xlane.f32.xlu0 %v2582
    %v2584 = vpop.xlane.xlu0 %2583
    %v2585 = vmul.f32 %v2581, 0.03125
    %v2586 = vmul.f32 %v2584, 0.03125
    %v2587 = vmul.f32 %v2575, %v2575
    %v2588 = vmul.f32 %v2576, %v2576
    %v2589 = vsel %vm70, %v2587, 0.0
    %2590 = vadd.xlane.f32.xlu0 %v2589
    %v2591 = vpop.xlane.xlu0 %2590
    %v2592 = vsel %vm70, %v2588, 0.0
    %2593 = vadd.xlane.f32.xlu0 %v2592
    %v2594 = vpop.xlane.xlu0 %2593
    %v2595 = vmul.f32 %v2591, 0.03125
    %v2596 = vmul.f32 %v2594, 0.03125
    %v2597 = vmul.f32 %v2585, %v2585
    %v2598 = vmul.f32 %v2586, %v2586
    %v2599 = vsub.f32 %v2595, %v2597
    %v2600 = vsub.f32 %v2596, %v2598
    %v2601 = vsub.f32 %v2575, %v2585
    %v2602 = vsub.f32 %v2576, %v2586
    %v2603 = vadd.f32 %v2599, 1e-05
    %v2604 = vadd.f32 %v2600, 1e-05
    %v2605 = vrsqrt.pop %v2603
    %v2606 = vrsqrt.pop %v2604
    %v2607 = vmul.f32 %v2601, %v2605
    %v2608 = vmul.f32 %v2602, %v2606
    %v2609 = vlaneseq
    %v2610 = vshrl.u32 %v2609, 7
    %v2611 = vsub.s32 0, %v2610
    %v2612 = vrot.slane %v2577, %v2611
    %v2613 = vmul.f32 %v2607, %v2612
    %v2614 = vmul.f32 %v2608, %v2612
    %v2615 = vlaneseq
    %v2616 = vshrl.u32 %v2615, 7
    %v2617 = vsub.s32 0, %v2616
    %v2618 = vrot.slane %v2578, %v2617
    %v2619 = vadd.f32 %v2613, %v2618
    %v2620 = vadd.f32 %v2614, %v2618
    %s2621 = scalar_lea.vmem [#allocation2], 512
    %v2622 = vld [vmem:[%s2621] sm:$0xf]
    %v2623 = vld [vmem:[%s2621 + $0x4] sm:$0xf]
    %v2624 = vld [vmem:[%s2621 + $0x8] sm:$0xf]
    %v2625 = vld [vmem:[%s2621 + $0xc] sm:$0xf]
    %v2626 = vld [vmem:[%s5 + $0x22] sm:$0x1]
    %v2627 = vpack.c.bf16 %v2620, %v2619
    %v2628 = vlaneseq
    %v2629 = vshrl.u32 %v2628, 7
    %v2630 = vsub.s32 0, %v2629
    %v2631 = vrot.slane %v2626, %v2630
    %v2636 = vunpack.c.l.b16 %v2622
    %v2637 = vunpack.c.l.b16 %v2623
    %v2638 = vunpack.c.l.b16 %v2624
    %v2639 = vunpack.c.l.b16 %v2625
    %v2640 = vpack.c.b16 %v2637, %v2636
    %v2641 = vpack.c.b16 %v2639, %v2638
    %v2645 = vsel %vm70, %v2627, 0
    %2647 = vmatprep.subr.bf16.mxu0 0
    %2648 = vmatpush1.bf16.msra.mxu0 %v2640
    %2649 = vmatprep.subr.bf16.mxu0 0
    %2650 = vmatpush1.bf16.msra.mxu0 %v2641
    %2651 = vmatprep.subr.bf16.mxu0 0
    %2652 = vmatpush1.bf16.msra.mxu0 0
    %2653 = vmatprep.subr.bf16.mxu0 0
    %2654 = vmatpush1.bf16.msra.mxu0 0
    %2655 = vmatprep.subr.bf16.mxu0 0
    %2656 = vmatpush1.bf16.msra.mxu0 0
    %2657 = vmatprep.subr.bf16.mxu0 0
    %2658 = vmatpush1.bf16.msra.mxu0 0
    %2659 = vmatprep.subr.bf16.mxu0 0
    %2660 = vmatpush1.bf16.msra.mxu0 0
    %2661 = vmatprep.subr.bf16.mxu0 0
    %2662 = vmatpush1.bf16.msra.mxu0 0
    %2663 = vmatprep.subr.bf16.mxu0 0
    %2664 = vmatpush1.bf16.msra.mxu0 0
    %2665 = vmatprep.subr.bf16.mxu0 0
    %2666 = vmatpush1.bf16.msra.mxu0 0
    %2667 = vmatprep.subr.bf16.mxu0 0
    %2668 = vmatpush1.bf16.msra.mxu0 0
    %2669 = vmatprep.subr.bf16.mxu0 0
    %2670 = vmatpush1.bf16.msra.mxu0 0
    %2671 = vmatprep.subr.bf16.mxu0 0
    %2672 = vmatpush1.bf16.msra.mxu0 0
    %2673 = vmatprep.subr.bf16.mxu0 0
    %2674 = vmatpush1.bf16.msra.mxu0 0
    %2675 = vmatprep.subr.bf16.mxu0 0
    %2676 = vmatpush1.bf16.msra.mxu0 0
    %2677 = vmatprep.subr.bf16.mxu0 0
    %2678 = vmatpush1.bf16.msra.mxu0 0
    %2679 = vmatprep.mubr.bf16.mxu0 0
    %2680 = vmatmul.mubr.bf16.gmra.mrb[0].mxu0 %v2645
    %v2681 = vpop.f32.mrb[0].mxu0
    %v2682 = vadd.f32 %v2631, %v2681
    %v2683 = vpop.f32.mrb[0].mxu0
    %v2684 = vpop.f32.mrb[0].mxu0
    %v2685 = vadd.f32 %v2631, %v2684
    %v2686 = vpop.f32.mrb[0].mxu0
    %2687 = vdwg.mxu0
    %2688 = vrot.lane.b32.xlu0 %v2640, 96
    %v2689 = vpop.permute.xlu0 %2688
    %2690 = vrot.lane.b32.xlu0 %v2641, 96
    %v2691 = vpop.permute.xlu0 %2690
    %2695 = vrot.lane.b32.xlu0 %v2631, 96
    %v2696 = vpop.permute.xlu0 %2695
    %2698 = vmatprep.subr.bf16.mxu0 0
    %2699 = vmatpush1.bf16.msra.mxu0 %v2689
    %2700 = vmatprep.subr.bf16.mxu0 0
    %2701 = vmatpush1.bf16.msra.mxu0 %v2691
    %2702 = vmatprep.subr.bf16.mxu0 0
    %2703 = vmatpush1.bf16.msra.mxu0 0
    %2704 = vmatprep.subr.bf16.mxu0 0
    %2705 = vmatpush1.bf16.msra.mxu0 0
    %2706 = vmatprep.subr.bf16.mxu0 0
    %2707 = vmatpush1.bf16.msra.mxu0 0
    %2708 = vmatprep.subr.bf16.mxu0 0
    %2709 = vmatpush1.bf16.msra.mxu0 0
    %2710 = vmatprep.subr.bf16.mxu0 0
    %2711 = vmatpush1.bf16.msra.mxu0 0
    %2712 = vmatprep.subr.bf16.mxu0 0
    %2713 = vmatpush1.bf16.msra.mxu0 0
    %2714 = vmatprep.subr.bf16.mxu0 0
    %2715 = vmatpush1.bf16.msra.mxu0 0
    %2716 = vmatprep.subr.bf16.mxu0 0
    %2717 = vmatpush1.bf16.msra.mxu0 0
    %2718 = vmatprep.subr.bf16.mxu0 0
    %2719 = vmatpush1.bf16.msra.mxu0 0
    %2720 = vmatprep.subr.bf16.mxu0 0
    %2721 = vmatpush1.bf16.msra.mxu0 0
    %2722 = vmatprep.subr.bf16.mxu0 0
    %2723 = vmatpush1.bf16.msra.mxu0 0
    %2724 = vmatprep.subr.bf16.mxu0 0
    %2725 = vmatpush1.bf16.msra.mxu0 0
    %2726 = vmatprep.subr.bf16.mxu0 0
    %2727 = vmatpush1.bf16.msra.mxu0 0
    %2728 = vmatprep.subr.bf16.mxu0 0
    %2729 = vmatpush1.bf16.msra.mxu0 0
    %2730 = vmatprep.mubr.bf16.mxu0 0
    %2731 = vmatmul.mubr.bf16.gmra.mrb[0].mxu0 %v1693
    %v2732 = vpop.f32.mrb[0].mxu0
    %v2733 = vadd.f32 %v2696, %v2732
    %v2734 = vpop.f32.mrb[0].mxu0
    %v2735 = vpop.f32.mrb[0].mxu0
    %v2736 = vadd.f32 %v2696, %v2735
    %v2737 = vpop.f32.mrb[0].mxu0
    %2738 = vdwg.mxu0
    %2741 = vrot.lane.b32.xlu0 %v2682, 112
    %v2742 = vpop.permute.xlu0 %2741
    %2743 = vrot.lane.b32.xlu0 %v2685, 112
    %v2744 = vpop.permute.xlu0 %2743
    %2749 = vrot.lane.b32.xlu0 %v2733, 112
    %v2750 = vpop.permute.xlu0 %2749
    %2751 = vrot.lane.b32.xlu0 %v2736, 112
    %v2752 = vpop.permute.xlu0 %2751
    %v2755 = vpack.c.bf16 %v2685, %v2682
    %v2756 = vpack.c.bf16 %v2744, %v2742
    %v2757 = vpack.c.bf16 %v2736, %v2733
    %v2758 = vpack.c.bf16 %v2752, %v2750
    %v2760 = vsel %vm131, %v2755, 0
    %v2763 = vsel %vm131, %v2756, 0
    %v2766 = vsel %vm131, %v2757, 0
    %v2769 = vsel %vm131, %v2758, 0
    %2771 = vmatprep.subr.bf16.mxu0 0
    %2772 = vmatpush1.bf16.xpose.msra.mxu0 %v2766
    %2773 = vmatprep.subr.bf16.mxu0 0
    %2774 = vmatpush1.bf16.xpose.msra.mxu0 %v2769
    %2775 = vmatprep.subr.bf16.mxu0 0
    %2776 = vmatpush1.bf16.xpose.msra.mxu0 0
    %2777 = vmatprep.subr.bf16.mxu0 0
    %2778 = vmatpush1.bf16.xpose.msra.mxu0 0
    %2779 = vmatprep.subr.bf16.mxu0 0
    %2780 = vmatpush1.bf16.xpose.msra.mxu0 0
    %2781 = vmatprep.subr.bf16.mxu0 0
    %2782 = vmatpush1.bf16.xpose.msra.mxu0 0
    %2783 = vmatprep.subr.bf16.mxu0 0
    %2784 = vmatpush1.bf16.xpose.msra.mxu0 0
    %2785 = vmatprep.subr.bf16.mxu0 0
    %2786 = vmatpush1.bf16.xpose.msra.mxu0 0
    %2787 = vmatprep.subr.bf16.mxu0 0
    %2788 = vmatpush1.bf16.xpose.msra.mxu0 0
    %2789 = vmatprep.subr.bf16.mxu0 0
    %2790 = vmatpush1.bf16.xpose.msra.mxu0 0
    %2791 = vmatprep.subr.bf16.mxu0 0
    %2792 = vmatpush1.bf16.xpose.msra.mxu0 0
    %2793 = vmatprep.subr.bf16.mxu0 0
    %2794 = vmatpush1.bf16.xpose.msra.mxu0 0
    %2795 = vmatprep.subr.bf16.mxu0 0
    %2796 = vmatpush1.bf16.xpose.msra.mxu0 0
    %2797 = vmatprep.subr.bf16.mxu0 0
    %2798 = vmatpush1.bf16.xpose.msra.mxu0 0
    %2799 = vmatprep.subr.bf16.mxu0 0
    %2800 = vmatpush1.bf16.xpose.msra.mxu0 0
    %2801 = vmatprep.subr.bf16.mxu0 0
    %2802 = vmatpush1.bf16.xpose.msra.mxu0 0
    %2803 = vmatprep.mubr.bf16.mxu0 0
    %2804 = vmatmul.mubr.bf16.gmra.mrb[0].mxu0 %v2760
    %v2805 = vpop.f32.mrb[0].mxu0
    %v2806 = vadd.f32 %v38, %v2805
    %v2807 = vpop.f32.mrb[0].mxu0
    %v2808 = vpop.f32.mrb[0].mxu0
    %v2809 = vadd.f32 %v39, %v2808
    %v2810 = vpop.f32.mrb[0].mxu0
    %2811 = vmatprep.mubr.bf16.mxu0 0
    %2812 = vmatmul.mubr.bf16.gmra.mrb[0].mxu0 %v2763
    %v2813 = vpop.f32.mrb[0].mxu0
    %v2814 = vadd.f32 %v40, %v2813
    %v2815 = vpop.f32.mrb[0].mxu0
    %v2816 = vpop.f32.mrb[0].mxu0
    %v2817 = vadd.f32 %v41, %v2816
    %v2818 = vpop.f32.mrb[0].mxu0
    %2819 = vdwg.mxu0
    %v2820 = vsel %vm70, %v2806, -inf
    %2821 = vmax.xlane.f32.xlu0 %v2820
    %v2822 = vpop.xlane.xlu0 %2821
    %v2823 = vsel %vm70, %v2809, -inf
    %2824 = vmax.xlane.f32.xlu0 %v2823
    %v2825 = vpop.xlane.xlu0 %2824
    %v2826 = vsel %vm70, %v2814, -inf
    %2827 = vmax.xlane.f32.xlu0 %v2826
    %v2828 = vpop.xlane.xlu0 %2827
    %v2829 = vsel %vm70, %v2817, -inf
    %2830 = vmax.xlane.f32.xlu0 %v2829
    %v2831 = vpop.xlane.xlu0 %2830
    %v2832 = vsub.f32 %v2806, %v2822
    %v2833 = vsub.f32 %v2809, %v2825
    %v2834 = vsub.f32 %v2814, %v2828
    %v2835 = vsub.f32 %v2817, %v2831
    %v2836 = vmul.f32 %v2832, 1.442695
    %v2837 = vpow.pop %v2836
    %v2838 = vmul.f32 %v2833, 1.442695
    %v2839 = vpow.pop %v2838
    %v2840 = vmul.f32 %v2834, 1.442695
    %v2841 = vpow.pop %v2840
    %v2842 = vmul.f32 %v2835, 1.442695
    %v2843 = vpow.pop %v2842
    %v2844 = vsel %vm70, %v2837, 0.0
    %2845 = vadd.xlane.f32.xlu0 %v2844
    %v2846 = vpop.xlane.xlu0 %2845
    %v2847 = vsel %vm70, %v2839, 0.0
    %2848 = vadd.xlane.f32.xlu0 %v2847
    %v2849 = vpop.xlane.xlu0 %2848
    %v2850 = vsel %vm70, %v2841, 0.0
    %2851 = vadd.xlane.f32.xlu0 %v2850
    %v2852 = vpop.xlane.xlu0 %2851
    %v2853 = vsel %vm70, %v2843, 0.0
    %2854 = vadd.xlane.f32.xlu0 %v2853
    %v2855 = vpop.xlane.xlu0 %2854
    %v2856 = vrcp.pop %v2846
    %v2857 = vrcp.pop %v2849
    %v2858 = vrcp.pop %v2852
    %v2859 = vrcp.pop %v2855
    %v2860 = vmul.f32 %v2837, %v2856
    %v2861 = vmul.f32 %v2839, %v2857
    %v2862 = vmul.f32 %v2841, %v2858
    %v2863 = vmul.f32 %v2843, %v2859
    %v2864 = vpack.c.bf16 %v2861, %v2860
    %v2865 = vpack.c.bf16 %v2863, %v2862
    %2868 = vrot.lane.b32.xlu0 %v2757, 96
    %v2869 = vpop.permute.xlu0 %2868
    %2870 = vrot.lane.b32.xlu0 %v2758, 96
    %v2871 = vpop.permute.xlu0 %2870
    %v2875 = vsel %vm70, %v2864, 0
    %v2878 = vsel %vm70, %v2865, 0
    %2880 = vmatprep.subr.bf16.mxu0 0
    %2881 = vmatpush1.bf16.msra.mxu0 %v2869
    %2882 = vmatprep.subr.bf16.mxu0 0
    %2883 = vmatpush1.bf16.msra.mxu0 %v2871
    %2884 = vmatprep.subr.bf16.mxu0 0
    %2885 = vmatpush1.bf16.msra.mxu0 0
    %2886 = vmatprep.subr.bf16.mxu0 0
    %2887 = vmatpush1.bf16.msra.mxu0 0
    %2888 = vmatprep.subr.bf16.mxu0 0
    %2889 = vmatpush1.bf16.msra.mxu0 0
    %2890 = vmatprep.subr.bf16.mxu0 0
    %2891 = vmatpush1.bf16.msra.mxu0 0
    %2892 = vmatprep.subr.bf16.mxu0 0
    %2893 = vmatpush1.bf16.msra.mxu0 0
    %2894 = vmatprep.subr.bf16.mxu0 0
    %2895 = vmatpush1.bf16.msra.mxu0 0
    %2896 = vmatprep.subr.bf16.mxu0 0
    %2897 = vmatpush1.bf16.msra.mxu0 0
    %2898 = vmatprep.subr.bf16.mxu0 0
    %2899 = vmatpush1.bf16.msra.mxu0 0
    %2900 = vmatprep.subr.bf16.mxu0 0
    %2901 = vmatpush1.bf16.msra.mxu0 0
    %2902 = vmatprep.subr.bf16.mxu0 0
    %2903 = vmatpush1.bf16.msra.mxu0 0
    %2904 = vmatprep.subr.bf16.mxu0 0
    %2905 = vmatpush1.bf16.msra.mxu0 0
    %2906 = vmatprep.subr.bf16.mxu0 0
    %2907 = vmatpush1.bf16.msra.mxu0 0
    %2908 = vmatprep.subr.bf16.mxu0 0
    %2909 = vmatpush1.bf16.msra.mxu0 0
    %2910 = vmatprep.subr.bf16.mxu0 0
    %2911 = vmatpush1.bf16.msra.mxu0 0
    %2912 = vmatprep.mubr.bf16.mxu0 0
    %2913 = vmatmul.mubr.bf16.gmra.mrb[0].mxu0 %v2875
    %v2914 = vpop.f32.mrb[0].mxu0
    %v2915 = vadd.f32 0.0, %v2914
    %v2916 = vpop.f32.mrb[0].mxu0
    %v2917 = vpop.f32.mrb[0].mxu0
    %v2918 = vadd.f32 0.0, %v2917
    %v2919 = vpop.f32.mrb[0].mxu0
    %2920 = vmatprep.mubr.bf16.mxu0 0
    %2921 = vmatmul.mubr.bf16.gmra.mrb[0].mxu0 %v2878
    %v2922 = vpop.f32.mrb[0].mxu0
    %v2923 = vadd.f32 0.0, %v2922
    %v2924 = vpop.f32.mrb[0].mxu0
    %v2925 = vpop.f32.mrb[0].mxu0
    %v2926 = vadd.f32 0.0, %v2925
    %v2927 = vpop.f32.mrb[0].mxu0
    %2928 = vdwg.mxu0
    %2931 = vrot.lane.b32.xlu0 %v2923, 16
    %v2932 = vpop.permute.xlu0 %2931
    %2933 = vrot.lane.b32.xlu0 %v2926, 16
    %v2934 = vpop.permute.xlu0 %2933
    %v2937 = vsel %vm131, %v2915, %v2932
    %v2938 = vsel %vm131, %v2918, %v2934
    %s2939 = scalar_lea.vmem [#allocation2], 544
    %v2940 = vld [vmem:[%s2939] sm:$0xf]
    %v2941 = vld [vmem:[%s2939 + $0x4] sm:$0xf]
    %v2942 = vld [vmem:[%s2939 + $0x8] sm:$0xf]
    %v2943 = vld [vmem:[%s2939 + $0xc] sm:$0xf]
    %v2944 = vpack.c.bf16 %v2938, %v2937
    %v2945 = vld [vmem:[%s5 + $0x23] sm:$0x1]
    %v2946 = vlaneseq
    %v2947 = vshrl.u32 %v2946, 7
    %v2948 = vsub.s32 0, %v2947
    %v2949 = vrot.slane %v2945, %v2948
    %v2954 = vunpack.c.l.b16 %v2940
    %v2955 = vunpack.c.l.b16 %v2941
    %v2956 = vunpack.c.l.b16 %v2942
    %v2957 = vunpack.c.l.b16 %v2943
    %v2958 = vpack.c.b16 %v2955, %v2954
    %v2959 = vpack.c.b16 %v2957, %v2956
    %v2963 = vsel %vm70, %v2944, 0
    %2965 = vmatprep.subr.bf16.mxu0 0
    %2966 = vmatpush1.bf16.msra.mxu0 %v2958
    %2967 = vmatprep.subr.bf16.mxu0 0
    %2968 = vmatpush1.bf16.msra.mxu0 %v2959
    %2969 = vmatprep.subr.bf16.mxu0 0
    %2970 = vmatpush1.bf16.msra.mxu0 0
    %2971 = vmatprep.subr.bf16.mxu0 0
    %2972 = vmatpush1.bf16.msra.mxu0 0
    %2973 = vmatprep.subr.bf16.mxu0 0
    %2974 = vmatpush1.bf16.msra.mxu0 0
    %2975 = vmatprep.subr.bf16.mxu0 0
    %2976 = vmatpush1.bf16.msra.mxu0 0
    %2977 = vmatprep.subr.bf16.mxu0 0
    %2978 = vmatpush1.bf16.msra.mxu0 0
    %2979 = vmatprep.subr.bf16.mxu0 0
    %2980 = vmatpush1.bf16.msra.mxu0 0
    %2981 = vmatprep.subr.bf16.mxu0 0
    %2982 = vmatpush1.bf16.msra.mxu0 0
    %2983 = vmatprep.subr.bf16.mxu0 0
    %2984 = vmatpush1.bf16.msra.mxu0 0
    %2985 = vmatprep.subr.bf16.mxu0 0
    %2986 = vmatpush1.bf16.msra.mxu0 0
    %2987 = vmatprep.subr.bf16.mxu0 0
    %2988 = vmatpush1.bf16.msra.mxu0 0
    %2989 = vmatprep.subr.bf16.mxu0 0
    %2990 = vmatpush1.bf16.msra.mxu0 0
    %2991 = vmatprep.subr.bf16.mxu0 0
    %2992 = vmatpush1.bf16.msra.mxu0 0
    %2993 = vmatprep.subr.bf16.mxu0 0
    %2994 = vmatpush1.bf16.msra.mxu0 0
    %2995 = vmatprep.subr.bf16.mxu0 0
    %2996 = vmatpush1.bf16.msra.mxu0 0
    %2997 = vmatprep.mubr.bf16.mxu0 0
    %2998 = vmatmul.mubr.bf16.gmra.mrb[0].mxu0 %v2963
    %v2999 = vpop.f32.mrb[0].mxu0
    %v3000 = vadd.f32 %v2949, %v2999
    %v3001 = vpop.f32.mrb[0].mxu0
    %v3002 = vpop.f32.mrb[0].mxu0
    %v3003 = vadd.f32 %v2949, %v3002
    %v3004 = vpop.f32.mrb[0].mxu0
    %3005 = vdwg.mxu0
    %v3006 = vadd.f32 %v2619, %v3000
    %v3007 = vadd.f32 %v2620, %v3003
    %v3008 = vld [vmem:[%s5 + $0x24] sm:$0x1]
    %v3009 = vld [vmem:[%s5 + $0x25] sm:$0x1]
    %v3010 = vsel %vm70, %v3006, 0.0
    %3011 = vadd.xlane.f32.xlu0 %v3010
    %v3012 = vpop.xlane.xlu0 %3011
    %v3013 = vsel %vm70, %v3007, 0.0
    %3014 = vadd.xlane.f32.xlu0 %v3013
    %v3015 = vpop.xlane.xlu0 %3014
    %v3016 = vmul.f32 %v3012, 0.03125
    %v3017 = vmul.f32 %v3015, 0.03125
    %v3018 = vmul.f32 %v3006, %v3006
    %v3019 = vmul.f32 %v3007, %v3007
    %v3020 = vsel %vm70, %v3018, 0.0
    %3021 = vadd.xlane.f32.xlu0 %v3020
    %v3022 = vpop.xlane.xlu0 %3021
    %v3023 = vsel %vm70, %v3019, 0.0
    %3024 = vadd.xlane.f32.xlu0 %v3023
    %v3025 = vpop.xlane.xlu0 %3024
    %v3026 = vmul.f32 %v3022, 0.03125
    %v3027 = vmul.f32 %v3025, 0.03125
    %v3028 = vmul.f32 %v3016, %v3016
    %v3029 = vmul.f32 %v3017, %v3017
    %v3030 = vsub.f32 %v3026, %v3028
    %v3031 = vsub.f32 %v3027, %v3029
    %v3032 = vsub.f32 %v3006, %v3016
    %v3033 = vsub.f32 %v3007, %v3017
    %v3034 = vadd.f32 %v3030, 1e-05
    %v3035 = vadd.f32 %v3031, 1e-05
    %v3036 = vrsqrt.pop %v3034
    %v3037 = vrsqrt.pop %v3035
    %v3038 = vmul.f32 %v3032, %v3036
    %v3039 = vmul.f32 %v3033, %v3037
    %v3040 = vlaneseq
    %v3041 = vshrl.u32 %v3040, 7
    %v3042 = vsub.s32 0, %v3041
    %v3043 = vrot.slane %v3008, %v3042
    %v3044 = vmul.f32 %v3038, %v3043
    %v3045 = vmul.f32 %v3039, %v3043
    %v3046 = vlaneseq
    %v3047 = vshrl.u32 %v3046, 7
    %v3048 = vsub.s32 0, %v3047
    %v3049 = vrot.slane %v3009, %v3048
    %v3050 = vadd.f32 %v3044, %v3049
    %v3051 = vadd.f32 %v3045, %v3049
    %s3052 = scalar_lea.vmem [#allocation2], 576
    %v3053 = vld [vmem:[%s3052] sm:$0xf]
    %v3054 = vld [vmem:[%s3052 + $0x4] sm:$0xf]
    %v3055 = vld [vmem:[%s3052 + $0x8] sm:$0xf]
    %v3056 = vld [vmem:[%s3052 + $0xc] sm:$0xf]
    %v3057 = vpack.c.bf16 %v3051, %v3050
    %v3058 = vld [vmem:[%s5 + $0x26] sm:$0x1]
    %v3059 = vlaneseq
    %v3060 = vshrl.u32 %v3059, 7
    %v3061 = vsub.s32 0, %v3060
    %v3062 = vrot.slane %v3058, %v3061
    %v3067 = vunpack.c.l.b16 %v3053
    %v3068 = vunpack.c.l.b16 %v3054
    %v3069 = vunpack.c.l.b16 %v3055
    %v3070 = vunpack.c.l.b16 %v3056
    %v3071 = vpack.c.b16 %v3068, %v3067
    %v3072 = vpack.c.b16 %v3070, %v3069
    %v3076 = vsel %vm70, %v3057, 0
    %3078 = vmatprep.subr.bf16.mxu0 0
    %3079 = vmatpush1.bf16.msra.mxu0 %v3071
    %3080 = vmatprep.subr.bf16.mxu0 0
    %3081 = vmatpush1.bf16.msra.mxu0 %v3072
    %3082 = vmatprep.subr.bf16.mxu0 0
    %3083 = vmatpush1.bf16.msra.mxu0 0
    %3084 = vmatprep.subr.bf16.mxu0 0
    %3085 = vmatpush1.bf16.msra.mxu0 0
    %3086 = vmatprep.subr.bf16.mxu0 0
    %3087 = vmatpush1.bf16.msra.mxu0 0
    %3088 = vmatprep.subr.bf16.mxu0 0
    %3089 = vmatpush1.bf16.msra.mxu0 0
    %3090 = vmatprep.subr.bf16.mxu0 0
    %3091 = vmatpush1.bf16.msra.mxu0 0
    %3092 = vmatprep.subr.bf16.mxu0 0
    %3093 = vmatpush1.bf16.msra.mxu0 0
    %3094 = vmatprep.subr.bf16.mxu0 0
    %3095 = vmatpush1.bf16.msra.mxu0 0
    %3096 = vmatprep.subr.bf16.mxu0 0
    %3097 = vmatpush1.bf16.msra.mxu0 0
    %3098 = vmatprep.subr.bf16.mxu0 0
    %3099 = vmatpush1.bf16.msra.mxu0 0
    %3100 = vmatprep.subr.bf16.mxu0 0
    %3101 = vmatpush1.bf16.msra.mxu0 0
    %3102 = vmatprep.subr.bf16.mxu0 0
    %3103 = vmatpush1.bf16.msra.mxu0 0
    %3104 = vmatprep.subr.bf16.mxu0 0
    %3105 = vmatpush1.bf16.msra.mxu0 0
    %3106 = vmatprep.subr.bf16.mxu0 0
    %3107 = vmatpush1.bf16.msra.mxu0 0
    %3108 = vmatprep.subr.bf16.mxu0 0
    %3109 = vmatpush1.bf16.msra.mxu0 0
    %3110 = vmatprep.mubr.bf16.mxu0 0
    %3111 = vmatmul.mubr.bf16.gmra.mrb[0].mxu0 %v3076
    %v3112 = vpop.f32.mrb[0].mxu0
    %v3113 = vadd.f32 %v3062, %v3112
    %v3114 = vpop.f32.mrb[0].mxu0
    %v3115 = vpop.f32.mrb[0].mxu0
    %v3116 = vadd.f32 %v3062, %v3115
    %v3117 = vpop.f32.mrb[0].mxu0
    %3118 = vdwg.mxu0
    %v3119 = vmax.f32 %v3113, 0.0
    %v3120 = vmax.f32 %v3116, 0.0
    %s3121 = scalar_lea.vmem [#allocation2], 608
    %v3122 = vld [vmem:[%s3121] sm:$0xf]
    %v3123 = vld [vmem:[%s3121 + $0x4] sm:$0xf]
    %v3124 = vld [vmem:[%s3121 + $0x8] sm:$0xf]
    %v3125 = vld [vmem:[%s3121 + $0xc] sm:$0xf]
    %v3126 = vld [vmem:[%s3121 + $0x10] sm:$0xf]
    %v3127 = vld [vmem:[%s3121 + $0x14] sm:$0xf]
    %v3128 = vld [vmem:[%s3121 + $0x18] sm:$0xf]
    %v3129 = vld [vmem:[%s3121 + $0x1c] sm:$0xf]
    %v3130 = vpack.c.bf16 %v3120, %v3119
    %v3131 = vld [vmem:[%s5 + $0x27] sm:$0x1]
    %v3132 = vlaneseq
    %v3133 = vshrl.u32 %v3132, 7
    %v3134 = vsub.s32 0, %v3133
    %v3135 = vrot.slane %v3131, %v3134
    %v3144 = vunpack.c.l.b16 %v3122
    %v3145 = vunpack.c.l.b16 %v3123
    %v3146 = vunpack.c.l.b16 %v3124
    %v3147 = vunpack.c.l.b16 %v3125
    %v3148 = vunpack.c.l.b16 %v3126
    %v3149 = vunpack.c.l.b16 %v3127
    %v3150 = vunpack.c.l.b16 %v3128
    %v3151 = vunpack.c.l.b16 %v3129
    %v3152 = vpack.c.b16 %v3145, %v3144
    %v3153 = vpack.c.b16 %v3147, %v3146
    %v3154 = vpack.c.b16 %v3149, %v3148
    %v3155 = vpack.c.b16 %v3151, %v3150
    %v3161 = vsel %vm531, %v3130, 0
    %3163 = vmatprep.subr.bf16.mxu0 0
    %3164 = vmatpush1.bf16.msra.mxu0 %v3152
    %3165 = vmatprep.subr.bf16.mxu0 0
    %3166 = vmatpush1.bf16.msra.mxu0 %v3153
    %3167 = vmatprep.subr.bf16.mxu0 0
    %3168 = vmatpush1.bf16.msra.mxu0 %v3154
    %3169 = vmatprep.subr.bf16.mxu0 0
    %3170 = vmatpush1.bf16.msra.mxu0 %v3155
    %3171 = vmatprep.subr.bf16.mxu0 0
    %3172 = vmatpush1.bf16.msra.mxu0 0
    %3173 = vmatprep.subr.bf16.mxu0 0
    %3174 = vmatpush1.bf16.msra.mxu0 0
    %3175 = vmatprep.subr.bf16.mxu0 0
    %3176 = vmatpush1.bf16.msra.mxu0 0
    %3177 = vmatprep.subr.bf16.mxu0 0
    %3178 = vmatpush1.bf16.msra.mxu0 0
    %3179 = vmatprep.subr.bf16.mxu0 0
    %3180 = vmatpush1.bf16.msra.mxu0 0
    %3181 = vmatprep.subr.bf16.mxu0 0
    %3182 = vmatpush1.bf16.msra.mxu0 0
    %3183 = vmatprep.subr.bf16.mxu0 0
    %3184 = vmatpush1.bf16.msra.mxu0 0
    %3185 = vmatprep.subr.bf16.mxu0 0
    %3186 = vmatpush1.bf16.msra.mxu0 0
    %3187 = vmatprep.subr.bf16.mxu0 0
    %3188 = vmatpush1.bf16.msra.mxu0 0
    %3189 = vmatprep.subr.bf16.mxu0 0
    %3190 = vmatpush1.bf16.msra.mxu0 0
    %3191 = vmatprep.subr.bf16.mxu0 0
    %3192 = vmatpush1.bf16.msra.mxu0 0
    %3193 = vmatprep.subr.bf16.mxu0 0
    %3194 = vmatpush1.bf16.msra.mxu0 0
    %3195 = vmatprep.mubr.bf16.mxu0 0
    %3196 = vmatmul.mubr.bf16.gmra.mrb[0].mxu0 %v3161
    %v3197 = vpop.f32.mrb[0].mxu0
    %v3198 = vadd.f32 %v3135, %v3197
    %v3199 = vpop.f32.mrb[0].mxu0
    %v3200 = vpop.f32.mrb[0].mxu0
    %v3201 = vadd.f32 %v3135, %v3200
    %v3202 = vpop.f32.mrb[0].mxu0
    %3203 = vdwg.mxu0
    %v3204 = vadd.f32 %v3050, %v3198
    %v3205 = vadd.f32 %v3051, %v3201
    %v3206 = vld [vmem:[%s5 + $0x28] sm:$0x1]
    %v3207 = vld [vmem:[%s5 + $0x29] sm:$0x1]
    %v3208 = vsel %vm70, %v3204, 0.0
    %3209 = vadd.xlane.f32.xlu0 %v3208
    %v3210 = vpop.xlane.xlu0 %3209
    %v3211 = vsel %vm70, %v3205, 0.0
    %3212 = vadd.xlane.f32.xlu0 %v3211
    %v3213 = vpop.xlane.xlu0 %3212
    %v3214 = vmul.f32 %v3210, 0.03125
    %v3215 = vmul.f32 %v3213, 0.03125
    %v3216 = vmul.f32 %v3204, %v3204
    %v3217 = vmul.f32 %v3205, %v3205
    %v3218 = vsel %vm70, %v3216, 0.0
    %3219 = vadd.xlane.f32.xlu0 %v3218
    %v3220 = vpop.xlane.xlu0 %3219
    %v3221 = vsel %vm70, %v3217, 0.0
    %3222 = vadd.xlane.f32.xlu0 %v3221
    %v3223 = vpop.xlane.xlu0 %3222
    %v3224 = vmul.f32 %v3220, 0.03125
    %v3225 = vmul.f32 %v3223, 0.03125
    %v3226 = vmul.f32 %v3214, %v3214
    %v3227 = vmul.f32 %v3215, %v3215
    %v3228 = vsub.f32 %v3224, %v3226
    %v3229 = vsub.f32 %v3225, %v3227
    %v3230 = vsub.f32 %v3204, %v3214
    %v3231 = vsub.f32 %v3205, %v3215
    %v3232 = vadd.f32 %v3228, 1e-05
    %v3233 = vadd.f32 %v3229, 1e-05
    %v3234 = vrsqrt.pop %v3232
    %v3235 = vrsqrt.pop %v3233
    %v3236 = vmul.f32 %v3230, %v3234
    %v3237 = vmul.f32 %v3231, %v3235
    %v3238 = vlaneseq
    %v3239 = vshrl.u32 %v3238, 7
    %v3240 = vsub.s32 0, %v3239
    %v3241 = vrot.slane %v3206, %v3240
    %v3242 = vmul.f32 %v3236, %v3241
    %v3243 = vmul.f32 %v3237, %v3241
    %v3244 = vlaneseq
    %v3245 = vshrl.u32 %v3244, 7
    %v3246 = vsub.s32 0, %v3245
    %v3247 = vrot.slane %v3207, %v3246
    %v3248 = vadd.f32 %v3242, %v3247
    %v3249 = vadd.f32 %v3243, %v3247
    %v3250 = vld [vmem:[%s5 + $0x2a] sm:$0x1]
    %v3251 = vld [vmem:[%s5 + $0x2b] sm:$0x1]
    %v3252 = vsel %vm70, %v3248, 0.0
    %3253 = vadd.xlane.f32.xlu0 %v3252
    %v3254 = vpop.xlane.xlu0 %3253
    %v3255 = vsel %vm70, %v3249, 0.0
    %3256 = vadd.xlane.f32.xlu0 %v3255
    %v3257 = vpop.xlane.xlu0 %3256
    %v3258 = vmul.f32 %v3254, 0.03125
    %v3259 = vmul.f32 %v3257, 0.03125
    %v3260 = vmul.f32 %v3248, %v3248
    %v3261 = vmul.f32 %v3249, %v3249
    %v3262 = vsel %vm70, %v3260, 0.0
    %3263 = vadd.xlane.f32.xlu0 %v3262
    %v3264 = vpop.xlane.xlu0 %3263
    %v3265 = vsel %vm70, %v3261, 0.0
    %3266 = vadd.xlane.f32.xlu0 %v3265
    %v3267 = vpop.xlane.xlu0 %3266
    %v3268 = vmul.f32 %v3264, 0.03125
    %v3269 = vmul.f32 %v3267, 0.03125
    %v3270 = vmul.f32 %v3258, %v3258
    %v3271 = vmul.f32 %v3259, %v3259
    %v3272 = vsub.f32 %v3268, %v3270
    %v3273 = vsub.f32 %v3269, %v3271
    %v3274 = vsub.f32 %v3248, %v3258
    %v3275 = vsub.f32 %v3249, %v3259
    %v3276 = vadd.f32 %v3272, 1e-05
    %v3277 = vadd.f32 %v3273, 1e-05
    %v3278 = vrsqrt.pop %v3276
    %v3279 = vrsqrt.pop %v3277
    %v3280 = vmul.f32 %v3274, %v3278
    %v3281 = vmul.f32 %v3275, %v3279
    %v3282 = vlaneseq
    %v3283 = vshrl.u32 %v3282, 7
    %v3284 = vsub.s32 0, %v3283
    %v3285 = vrot.slane %v3250, %v3284
    %v3286 = vmul.f32 %v3280, %v3285
    %v3287 = vmul.f32 %v3281, %v3285
    %v3288 = vlaneseq
    %v3289 = vshrl.u32 %v3288, 7
    %v3290 = vsub.s32 0, %v3289
    %v3291 = vrot.slane %v3251, %v3290
    %v3292 = vadd.f32 %v3286, %v3291
    %v3293 = vadd.f32 %v3287, %v3291
    %s3294 = scalar_lea.vmem [#allocation2], 640
    %v3295 = vld [vmem:[%s3294] sm:$0xf]
    %v3296 = vld [vmem:[%s3294 + $0x4] sm:$0xf]
    %v3297 = vld [vmem:[%s3294 + $0x8] sm:$0xf]
    %v3298 = vld [vmem:[%s3294 + $0xc] sm:$0xf]
    %v3299 = vpack.c.bf16 %v3293, %v3292
    %v3300 = vld [vmem:[%s5 + $0x2c] sm:$0x1]
    %v3301 = vlaneseq
    %v3302 = vshrl.u32 %v3301, 7
    %v3303 = vsub.s32 0, %v3302
    %v3304 = vrot.slane %v3300, %v3303
    %v3309 = vunpack.c.l.b16 %v3295
    %v3310 = vunpack.c.l.b16 %v3296
    %v3311 = vunpack.c.l.b16 %v3297
    %v3312 = vunpack.c.l.b16 %v3298
    %v3313 = vpack.c.b16 %v3310, %v3309
    %v3314 = vpack.c.b16 %v3312, %v3311
    %v3318 = vsel %vm70, %v3299, 0
    %3320 = vmatprep.subr.bf16.mxu0 0
    %3321 = vmatpush1.bf16.msra.mxu0 %v3313
    %3322 = vmatprep.subr.bf16.mxu0 0
    %3323 = vmatpush1.bf16.msra.mxu0 %v3314
    %3324 = vmatprep.subr.bf16.mxu0 0
    %3325 = vmatpush1.bf16.msra.mxu0 0
    %3326 = vmatprep.subr.bf16.mxu0 0
    %3327 = vmatpush1.bf16.msra.mxu0 0
    %3328 = vmatprep.subr.bf16.mxu0 0
    %3329 = vmatpush1.bf16.msra.mxu0 0
    %3330 = vmatprep.subr.bf16.mxu0 0
    %3331 = vmatpush1.bf16.msra.mxu0 0
    %3332 = vmatprep.subr.bf16.mxu0 0
    %3333 = vmatpush1.bf16.msra.mxu0 0
    %3334 = vmatprep.subr.bf16.mxu0 0
    %3335 = vmatpush1.bf16.msra.mxu0 0
    %3336 = vmatprep.subr.bf16.mxu0 0
    %3337 = vmatpush1.bf16.msra.mxu0 0
    %3338 = vmatprep.subr.bf16.mxu0 0
    %3339 = vmatpush1.bf16.msra.mxu0 0
    %3340 = vmatprep.subr.bf16.mxu0 0
    %3341 = vmatpush1.bf16.msra.mxu0 0
    %3342 = vmatprep.subr.bf16.mxu0 0
    %3343 = vmatpush1.bf16.msra.mxu0 0
    %3344 = vmatprep.subr.bf16.mxu0 0
    %3345 = vmatpush1.bf16.msra.mxu0 0
    %3346 = vmatprep.subr.bf16.mxu0 0
    %3347 = vmatpush1.bf16.msra.mxu0 0
    %3348 = vmatprep.subr.bf16.mxu0 0
    %3349 = vmatpush1.bf16.msra.mxu0 0
    %3350 = vmatprep.subr.bf16.mxu0 0
    %3351 = vmatpush1.bf16.msra.mxu0 0
    %3352 = vmatprep.mubr.bf16.mxu0 0
    %3353 = vmatmul.mubr.bf16.gmra.mrb[0].mxu0 %v3318
    %v3354 = vpop.f32.mrb[0].mxu0
    %v3355 = vadd.f32 %v3304, %v3354
    %v3356 = vpop.f32.mrb[0].mxu0
    %v3357 = vpop.f32.mrb[0].mxu0
    %v3358 = vadd.f32 %v3304, %v3357
    %v3359 = vpop.f32.mrb[0].mxu0
    %3360 = vdwg.mxu0
    %3361 = vst [vmem:[%s6] sm:$0xff] %v3355
    %3362 = vst [vmem:[%s6 + $0x8] sm:$0xff] %v3358
    // Predicated region
    $region30: #{forward.1} parent=1 // pred_check
      _
    $region31: #{forward.1} parent=1 // pred_check_branch
      %3364 = sbr.rel (0) target = $region33
    $region32: #{forward.1} parent=1 // pred_region
      _
    $region33: #{forward.1} parent=1 // pred_fallthru
      _
    // Predicated region
    $region34: #{forward.1} parent=1 // pred_check
      _
    $region35: #{forward.1} parent=1 // pred_check_branch
      %3366 = sbr.rel (0) target = $region37
    $region36: #{forward.1} parent=1 // pred_region
      _
    $region37: #{forward.1} parent=1 // pred_fallthru
      _
    %3367 = vsyncpa [#allocation3], 1

</llo_original>
